<compile_context>
chip_gen: v6e
topology: v6e:2x2x1
jax: 0.10.0
libtpu: 0.0.40
codegen_flags: <defaults>
</compile_context>

<pallas_src>
import numpy as np
import jax
import jax.numpy as jnp
from jax.experimental import pallas as pl
from jax.experimental.pallas import tpu as pltpu

BN_EPS = 1e-5
PRELU_ALPHA = 0.25  # torch.nn.PReLU() default (num_parameters=1, init=0.25)

# MXU compute dtype for the conv matmul.  Set to jnp.bfloat16 on v5e/v6e/v7x
# for 2-4x MXU throughput (accumulation stays f32); that requires relaxing the
# self-test tolerance, so the default here keeps f32 for exact torch semantics.
CONV_COMPUTE_DTYPE = jnp.float32

# Scoped VMEM limit: 48 MiB leaves headroom on v7x (64 MiB physical VMEM) and
# is well inside v5e/v6e's 128 MiB.
VMEM_LIMIT_BYTES = 48 * 1024 * 1024
# Per-band VMEM budget used to derive the H row-band size per generation.
BAND_VMEM_BUDGET = 6 * 1024 * 1024


# ----------------------------------------------------------------------------
# helpers
# ----------------------------------------------------------------------------
def _largest_band(H, per_row_bytes, budget_bytes=BAND_VMEM_BUDGET):
    """Largest divisor of H whose row-band fits the per-band VMEM budget."""
    best = 1
    for d in range(1, H + 1):
        if H % d == 0 and d * per_row_bytes <= budget_bytes:
            best = d
    return best


def _pad_and_band(x, bh):
    """'same' zero-pad + split H into overlapping (bh+2)-row bands (1-row halo).

    Returns (N*nb, bh+2, W+2, C).  When nb == 1 this is just the padded input
    (no extra gather pass).  The 1-element halo is carried in the banded copy
    so the gridded kernel only needs plain Blocked BlockSpecs.
    """
    N, H, W, C = x.shape
    nb = H // bh
    xp = jnp.pad(x, ((0, 0), (1, 1), (1, 1), (0, 0)))
    if nb == 1:
        return xp  # (N, H+2, W+2, C) == (N*nb, bh+2, W+2, C)
    rows = (jnp.arange(nb) * bh)[:, None] + jnp.arange(bh + 2)[None, :]
    return xp[:, rows].reshape(N * nb, bh + 2, W + 2, C)


# ----------------------------------------------------------------------------
# Kernel A: 3x3 'same' conv (pre-padded band) + bias + BN partial statistics
# ----------------------------------------------------------------------------
def _conv_bias_stats_kernel(xb_ref, w_ref, b_ref, y_ref, s1_ref, s2_ref):
    bh, W, Co = y_ref.shape
    Ci = xb_ref.shape[-1]
    R = bh * W

    # im2col: one (R, 9*Ci) patch matrix -> a single MXU matmul with K = 9*Ci
    # (instead of nine K=Ci matmuls that starve the 256-deep MXU).
    cols = [xb_ref[dh:dh + bh, dw:dw + W, :].reshape(R, Ci)
            for dh in range(3) for dw in range(3)]
    patches = jnp.concatenate(cols, axis=-1)                       # (R, 9*Ci)
    acc = jnp.dot(patches.astype(CONV_COMPUTE_DTYPE),
                  w_ref[...].astype(CONV_COMPUTE_DTYPE),
                  preferred_element_type=jnp.float32)              # (R, Co)
    y = acc + b_ref[...]                                           # bias (1, Co)

    y_ref[...] = y.reshape(bh, W, Co).astype(y_ref.dtype)
    # Per-band BN partials; reduced to global batch stats in tiny JAX glue.
    s1_ref[...] = jnp.sum(y, axis=0, keepdims=True)
    s2_ref[...] = jnp.sum(y * y, axis=0, keepdims=True)


def conv3x3_stats(x_nhwc, w_hwio, bias):
    """Gridded 3x3 conv + bias; returns (pre-BN output, batch mean, biased var)."""
    N, H, W, Ci = x_nhwc.shape
    Co = w_hwio.shape[-1]
    Wp = W + 2

    # double-buffered in/out blocks + the per-row im2col patch slab
    per_row = 4 * (2 * Wp * Ci + 3 * W * Co + 9 * W * Ci)
    bh = _largest_band(H, per_row)
    nb = H // bh

    xb = _pad_and_band(x_nhwc, bh)                  # (N*nb, bh+2, Wp, Ci)
    w2d = w_hwio.reshape(9 * Ci, Co)                # matches im2col column order

    flops = 2 * N * H * W * 9 * Ci * Co
    bytes_accessed = 4 * (int(xb.size) + N * H * W * Co + 9 * Ci * Co)

    y, s1, s2 = pl.pallas_call(
        _conv_bias_stats_kernel,
        grid=(N, nb),
        in_specs=[
            pl.BlockSpec((None, bh + 2, Wp, Ci),
                         lambda n, hb: (n * nb + hb, 0, 0, 0)),
            pl.BlockSpec((9 * Ci, Co), lambda n, hb: (0, 0)),   # resident
            pl.BlockSpec((1, Co), lambda n, hb: (0, 0)),        # resident
        ],
        out_specs=[
            pl.BlockSpec((None, bh, W, Co), lambda n, hb: (n, hb, 0, 0)),
            pl.BlockSpec((None, 1, Co), lambda n, hb: (n * nb + hb, 0, 0)),
            pl.BlockSpec((None, 1, Co), lambda n, hb: (n * nb + hb, 0, 0)),
        ],
        out_shape=[
            jax.ShapeDtypeStruct((N, H, W, Co), jnp.float32),
            jax.ShapeDtypeStruct((N * nb, 1, Co), jnp.float32),
            jax.ShapeDtypeStruct((N * nb, 1, Co), jnp.float32),
        ],
        compiler_params=pltpu.CompilerParams(
            dimension_semantics=("parallel", "parallel"),
            vmem_limit_bytes=VMEM_LIMIT_BYTES),
        cost_estimate=pl.CostEstimate(flops=flops, transcendentals=0,
                                      bytes_accessed=bytes_accessed),
    )(xb, w2d, bias.reshape(1, Co))

    # Two-phase BN finalize (tiny (Co,)-sized math; kept in f32).
    cnt = float(N * H * W)
    mean = jnp.sum(s1, axis=(0, 1)) / cnt
    ex2 = jnp.sum(s2, axis=(0, 1)) / cnt
    var = jnp.maximum(ex2 - mean * mean, 0.0)       # biased variance, like torch
    return y, mean, var
    # TODO(synk): BatchNorm running_mean/running_var buffer updates (training
    # side effect) are not modeled; only the forward activation math is kept.


# ----------------------------------------------------------------------------
# Kernel B: folded BN2 affine + PReLU + nearest-2x upsample + skip add
# ----------------------------------------------------------------------------
def _bn_prelu_upsample_add_kernel(y_ref, scale_ref, shift_ref, alpha_ref,
                                  skip_ref, o_ref):
    bh, W, C = y_ref.shape
    z = y_ref[...] * scale_ref[...] + shift_ref[...]        # folded BN affine
    a = alpha_ref[0]
    z = jnp.where(z >= 0, z, a * z)                         # PReLU (commutes w/ nearest-up)
    # H-duplicate: leading-dim broadcast + leading-dim collapse (no relayout).
    z2 = jnp.broadcast_to(z[:, None, :, :], (bh, 2, W, C)).reshape(2 * bh, W, C)
    # W-duplicate packed into the lane dim -> one dense store per tile.
    up = jnp.concatenate([z2, z2], axis=-1)                 # (2bh, W, 2C)
    o_ref[...] = (up + skip_ref[...]).astype(o_ref.dtype)


def bn_prelu_upsample_add(y_nhwc, scale, shift, alpha, skip_nhwc):
    N, H, W, C = y_nhwc.shape
    per_row = 4 * 2 * (W * C + 2 * (2 * W * 2 * C))         # y + skip + out blocks (x2 buf)
    bh = _largest_band(H, per_row)
    nb = H // bh

    # Free (bitcast-level) reshape: (N, 2H, 2W, C) -> (N, 2H, W, 2C); no HBM
    # transpose passes around the kernel.
    skip_packed = skip_nhwc.reshape(N, 2 * H, W, 2 * C)
    alpha_arr = jnp.asarray(alpha, jnp.float32).reshape(1)

    out_packed = pl.pallas_call(
        _bn_prelu_upsample_add_kernel,
        grid=(N, nb),
        in_specs=[
            pl.BlockSpec((None, bh, W, C), lambda n, hb: (n, hb, 0, 0)),
            pl.BlockSpec((1, C), lambda n, hb: (0, 0)),
            pl.BlockSpec((1, C), lambda n, hb: (0, 0)),
            pl.BlockSpec(memory_space=pltpu.MemorySpace.SMEM),   # PReLU alpha scalar
            pl.BlockSpec((None, 2 * bh, W, 2 * C), lambda n, hb: (n, hb, 0, 0)),
        ],
        out_specs=pl.BlockSpec((None, 2 * bh, W, 2 * C),
                               lambda n, hb: (n, hb, 0, 0)),
        out_shape=jax.ShapeDtypeStruct((N, 2 * H, W, 2 * C), jnp.float32),
        compiler_params=pltpu.CompilerParams(
            dimension_semantics=("parallel", "parallel"),
            vmem_limit_bytes=VMEM_LIMIT_BYTES),
    )(y_nhwc, scale.reshape(1, C), shift.reshape(1, C), alpha_arr, skip_packed)

    return out_packed.reshape(N, 2 * H, 2 * W, C)            # free bitcast reshape
    # TODO(synk): for tiny channel counts (C<32) lane density could be improved
    # further by folding W into the lane dim; production channel counts (>=64)
    # already give dense 128-lane stores in this packed layout.


# ----------------------------------------------------------------------------
# Parameters & module-level forward
# ----------------------------------------------------------------------------
def init_upblock_params(key, cin, cout):
    k1, k2, k3, k4 = jax.random.split(key, 4)
    s1 = 1.0 / np.sqrt(cin * 9)
    s2 = 1.0 / np.sqrt(cout * 9)
    return dict(
        w1=jax.random.normal(k1, (3, 3, cin, cout), jnp.float32) * s1,   # HWIO
        b1=jax.random.normal(k2, (cout,), jnp.float32) * s1,
        w2=jax.random.normal(k3, (3, 3, cout, cout), jnp.float32) * s2,  # HWIO
        b2=jax.random.normal(k4, (cout,), jnp.float32) * s2,
        g1=jnp.ones((cout,), jnp.float32), beta1=jnp.zeros((cout,), jnp.float32),
        g2=jnp.ones((cout,), jnp.float32), beta2=jnp.zeros((cout,), jnp.float32),
        alpha=jnp.full((1,), PRELU_ALPHA, jnp.float32),
    )


def upblock_forward(x_nhwc, skip_nhwc, p):
    # conv1 + bias (pre-BN) and BN1 batch statistics in one gridded pass.
    y1, m1, v1 = conv3x3_stats(x_nhwc, p['w1'], p['b1'])
    scale1 = p['g1'] * jax.lax.rsqrt(v1 + BN_EPS)
    shift1 = p['beta1'] - m1 * scale1
    # BN1 folded to a per-channel affine; XLA fuses it with the pad/band glue
    # feeding conv2, so the conv2 zero padding stays zero exactly as in torch.
    y1n = y1 * scale1 + shift1

    y2, m2, v2 = conv3x3_stats(y1n, p['w2'], p['b2'])
    scale2 = p['g2'] * jax.lax.rsqrt(v2 + BN_EPS)
    shift2 = p['beta2'] - m2 * scale2

    # BN2 affine + PReLU + nearest-2x + skip add fused in one mem-bound kernel.
    return bn_prelu_upsample_add(y2, scale2, shift2, p['alpha'], skip_nhwc)


def decoder_forward(x_nchw, skips_nchw, params):
    """Decoder.forward: x = upblock_d(x) + skips[d] for d in range(depth)."""
    # NCHW<->NHWC only at the module boundary (production callers should stay
    # NHWC end-to-end and drop these transposes entirely).
    x = jnp.transpose(x_nchw, (0, 2, 3, 1))
    for p, skip in zip(params, skips_nchw):
        x = upblock_forward(x, jnp.transpose(skip, (0, 2, 3, 1)), p)
    return jnp.transpose(x, (0, 3, 1, 2))


# ----------------------------------------------------------------------------
# Pure-JAX reference (for correctness check)
# ----------------------------------------------------------------------------
def _ref_upblock(x, skip, p):
    def conv_bn(h, w, b, g, beta):
        y = jax.lax.conv_general_dilated(
            h, w, (1, 1), 'SAME',
            dimension_numbers=('NHWC', 'HWIO', 'NHWC')) + b
        m = y.mean(axis=(0, 1, 2), keepdims=True)
        v = ((y - m) ** 2).mean(axis=(0, 1, 2), keepdims=True)
        return (y - m) / jnp.sqrt(v + BN_EPS) * g + beta
    h = conv_bn(x, p['w1'], p['b1'], p['g1'], p['beta1'])
    h = conv_bn(h, p['w2'], p['b2'], p['g2'], p['beta2'])
    up = jnp.repeat(jnp.repeat(h, 2, axis=1), 2, axis=2)
    act = jnp.where(up >= 0, up, p['alpha'] * up)
    return act + skip


if __name__ == "__main__":
    depth = 2
    channels = [8, 4, 4]          # channels[i] -> channels[i+1] per Upblock
    N, H, W = 2, 8, 8

    key = jax.random.PRNGKey(0)
    k_x, k_p, k_s = jax.random.split(key, 3)

    x = jax.random.normal(k_x, (N, channels[0], H, W), jnp.float32)      # NCHW
    p_keys = jax.random.split(k_p, depth)
    params = [init_upblock_params(p_keys[i], channels[i], channels[i + 1])
              for i in range(depth)]
    s_keys = jax.random.split(k_s, depth)
    skips = [jax.random.normal(
                 s_keys[i],
                 (N, channels[i + 1], H * 2 ** (i + 1), W * 2 ** (i + 1)),
                 jnp.float32)
             for i in range(depth)]                                      # NCHW

    out = jax.jit(decoder_forward)(x, skips, params)
    out = jax.block_until_ready(out)

    # reference
    xr = jnp.transpose(x, (0, 2, 3, 1))
    for i in range(depth):
        xr = _ref_upblock(xr, jnp.transpose(skips[i], (0, 2, 3, 1)), params[i])
    ref = jnp.transpose(xr, (0, 3, 1, 2))

    assert out.shape == (N, channels[-1], H * 2 ** depth, W * 2 ** depth)
    np.testing.assert_allclose(np.asarray(out), np.asarray(ref),
                               rtol=2e-4, atol=2e-4)
    print("KERNEL_OK")
</pallas_src>

<mosaic_0001>
module attributes {stable_mosaic.version = 11 : i64} {
  func.func @_conv_bias_stats_kernel(%arg0: i32, %arg1: i32, %arg2: memref<1x10x10x8xf32, #tpu.memory_space<vmem>>, %arg3: memref<72x4xf32, #tpu.memory_space<vmem>>, %arg4: memref<1x4xf32, #tpu.memory_space<vmem>>, %arg5: memref<1x8x8x4xf32, #tpu.memory_space<vmem>>, %arg6: memref<1x1x4xf32, #tpu.memory_space<vmem>>, %arg7: memref<1x1x4xf32, #tpu.memory_space<vmem>>) attributes {dimension_semantics = [#tpu.dimension_semantics<parallel>, #tpu.dimension_semantics<parallel>], iteration_bounds = array<i64: 2, 1>, scalar_prefetch = 0 : i64, scratch_operands = 0 : i64, tpu.core_type = #tpu.core_type<tc>, window_params = [{transform_indices = @transform_0, window_bounds = array<i64: 1, 10, 10, 8>}, {pipeline_mode = #tpu.pipeline_mode<synchronous>, transform_indices = @transform_1, window_bounds = array<i64: 72, 4>}, {pipeline_mode = #tpu.pipeline_mode<synchronous>, transform_indices = @transform_2, window_bounds = array<i64: 1, 4>}, {transform_indices = @transform_3, window_bounds = array<i64: 1, 8, 8, 4>}, {transform_indices = @transform_4, window_bounds = array<i64: 1, 1, 4>}, {transform_indices = @transform_5, window_bounds = array<i64: 1, 1, 4>}]} {
    %c0 = arith.constant 0 : index
    %c0_0 = arith.constant 0 : index
    %c0_1 = arith.constant 0 : index
    %c0_2 = arith.constant 0 : index
    %0 = vector.load %arg2[%c0, %c0_0, %c0_1, %c0_2] : memref<1x10x10x8xf32, #tpu.memory_space<vmem>>, vector<1x8x8x8xf32>
    %1 = vector.shape_cast %0 : vector<1x8x8x8xf32> to vector<8x8x8xf32>
    %2 = vector.shape_cast %1 : vector<8x8x8xf32> to vector<64x8xf32>
    %c0_3 = arith.constant 0 : index
    %c0_4 = arith.constant 0 : index
    %c1 = arith.constant 1 : index
    %c0_5 = arith.constant 0 : index
    %3 = vector.load %arg2[%c0_3, %c0_4, %c1, %c0_5] : memref<1x10x10x8xf32, #tpu.memory_space<vmem>>, vector<1x8x8x8xf32>
    %4 = vector.shape_cast %3 : vector<1x8x8x8xf32> to vector<8x8x8xf32>
    %5 = vector.shape_cast %4 : vector<8x8x8xf32> to vector<64x8xf32>
    %c0_6 = arith.constant 0 : index
    %c0_7 = arith.constant 0 : index
    %c2 = arith.constant 2 : index
    %c0_8 = arith.constant 0 : index
    %6 = vector.load %arg2[%c0_6, %c0_7, %c2, %c0_8] : memref<1x10x10x8xf32, #tpu.memory_space<vmem>>, vector<1x8x8x8xf32>
    %7 = vector.shape_cast %6 : vector<1x8x8x8xf32> to vector<8x8x8xf32>
    %8 = vector.shape_cast %7 : vector<8x8x8xf32> to vector<64x8xf32>
    %c0_9 = arith.constant 0 : index
    %c1_10 = arith.constant 1 : index
    %c0_11 = arith.constant 0 : index
    %c0_12 = arith.constant 0 : index
    %9 = vector.load %arg2[%c0_9, %c1_10, %c0_11, %c0_12] : memref<1x10x10x8xf32, #tpu.memory_space<vmem>>, vector<1x8x8x8xf32>
    %10 = vector.shape_cast %9 : vector<1x8x8x8xf32> to vector<8x8x8xf32>
    %11 = vector.shape_cast %10 : vector<8x8x8xf32> to vector<64x8xf32>
    %c0_13 = arith.constant 0 : index
    %c1_14 = arith.constant 1 : index
    %c1_15 = arith.constant 1 : index
    %c0_16 = arith.constant 0 : index
    %12 = vector.load %arg2[%c0_13, %c1_14, %c1_15, %c0_16] : memref<1x10x10x8xf32, #tpu.memory_space<vmem>>, vector<1x8x8x8xf32>
    %13 = vector.shape_cast %12 : vector<1x8x8x8xf32> to vector<8x8x8xf32>
    %14 = vector.shape_cast %13 : vector<8x8x8xf32> to vector<64x8xf32>
    %c0_17 = arith.constant 0 : index
    %c1_18 = arith.constant 1 : index
    %c2_19 = arith.constant 2 : index
    %c0_20 = arith.constant 0 : index
    %15 = vector.load %arg2[%c0_17, %c1_18, %c2_19, %c0_20] : memref<1x10x10x8xf32, #tpu.memory_space<vmem>>, vector<1x8x8x8xf32>
    %16 = vector.shape_cast %15 : vector<1x8x8x8xf32> to vector<8x8x8xf32>
    %17 = vector.shape_cast %16 : vector<8x8x8xf32> to vector<64x8xf32>
    %c0_21 = arith.constant 0 : index
    %c2_22 = arith.constant 2 : index
    %c0_23 = arith.constant 0 : index
    %c0_24 = arith.constant 0 : index
    %18 = vector.load %arg2[%c0_21, %c2_22, %c0_23, %c0_24] : memref<1x10x10x8xf32, #tpu.memory_space<vmem>>, vector<1x8x8x8xf32>
    %19 = vector.shape_cast %18 : vector<1x8x8x8xf32> to vector<8x8x8xf32>
    %20 = vector.shape_cast %19 : vector<8x8x8xf32> to vector<64x8xf32>
    %c0_25 = arith.constant 0 : index
    %c2_26 = arith.constant 2 : index
    %c1_27 = arith.constant 1 : index
    %c0_28 = arith.constant 0 : index
    %21 = vector.load %arg2[%c0_25, %c2_26, %c1_27, %c0_28] : memref<1x10x10x8xf32, #tpu.memory_space<vmem>>, vector<1x8x8x8xf32>
    %22 = vector.shape_cast %21 : vector<1x8x8x8xf32> to vector<8x8x8xf32>
    %23 = vector.shape_cast %22 : vector<8x8x8xf32> to vector<64x8xf32>
    %c0_29 = arith.constant 0 : index
    %c2_30 = arith.constant 2 : index
    %c2_31 = arith.constant 2 : index
    %c0_32 = arith.constant 0 : index
    %24 = vector.load %arg2[%c0_29, %c2_30, %c2_31, %c0_32] : memref<1x10x10x8xf32, #tpu.memory_space<vmem>>, vector<1x8x8x8xf32>
    %25 = vector.shape_cast %24 : vector<1x8x8x8xf32> to vector<8x8x8xf32>
    %26 = vector.shape_cast %25 : vector<8x8x8xf32> to vector<64x8xf32>
    %27 = tpu.concatenate %2, %5, %8, %11, %14, %17, %20, %23, %26 in 1 : vector<64x8xf32>, vector<64x8xf32>, vector<64x8xf32>, vector<64x8xf32>, vector<64x8xf32>, vector<64x8xf32>, vector<64x8xf32>, vector<64x8xf32>, vector<64x8xf32> -> vector<64x72xf32>
    %c0_33 = arith.constant 0 : index
    %c0_34 = arith.constant 0 : index
    %28 = vector.load %arg3[%c0_33, %c0_34] : memref<72x4xf32, #tpu.memory_space<vmem>>, vector<72x4xf32>
    %cst = arith.constant dense<0.000000e+00> : vector<64x4xf32>
    %29 = tpu.matmul %27, %28, %cst {dimension_numbers = #tpu.dot_dimension_numbers<[1], [0], [0], [1], [0, 0, 1, 1], [], []>} : vector<64x72xf32>, vector<72x4xf32>, vector<64x4xf32> -> vector<64x4xf32>
    %c0_35 = arith.constant 0 : index
    %c0_36 = arith.constant 0 : index
    %30 = vector.load %arg4[%c0_35, %c0_36] : memref<1x4xf32, #tpu.memory_space<vmem>>, vector<1x4xf32>
    %31 = vector.broadcast %30 : vector<1x4xf32> to vector<64x4xf32>
    %32 = arith.addf %29, %31 : vector<64x4xf32>
    %33 = vector.shape_cast %32 : vector<64x4xf32> to vector<8x8x4xf32>
    %c0_37 = arith.constant 0 : index
    %c0_38 = arith.constant 0 : index
    %c0_39 = arith.constant 0 : index
    %c0_40 = arith.constant 0 : index
    %34 = vector.load %arg5[%c0_37, %c0_38, %c0_39, %c0_40] : memref<1x8x8x4xf32, #tpu.memory_space<vmem>>, vector<1x8x8x4xf32>
    %35 = vector.shape_cast %34 : vector<1x8x8x4xf32> to vector<8x8x4xf32>
    %36 = vector.shape_cast %33 : vector<8x8x4xf32> to vector<1x8x8x4xf32>
    tpu.vector_store %arg5[%c0_37, %c0_38, %c0_39, %c0_40], %36 {strides = array<i32>} : memref<1x8x8x4xf32, #tpu.memory_space<vmem>>, vector<1x8x8x4xf32>,
    %cst_41 = arith.constant dense<0.000000e+00> : vector<4xf32>
    %37 = vector.multi_reduction <add>, %32, %cst_41 [0] : vector<64x4xf32> to vector<4xf32>
    %38 = vector.shape_cast %37 : vector<4xf32> to vector<1x4xf32>
    %c0_42 = arith.constant 0 : index
    %c0_43 = arith.constant 0 : index
    %c0_44 = arith.constant 0 : index
    %39 = vector.load %arg6[%c0_42, %c0_43, %c0_44] : memref<1x1x4xf32, #tpu.memory_space<vmem>>, vector<1x1x4xf32>
    %40 = vector.shape_cast %39 : vector<1x1x4xf32> to vector<1x4xf32>
    %41 = vector.shape_cast %38 : vector<1x4xf32> to vector<1x1x4xf32>
    tpu.vector_store %arg6[%c0_42, %c0_43, %c0_44], %41 {strides = array<i32>} : memref<1x1x4xf32, #tpu.memory_space<vmem>>, vector<1x1x4xf32>,
    %42 = arith.mulf %32, %32 : vector<64x4xf32>
    %cst_45 = arith.constant dense<0.000000e+00> : vector<4xf32>
    %43 = vector.multi_reduction <add>, %42, %cst_45 [0] : vector<64x4xf32> to vector<4xf32>
    %44 = vector.shape_cast %43 : vector<4xf32> to vector<1x4xf32>
    %c0_46 = arith.constant 0 : index
    %c0_47 = arith.constant 0 : index
    %c0_48 = arith.constant 0 : index
    %45 = vector.load %arg7[%c0_46, %c0_47, %c0_48] : memref<1x1x4xf32, #tpu.memory_space<vmem>>, vector<1x1x4xf32>
    %46 = vector.shape_cast %45 : vector<1x1x4xf32> to vector<1x4xf32>
    %47 = vector.shape_cast %44 : vector<1x4xf32> to vector<1x1x4xf32>
    tpu.vector_store %arg7[%c0_46, %c0_47, %c0_48], %47 {strides = array<i32>} : memref<1x1x4xf32, #tpu.memory_space<vmem>>, vector<1x1x4xf32>,
    return
  }
  func.func @transform_0(%arg0: i32, %arg1: i32) -> (i32, i32, i32, i32) {
    %c1_i32 = arith.constant 1 : i32
    %0 = arith.muli %arg0, %c1_i32 : i32
    %1 = arith.addi %0, %arg1 : i32
    %c0_i32 = arith.constant 0 : i32
    %c0_i32_0 = arith.constant 0 : i32
    %c0_i32_1 = arith.constant 0 : i32
    %c0_i32_2 = arith.constant 0 : i32
    return %1, %c0_i32, %c0_i32_0, %c0_i32_1 : i32, i32, i32, i32
  }
  func.func @transform_1(%arg0: i32, %arg1: i32) -> (i32, i32) {
    %c0_i32 = arith.constant 0 : i32
    %c0_i32_0 = arith.constant 0 : i32
    %c0_i32_1 = arith.constant 0 : i32
    return %c0_i32, %c0_i32_0 : i32, i32
  }
  func.func @transform_2(%arg0: i32, %arg1: i32) -> (i32, i32) {
    %c0_i32 = arith.constant 0 : i32
    %c0_i32_0 = arith.constant 0 : i32
    %c0_i32_1 = arith.constant 0 : i32
    return %c0_i32, %c0_i32_0 : i32, i32
  }
  func.func @transform_3(%arg0: i32, %arg1: i32) -> (i32, i32, i32, i32) {
    %c0_i32 = arith.constant 0 : i32
    %c0_i32_0 = arith.constant 0 : i32
    %c0_i32_1 = arith.constant 0 : i32
    return %arg0, %arg1, %c0_i32, %c0_i32_0 : i32, i32, i32, i32
  }
  func.func @transform_4(%arg0: i32, %arg1: i32) -> (i32, i32, i32) {
    %c1_i32 = arith.constant 1 : i32
    %0 = arith.muli %arg0, %c1_i32 : i32
    %1 = arith.addi %0, %arg1 : i32
    %c0_i32 = arith.constant 0 : i32
    %c0_i32_0 = arith.constant 0 : i32
    %c0_i32_1 = arith.constant 0 : i32
    return %1, %c0_i32, %c0_i32_0 : i32, i32, i32
  }
  func.func @transform_5(%arg0: i32, %arg1: i32) -> (i32, i32, i32) {
    %c1_i32 = arith.constant 1 : i32
    %0 = arith.muli %arg0, %c1_i32 : i32
    %1 = arith.addi %0, %arg1 : i32
    %c0_i32 = arith.constant 0 : i32
    %c0_i32_0 = arith.constant 0 : i32
    %c0_i32_1 = arith.constant 0 : i32
    return %1, %c0_i32, %c0_i32_0 : i32, i32, i32
  }
}

module attributes {stable_mosaic.version = 11 : i64} {
  func.func @_conv_bias_stats_kernel(%arg0: i32, %arg1: i32, %arg2: memref<1x10x10x4xf32, #tpu.memory_space<vmem>>, %arg3: memref<36x4xf32, #tpu.memory_space<vmem>>, %arg4: memref<1x4xf32, #tpu.memory_space<vmem>>, %arg5: memref<1x8x8x4xf32, #tpu.memory_space<vmem>>, %arg6: memref<1x1x4xf32, #tpu.memory_space<vmem>>, %arg7: memref<1x1x4xf32, #tpu.memory_space<vmem>>) attributes {dimension_semantics = [#tpu.dimension_semantics<parallel>, #tpu.dimension_semantics<parallel>], iteration_bounds = array<i64: 2, 1>, scalar_prefetch = 0 : i64, scratch_operands = 0 : i64, tpu.core_type = #tpu.core_type<tc>, window_params = [{transform_indices = @transform_0, window_bounds = array<i64: 1, 10, 10, 4>}, {pipeline_mode = #tpu.pipeline_mode<synchronous>, transform_indices = @transform_1, window_bounds = array<i64: 36, 4>}, {pipeline_mode = #tpu.pipeline_mode<synchronous>, transform_indices = @transform_2, window_bounds = array<i64: 1, 4>}, {transform_indices = @transform_3, window_bounds = array<i64: 1, 8, 8, 4>}, {transform_indices = @transform_4, window_bounds = array<i64: 1, 1, 4>}, {transform_indices = @transform_5, window_bounds = array<i64: 1, 1, 4>}]} {
    %c0 = arith.constant 0 : index
    %c0_0 = arith.constant 0 : index
    %c0_1 = arith.constant 0 : index
    %c0_2 = arith.constant 0 : index
    %0 = vector.load %arg2[%c0, %c0_0, %c0_1, %c0_2] : memref<1x10x10x4xf32, #tpu.memory_space<vmem>>, vector<1x8x8x4xf32>
    %1 = vector.shape_cast %0 : vector<1x8x8x4xf32> to vector<8x8x4xf32>
    %2 = vector.shape_cast %1 : vector<8x8x4xf32> to vector<64x4xf32>
    %c0_3 = arith.constant 0 : index
    %c0_4 = arith.constant 0 : index
    %c1 = arith.constant 1 : index
    %c0_5 = arith.constant 0 : index
    %3 = vector.load %arg2[%c0_3, %c0_4, %c1, %c0_5] : memref<1x10x10x4xf32, #tpu.memory_space<vmem>>, vector<1x8x8x4xf32>
    %4 = vector.shape_cast %3 : vector<1x8x8x4xf32> to vector<8x8x4xf32>
    %5 = vector.shape_cast %4 : vector<8x8x4xf32> to vector<64x4xf32>
    %c0_6 = arith.constant 0 : index
    %c0_7 = arith.constant 0 : index
    %c2 = arith.constant 2 : index
    %c0_8 = arith.constant 0 : index
    %6 = vector.load %arg2[%c0_6, %c0_7, %c2, %c0_8] : memref<1x10x10x4xf32, #tpu.memory_space<vmem>>, vector<1x8x8x4xf32>
    %7 = vector.shape_cast %6 : vector<1x8x8x4xf32> to vector<8x8x4xf32>
    %8 = vector.shape_cast %7 : vector<8x8x4xf32> to vector<64x4xf32>
    %c0_9 = arith.constant 0 : index
    %c1_10 = arith.constant 1 : index
    %c0_11 = arith.constant 0 : index
    %c0_12 = arith.constant 0 : index
    %9 = vector.load %arg2[%c0_9, %c1_10, %c0_11, %c0_12] : memref<1x10x10x4xf32, #tpu.memory_space<vmem>>, vector<1x8x8x4xf32>
    %10 = vector.shape_cast %9 : vector<1x8x8x4xf32> to vector<8x8x4xf32>
    %11 = vector.shape_cast %10 : vector<8x8x4xf32> to vector<64x4xf32>
    %c0_13 = arith.constant 0 : index
    %c1_14 = arith.constant 1 : index
    %c1_15 = arith.constant 1 : index
    %c0_16 = arith.constant 0 : index
    %12 = vector.load %arg2[%c0_13, %c1_14, %c1_15, %c0_16] : memref<1x10x10x4xf32, #tpu.memory_space<vmem>>, vector<1x8x8x4xf32>
    %13 = vector.shape_cast %12 : vector<1x8x8x4xf32> to vector<8x8x4xf32>
    %14 = vector.shape_cast %13 : vector<8x8x4xf32> to vector<64x4xf32>
    %c0_17 = arith.constant 0 : index
    %c1_18 = arith.constant 1 : index
    %c2_19 = arith.constant 2 : index
    %c0_20 = arith.constant 0 : index
    %15 = vector.load %arg2[%c0_17, %c1_18, %c2_19, %c0_20] : memref<1x10x10x4xf32, #tpu.memory_space<vmem>>, vector<1x8x8x4xf32>
    %16 = vector.shape_cast %15 : vector<1x8x8x4xf32> to vector<8x8x4xf32>
    %17 = vector.shape_cast %16 : vector<8x8x4xf32> to vector<64x4xf32>
    %c0_21 = arith.constant 0 : index
    %c2_22 = arith.constant 2 : index
    %c0_23 = arith.constant 0 : index
    %c0_24 = arith.constant 0 : index
    %18 = vector.load %arg2[%c0_21, %c2_22, %c0_23, %c0_24] : memref<1x10x10x4xf32, #tpu.memory_space<vmem>>, vector<1x8x8x4xf32>
    %19 = vector.shape_cast %18 : vector<1x8x8x4xf32> to vector<8x8x4xf32>
    %20 = vector.shape_cast %19 : vector<8x8x4xf32> to vector<64x4xf32>
    %c0_25 = arith.constant 0 : index
    %c2_26 = arith.constant 2 : index
    %c1_27 = arith.constant 1 : index
    %c0_28 = arith.constant 0 : index
    %21 = vector.load %arg2[%c0_25, %c2_26, %c1_27, %c0_28] : memref<1x10x10x4xf32, #tpu.memory_space<vmem>>, vector<1x8x8x4xf32>
    %22 = vector.shape_cast %21 : vector<1x8x8x4xf32> to vector<8x8x4xf32>
    %23 = vector.shape_cast %22 : vector<8x8x4xf32> to vector<64x4xf32>
    %c0_29 = arith.constant 0 : index
    %c2_30 = arith.constant 2 : index
    %c2_31 = arith.constant 2 : index
    %c0_32 = arith.constant 0 : index
    %24 = vector.load %arg2[%c0_29, %c2_30, %c2_31, %c0_32] : memref<1x10x10x4xf32, #tpu.memory_space<vmem>>, vector<1x8x8x4xf32>
    %25 = vector.shape_cast %24 : vector<1x8x8x4xf32> to vector<8x8x4xf32>
    %26 = vector.shape_cast %25 : vector<8x8x4xf32> to vector<64x4xf32>
    %27 = tpu.concatenate %2, %5, %8, %11, %14, %17, %20, %23, %26 in 1 : vector<64x4xf32>, vector<64x4xf32>, vector<64x4xf32>, vector<64x4xf32>, vector<64x4xf32>, vector<64x4xf32>, vector<64x4xf32>, vector<64x4xf32>, vector<64x4xf32> -> vector<64x36xf32>
    %c0_33 = arith.constant 0 : index
    %c0_34 = arith.constant 0 : index
    %28 = vector.load %arg3[%c0_33, %c0_34] : memref<36x4xf32, #tpu.memory_space<vmem>>, vector<36x4xf32>
    %cst = arith.constant dense<0.000000e+00> : vector<64x4xf32>
    %29 = tpu.matmul %27, %28, %cst {dimension_numbers = #tpu.dot_dimension_numbers<[1], [0], [0], [1], [0, 0, 1, 1], [], []>} : vector<64x36xf32>, vector<36x4xf32>, vector<64x4xf32> -> vector<64x4xf32>
    %c0_35 = arith.constant 0 : index
    %c0_36 = arith.constant 0 : index
    %30 = vector.load %arg4[%c0_35, %c0_36] : memref<1x4xf32, #tpu.memory_space<vmem>>, vector<1x4xf32>
    %31 = vector.broadcast %30 : vector<1x4xf32> to vector<64x4xf32>
    %32 = arith.addf %29, %31 : vector<64x4xf32>
    %33 = vector.shape_cast %32 : vector<64x4xf32> to vector<8x8x4xf32>
    %c0_37 = arith.constant 0 : index
    %c0_38 = arith.constant 0 : index
    %c0_39 = arith.constant 0 : index
    %c0_40 = arith.constant 0 : index
    %34 = vector.load %arg5[%c0_37, %c0_38, %c0_39, %c0_40] : memref<1x8x8x4xf32, #tpu.memory_space<vmem>>, vector<1x8x8x4xf32>
    %35 = vector.shape_cast %34 : vector<1x8x8x4xf32> to vector<8x8x4xf32>
    %36 = vector.shape_cast %33 : vector<8x8x4xf32> to vector<1x8x8x4xf32>
    tpu.vector_store %arg5[%c0_37, %c0_38, %c0_39, %c0_40], %36 {strides = array<i32>} : memref<1x8x8x4xf32, #tpu.memory_space<vmem>>, vector<1x8x8x4xf32>,
    %cst_41 = arith.constant dense<0.000000e+00> : vector<4xf32>
    %37 = vector.multi_reduction <add>, %32, %cst_41 [0] : vector<64x4xf32> to vector<4xf32>
    %38 = vector.shape_cast %37 : vector<4xf32> to vector<1x4xf32>
    %c0_42 = arith.constant 0 : index
    %c0_43 = arith.constant 0 : index
    %c0_44 = arith.constant 0 : index
    %39 = vector.load %arg6[%c0_42, %c0_43, %c0_44] : memref<1x1x4xf32, #tpu.memory_space<vmem>>, vector<1x1x4xf32>
    %40 = vector.shape_cast %39 : vector<1x1x4xf32> to vector<1x4xf32>
    %41 = vector.shape_cast %38 : vector<1x4xf32> to vector<1x1x4xf32>
    tpu.vector_store %arg6[%c0_42, %c0_43, %c0_44], %41 {strides = array<i32>} : memref<1x1x4xf32, #tpu.memory_space<vmem>>, vector<1x1x4xf32>,
    %42 = arith.mulf %32, %32 : vector<64x4xf32>
    %cst_45 = arith.constant dense<0.000000e+00> : vector<4xf32>
    %43 = vector.multi_reduction <add>, %42, %cst_45 [0] : vector<64x4xf32> to vector<4xf32>
    %44 = vector.shape_cast %43 : vector<4xf32> to vector<1x4xf32>
    %c0_46 = arith.constant 0 : index
    %c0_47 = arith.constant 0 : index
    %c0_48 = arith.constant 0 : index
    %45 = vector.load %arg7[%c0_46, %c0_47, %c0_48] : memref<1x1x4xf32, #tpu.memory_space<vmem>>, vector<1x1x4xf32>
    %46 = vector.shape_cast %45 : vector<1x1x4xf32> to vector<1x4xf32>
    %47 = vector.shape_cast %44 : vector<1x4xf32> to vector<1x1x4xf32>
    tpu.vector_store %arg7[%c0_46, %c0_47, %c0_48], %47 {strides = array<i32>} : memref<1x1x4xf32, #tpu.memory_space<vmem>>, vector<1x1x4xf32>,
    return
  }
  func.func @transform_0(%arg0: i32, %arg1: i32) -> (i32, i32, i32, i32) {
    %c1_i32 = arith.constant 1 : i32
    %0 = arith.muli %arg0, %c1_i32 : i32
    %1 = arith.addi %0, %arg1 : i32
    %c0_i32 = arith.constant 0 : i32
    %c0_i32_0 = arith.constant 0 : i32
    %c0_i32_1 = arith.constant 0 : i32
    %c0_i32_2 = arith.constant 0 : i32
    return %1, %c0_i32, %c0_i32_0, %c0_i32_1 : i32, i32, i32, i32
  }
  func.func @transform_1(%arg0: i32, %arg1: i32) -> (i32, i32) {
    %c0_i32 = arith.constant 0 : i32
    %c0_i32_0 = arith.constant 0 : i32
    %c0_i32_1 = arith.constant 0 : i32
    return %c0_i32, %c0_i32_0 : i32, i32
  }
  func.func @transform_2(%arg0: i32, %arg1: i32) -> (i32, i32) {
    %c0_i32 = arith.constant 0 : i32
    %c0_i32_0 = arith.constant 0 : i32
    %c0_i32_1 = arith.constant 0 : i32
    return %c0_i32, %c0_i32_0 : i32, i32
  }
  func.func @transform_3(%arg0: i32, %arg1: i32) -> (i32, i32, i32, i32) {
    %c0_i32 = arith.constant 0 : i32
    %c0_i32_0 = arith.constant 0 : i32
    %c0_i32_1 = arith.constant 0 : i32
    return %arg0, %arg1, %c0_i32, %c0_i32_0 : i32, i32, i32, i32
  }
  func.func @transform_4(%arg0: i32, %arg1: i32) -> (i32, i32, i32) {
    %c1_i32 = arith.constant 1 : i32
    %0 = arith.muli %arg0, %c1_i32 : i32
    %1 = arith.addi %0, %arg1 : i32
    %c0_i32 = arith.constant 0 : i32
    %c0_i32_0 = arith.constant 0 : i32
    %c0_i32_1 = arith.constant 0 : i32
    return %1, %c0_i32, %c0_i32_0 : i32, i32, i32
  }
  func.func @transform_5(%arg0: i32, %arg1: i32) -> (i32, i32, i32) {
    %c1_i32 = arith.constant 1 : i32
    %0 = arith.muli %arg0, %c1_i32 : i32
    %1 = arith.addi %0, %arg1 : i32
    %c0_i32 = arith.constant 0 : i32
    %c0_i32_0 = arith.constant 0 : i32
    %c0_i32_1 = arith.constant 0 : i32
    return %1, %c0_i32, %c0_i32_0 : i32, i32, i32
  }
}

module attributes {stable_mosaic.version = 11 : i64} {
  func.func @_bn_prelu_upsample_add_kernel(%arg0: i32, %arg1: i32, %arg2: memref<1x8x8x4xf32, #tpu.memory_space<vmem>>, %arg3: memref<1x4xf32, #tpu.memory_space<vmem>>, %arg4: memref<1x4xf32, #tpu.memory_space<vmem>>, %arg5: memref<1xf32, #tpu.memory_space<smem>>, %arg6: memref<1x16x8x8xf32, #tpu.memory_space<vmem>>, %arg7: memref<1x16x8x8xf32, #tpu.memory_space<vmem>>) attributes {dimension_semantics = [#tpu.dimension_semantics<parallel>, #tpu.dimension_semantics<parallel>], iteration_bounds = array<i64: 2, 1>, scalar_prefetch = 0 : i64, scratch_operands = 0 : i64, tpu.core_type = #tpu.core_type<tc>, window_params = [{transform_indices = @transform_0, window_bounds = array<i64: 1, 8, 8, 4>}, {pipeline_mode = #tpu.pipeline_mode<synchronous>, transform_indices = @transform_1, window_bounds = array<i64: 1, 4>}, {pipeline_mode = #tpu.pipeline_mode<synchronous>, transform_indices = @transform_2, window_bounds = array<i64: 1, 4>}, {transform_indices = @transform_3, window_bounds = array<i64: 1>}, {transform_indices = @transform_4, window_bounds = array<i64: 1, 16, 8, 8>}, {transform_indices = @transform_5, window_bounds = array<i64: 1, 16, 8, 8>}]} {
    %c0 = arith.constant 0 : index
    %c0_0 = arith.constant 0 : index
    %c0_1 = arith.constant 0 : index
    %c0_2 = arith.constant 0 : index
    %0 = vector.load %arg2[%c0, %c0_0, %c0_1, %c0_2] : memref<1x8x8x4xf32, #tpu.memory_space<vmem>>, vector<1x8x8x4xf32>
    %1 = vector.shape_cast %0 : vector<1x8x8x4xf32> to vector<8x8x4xf32>
    %c0_3 = arith.constant 0 : index
    %c0_4 = arith.constant 0 : index
    %2 = vector.load %arg3[%c0_3, %c0_4] : memref<1x4xf32, #tpu.memory_space<vmem>>, vector<1x4xf32>
    %3 = vector.shape_cast %2 : vector<1x4xf32> to vector<1x1x4xf32>
    %4 = vector.broadcast %3 : vector<1x1x4xf32> to vector<8x8x4xf32>
    %5 = arith.mulf %1, %4 : vector<8x8x4xf32>
    %c0_5 = arith.constant 0 : index
    %c0_6 = arith.constant 0 : index
    %6 = vector.load %arg4[%c0_5, %c0_6] : memref<1x4xf32, #tpu.memory_space<vmem>>, vector<1x4xf32>
    %7 = vector.shape_cast %6 : vector<1x4xf32> to vector<1x1x4xf32>
    %8 = vector.broadcast %7 : vector<1x1x4xf32> to vector<8x8x4xf32>
    %9 = arith.addf %5, %8 : vector<8x8x4xf32>
    %c0_7 = arith.constant 0 : index
    %10 = memref.load %arg5[%c0_7] : memref<1xf32, #tpu.memory_space<smem>>
    %cst = arith.constant 0.000000e+00 : f32
    %11 = vector.broadcast %cst : f32 to vector<8x8x4xf32>
    %12 = arith.cmpf oge, %9, %11 : vector<8x8x4xf32>
    %13 = vector.broadcast %10 : f32 to vector<8x8x4xf32>
    %14 = arith.mulf %13, %9 : vector<8x8x4xf32>
    %15 = arith.select %12, %9, %14 : vector<8x8x4xi1>, vector<8x8x4xf32>
    %16 = vector.shape_cast %15 : vector<8x8x4xf32> to vector<8x1x8x4xf32>
    %17 = vector.shape_cast %16 : vector<8x1x8x4xf32> to vector<8x1x8x4xf32>
    %18 = vector.broadcast %17 : vector<8x1x8x4xf32> to vector<8x2x8x4xf32>
    %19 = vector.shape_cast %18 : vector<8x2x8x4xf32> to vector<16x8x4xf32>
    %20 = tpu.concatenate %19, %19 in 2 : vector<16x8x4xf32>, vector<16x8x4xf32> -> vector<16x8x8xf32>
    %c0_8 = arith.constant 0 : index
    %c0_9 = arith.constant 0 : index
    %c0_10 = arith.constant 0 : index
    %c0_11 = arith.constant 0 : index
    %21 = vector.load %arg6[%c0_8, %c0_9, %c0_10, %c0_11] : memref<1x16x8x8xf32, #tpu.memory_space<vmem>>, vector<1x16x8x8xf32>
    %22 = vector.shape_cast %21 : vector<1x16x8x8xf32> to vector<16x8x8xf32>
    %23 = arith.addf %20, %22 : vector<16x8x8xf32>
    %c0_12 = arith.constant 0 : index
    %c0_13 = arith.constant 0 : index
    %c0_14 = arith.constant 0 : index
    %c0_15 = arith.constant 0 : index
    %24 = vector.load %arg7[%c0_12, %c0_13, %c0_14, %c0_15] : memref<1x16x8x8xf32, #tpu.memory_space<vmem>>, vector<1x16x8x8xf32>
    %25 = vector.shape_cast %24 : vector<1x16x8x8xf32> to vector<16x8x8xf32>
    %26 = vector.shape_cast %23 : vector<16x8x8xf32> to vector<1x16x8x8xf32>
    tpu.vector_store %arg7[%c0_12, %c0_13, %c0_14, %c0_15], %26 {strides = array<i32>} : memref<1x16x8x8xf32, #tpu.memory_space<vmem>>, vector<1x16x8x8xf32>,
    return
  }
  func.func @transform_0(%arg0: i32, %arg1: i32) -> (i32, i32, i32, i32) {
    %c0_i32 = arith.constant 0 : i32
    %c0_i32_0 = arith.constant 0 : i32
    %c0_i32_1 = arith.constant 0 : i32
    return %arg0, %arg1, %c0_i32, %c0_i32_0 : i32, i32, i32, i32
  }
  func.func @transform_1(%arg0: i32, %arg1: i32) -> (i32, i32) {
    %c0_i32 = arith.constant 0 : i32
    %c0_i32_0 = arith.constant 0 : i32
    %c0_i32_1 = arith.constant 0 : i32
    return %c0_i32, %c0_i32_0 : i32, i32
  }
  func.func @transform_2(%arg0: i32, %arg1: i32) -> (i32, i32) {
    %c0_i32 = arith.constant 0 : i32
    %c0_i32_0 = arith.constant 0 : i32
    %c0_i32_1 = arith.constant 0 : i32
    return %c0_i32, %c0_i32_0 : i32, i32
  }
  func.func @transform_3(%arg0: i32, %arg1: i32) -> i32 {
    %c0_i32 = arith.constant 0 : i32
    %c0_i32_0 = arith.constant 0 : i32
    return %c0_i32 : i32
  }
  func.func @transform_4(%arg0: i32, %arg1: i32) -> (i32, i32, i32, i32) {
    %c0_i32 = arith.constant 0 : i32
    %c0_i32_0 = arith.constant 0 : i32
    %c0_i32_1 = arith.constant 0 : i32
    return %arg0, %arg1, %c0_i32, %c0_i32_0 : i32, i32, i32, i32
  }
  func.func @transform_5(%arg0: i32, %arg1: i32) -> (i32, i32, i32, i32) {
    %c0_i32 = arith.constant 0 : i32
    %c0_i32_0 = arith.constant 0 : i32
    %c0_i32_1 = arith.constant 0 : i32
    return %arg0, %arg1, %c0_i32, %c0_i32_0 : i32, i32, i32, i32
  }
}

module attributes {stable_mosaic.version = 11 : i64} {
  func.func @_conv_bias_stats_kernel(%arg0: i32, %arg1: i32, %arg2: memref<1x18x18x4xf32, #tpu.memory_space<vmem>>, %arg3: memref<36x4xf32, #tpu.memory_space<vmem>>, %arg4: memref<1x4xf32, #tpu.memory_space<vmem>>, %arg5: memref<1x16x16x4xf32, #tpu.memory_space<vmem>>, %arg6: memref<1x1x4xf32, #tpu.memory_space<vmem>>, %arg7: memref<1x1x4xf32, #tpu.memory_space<vmem>>) attributes {dimension_semantics = [#tpu.dimension_semantics<parallel>, #tpu.dimension_semantics<parallel>], iteration_bounds = array<i64: 2, 1>, scalar_prefetch = 0 : i64, scratch_operands = 0 : i64, tpu.core_type = #tpu.core_type<tc>, window_params = [{transform_indices = @transform_0, window_bounds = array<i64: 1, 18, 18, 4>}, {pipeline_mode = #tpu.pipeline_mode<synchronous>, transform_indices = @transform_1, window_bounds = array<i64: 36, 4>}, {pipeline_mode = #tpu.pipeline_mode<synchronous>, transform_indices = @transform_2, window_bounds = array<i64: 1, 4>}, {transform_indices = @transform_3, window_bounds = array<i64: 1, 16, 16, 4>}, {transform_indices = @transform_4, window_bounds = array<i64: 1, 1, 4>}, {transform_indices = @transform_5, window_bounds = array<i64: 1, 1, 4>}]} {
    %c0 = arith.constant 0 : index
    %c0_0 = arith.constant 0 : index
    %c0_1 = arith.constant 0 : index
    %c0_2 = arith.constant 0 : index
    %0 = vector.load %arg2[%c0, %c0_0, %c0_1, %c0_2] : memref<1x18x18x4xf32, #tpu.memory_space<vmem>>, vector<1x16x16x4xf32>
    %1 = vector.shape_cast %0 : vector<1x16x16x4xf32> to vector<16x16x4xf32>
    %2 = vector.shape_cast %1 : vector<16x16x4xf32> to vector<256x4xf32>
    %c0_3 = arith.constant 0 : index
    %c0_4 = arith.constant 0 : index
    %c1 = arith.constant 1 : index
    %c0_5 = arith.constant 0 : index
    %3 = vector.load %arg2[%c0_3, %c0_4, %c1, %c0_5] : memref<1x18x18x4xf32, #tpu.memory_space<vmem>>, vector<1x16x16x4xf32>
    %4 = vector.shape_cast %3 : vector<1x16x16x4xf32> to vector<16x16x4xf32>
    %5 = vector.shape_cast %4 : vector<16x16x4xf32> to vector<256x4xf32>
    %c0_6 = arith.constant 0 : index
    %c0_7 = arith.constant 0 : index
    %c2 = arith.constant 2 : index
    %c0_8 = arith.constant 0 : index
    %6 = vector.load %arg2[%c0_6, %c0_7, %c2, %c0_8] : memref<1x18x18x4xf32, #tpu.memory_space<vmem>>, vector<1x16x16x4xf32>
    %7 = vector.shape_cast %6 : vector<1x16x16x4xf32> to vector<16x16x4xf32>
    %8 = vector.shape_cast %7 : vector<16x16x4xf32> to vector<256x4xf32>
    %c0_9 = arith.constant 0 : index
    %c1_10 = arith.constant 1 : index
    %c0_11 = arith.constant 0 : index
    %c0_12 = arith.constant 0 : index
    %9 = vector.load %arg2[%c0_9, %c1_10, %c0_11, %c0_12] : memref<1x18x18x4xf32, #tpu.memory_space<vmem>>, vector<1x16x16x4xf32>
    %10 = vector.shape_cast %9 : vector<1x16x16x4xf32> to vector<16x16x4xf32>
    %11 = vector.shape_cast %10 : vector<16x16x4xf32> to vector<256x4xf32>
    %c0_13 = arith.constant 0 : index
    %c1_14 = arith.constant 1 : index
    %c1_15 = arith.constant 1 : index
    %c0_16 = arith.constant 0 : index
    %12 = vector.load %arg2[%c0_13, %c1_14, %c1_15, %c0_16] : memref<1x18x18x4xf32, #tpu.memory_space<vmem>>, vector<1x16x16x4xf32>
    %13 = vector.shape_cast %12 : vector<1x16x16x4xf32> to vector<16x16x4xf32>
    %14 = vector.shape_cast %13 : vector<16x16x4xf32> to vector<256x4xf32>
    %c0_17 = arith.constant 0 : index
    %c1_18 = arith.constant 1 : index
    %c2_19 = arith.constant 2 : index
    %c0_20 = arith.constant 0 : index
    %15 = vector.load %arg2[%c0_17, %c1_18, %c2_19, %c0_20] : memref<1x18x18x4xf32, #tpu.memory_space<vmem>>, vector<1x16x16x4xf32>
    %16 = vector.shape_cast %15 : vector<1x16x16x4xf32> to vector<16x16x4xf32>
    %17 = vector.shape_cast %16 : vector<16x16x4xf32> to vector<256x4xf32>
    %c0_21 = arith.constant 0 : index
    %c2_22 = arith.constant 2 : index
    %c0_23 = arith.constant 0 : index
    %c0_24 = arith.constant 0 : index
    %18 = vector.load %arg2[%c0_21, %c2_22, %c0_23, %c0_24] : memref<1x18x18x4xf32, #tpu.memory_space<vmem>>, vector<1x16x16x4xf32>
    %19 = vector.shape_cast %18 : vector<1x16x16x4xf32> to vector<16x16x4xf32>
    %20 = vector.shape_cast %19 : vector<16x16x4xf32> to vector<256x4xf32>
    %c0_25 = arith.constant 0 : index
    %c2_26 = arith.constant 2 : index
    %c1_27 = arith.constant 1 : index
    %c0_28 = arith.constant 0 : index
    %21 = vector.load %arg2[%c0_25, %c2_26, %c1_27, %c0_28] : memref<1x18x18x4xf32, #tpu.memory_space<vmem>>, vector<1x16x16x4xf32>
    %22 = vector.shape_cast %21 : vector<1x16x16x4xf32> to vector<16x16x4xf32>
    %23 = vector.shape_cast %22 : vector<16x16x4xf32> to vector<256x4xf32>
    %c0_29 = arith.constant 0 : index
    %c2_30 = arith.constant 2 : index
    %c2_31 = arith.constant 2 : index
    %c0_32 = arith.constant 0 : index
    %24 = vector.load %arg2[%c0_29, %c2_30, %c2_31, %c0_32] : memref<1x18x18x4xf32, #tpu.memory_space<vmem>>, vector<1x16x16x4xf32>
    %25 = vector.shape_cast %24 : vector<1x16x16x4xf32> to vector<16x16x4xf32>
    %26 = vector.shape_cast %25 : vector<16x16x4xf32> to vector<256x4xf32>
    %27 = tpu.concatenate %2, %5, %8, %11, %14, %17, %20, %23, %26 in 1 : vector<256x4xf32>, vector<256x4xf32>, vector<256x4xf32>, vector<256x4xf32>, vector<256x4xf32>, vector<256x4xf32>, vector<256x4xf32>, vector<256x4xf32>, vector<256x4xf32> -> vector<256x36xf32>
    %c0_33 = arith.constant 0 : index
    %c0_34 = arith.constant 0 : index
    %28 = vector.load %arg3[%c0_33, %c0_34] : memref<36x4xf32, #tpu.memory_space<vmem>>, vector<36x4xf32>
    %cst = arith.constant dense<0.000000e+00> : vector<256x4xf32>
    %29 = tpu.matmul %27, %28, %cst {dimension_numbers = #tpu.dot_dimension_numbers<[1], [0], [0], [1], [0, 0, 1, 1], [], []>} : vector<256x36xf32>, vector<36x4xf32>, vector<256x4xf32> -> vector<256x4xf32>
    %c0_35 = arith.constant 0 : index
    %c0_36 = arith.constant 0 : index
    %30 = vector.load %arg4[%c0_35, %c0_36] : memref<1x4xf32, #tpu.memory_space<vmem>>, vector<1x4xf32>
    %31 = vector.broadcast %30 : vector<1x4xf32> to vector<256x4xf32>
    %32 = arith.addf %29, %31 : vector<256x4xf32>
    %33 = vector.shape_cast %32 : vector<256x4xf32> to vector<16x16x4xf32>
    %c0_37 = arith.constant 0 : index
    %c0_38 = arith.constant 0 : index
    %c0_39 = arith.constant 0 : index
    %c0_40 = arith.constant 0 : index
    %34 = vector.load %arg5[%c0_37, %c0_38, %c0_39, %c0_40] : memref<1x16x16x4xf32, #tpu.memory_space<vmem>>, vector<1x16x16x4xf32>
    %35 = vector.shape_cast %34 : vector<1x16x16x4xf32> to vector<16x16x4xf32>
    %36 = vector.shape_cast %33 : vector<16x16x4xf32> to vector<1x16x16x4xf32>
    tpu.vector_store %arg5[%c0_37, %c0_38, %c0_39, %c0_40], %36 {strides = array<i32>} : memref<1x16x16x4xf32, #tpu.memory_space<vmem>>, vector<1x16x16x4xf32>,
    %cst_41 = arith.constant dense<0.000000e+00> : vector<4xf32>
    %37 = vector.multi_reduction <add>, %32, %cst_41 [0] : vector<256x4xf32> to vector<4xf32>
    %38 = vector.shape_cast %37 : vector<4xf32> to vector<1x4xf32>
    %c0_42 = arith.constant 0 : index
    %c0_43 = arith.constant 0 : index
    %c0_44 = arith.constant 0 : index
    %39 = vector.load %arg6[%c0_42, %c0_43, %c0_44] : memref<1x1x4xf32, #tpu.memory_space<vmem>>, vector<1x1x4xf32>
    %40 = vector.shape_cast %39 : vector<1x1x4xf32> to vector<1x4xf32>
    %41 = vector.shape_cast %38 : vector<1x4xf32> to vector<1x1x4xf32>
    tpu.vector_store %arg6[%c0_42, %c0_43, %c0_44], %41 {strides = array<i32>} : memref<1x1x4xf32, #tpu.memory_space<vmem>>, vector<1x1x4xf32>,
    %42 = arith.mulf %32, %32 : vector<256x4xf32>
    %cst_45 = arith.constant dense<0.000000e+00> : vector<4xf32>
    %43 = vector.multi_reduction <add>, %42, %cst_45 [0] : vector<256x4xf32> to vector<4xf32>
    %44 = vector.shape_cast %43 : vector<4xf32> to vector<1x4xf32>
    %c0_46 = arith.constant 0 : index
    %c0_47 = arith.constant 0 : index
    %c0_48 = arith.constant 0 : index
    %45 = vector.load %arg7[%c0_46, %c0_47, %c0_48] : memref<1x1x4xf32, #tpu.memory_space<vmem>>, vector<1x1x4xf32>
    %46 = vector.shape_cast %45 : vector<1x1x4xf32> to vector<1x4xf32>
    %47 = vector.shape_cast %44 : vector<1x4xf32> to vector<1x1x4xf32>
    tpu.vector_store %arg7[%c0_46, %c0_47, %c0_48], %47 {strides = array<i32>} : memref<1x1x4xf32, #tpu.memory_space<vmem>>, vector<1x1x4xf32>,
    return
  }
  func.func @transform_0(%arg0: i32, %arg1: i32) -> (i32, i32, i32, i32) {
    %c1_i32 = arith.constant 1 : i32
    %0 = arith.muli %arg0, %c1_i32 : i32
    %1 = arith.addi %0, %arg1 : i32
    %c0_i32 = arith.constant 0 : i32
    %c0_i32_0 = arith.constant 0 : i32
    %c0_i32_1 = arith.constant 0 : i32
    %c0_i32_2 = arith.constant 0 : i32
    return %1, %c0_i32, %c0_i32_0, %c0_i32_1 : i32, i32, i32, i32
  }
  func.func @transform_1(%arg0: i32, %arg1: i32) -> (i32, i32) {
    %c0_i32 = arith.constant 0 : i32
    %c0_i32_0 = arith.constant 0 : i32
    %c0_i32_1 = arith.constant 0 : i32
    return %c0_i32, %c0_i32_0 : i32, i32
  }
  func.func @transform_2(%arg0: i32, %arg1: i32) -> (i32, i32) {
    %c0_i32 = arith.constant 0 : i32
    %c0_i32_0 = arith.constant 0 : i32
    %c0_i32_1 = arith.constant 0 : i32
    return %c0_i32, %c0_i32_0 : i32, i32
  }
  func.func @transform_3(%arg0: i32, %arg1: i32) -> (i32, i32, i32, i32) {
    %c0_i32 = arith.constant 0 : i32
    %c0_i32_0 = arith.constant 0 : i32
    %c0_i32_1 = arith.constant 0 : i32
    return %arg0, %arg1, %c0_i32, %c0_i32_0 : i32, i32, i32, i32
  }
  func.func @transform_4(%arg0: i32, %arg1: i32) -> (i32, i32, i32) {
    %c1_i32 = arith.constant 1 : i32
    %0 = arith.muli %arg0, %c1_i32 : i32
    %1 = arith.addi %0, %arg1 : i32
    %c0_i32 = arith.constant 0 : i32
    %c0_i32_0 = arith.constant 0 : i32
    %c0_i32_1 = arith.constant 0 : i32
    return %1, %c0_i32, %c0_i32_0 : i32, i32, i32
  }
  func.func @transform_5(%arg0: i32, %arg1: i32) -> (i32, i32, i32) {
    %c1_i32 = arith.constant 1 : i32
    %0 = arith.muli %arg0, %c1_i32 : i32
    %1 = arith.addi %0, %arg1 : i32
    %c0_i32 = arith.constant 0 : i32
    %c0_i32_0 = arith.constant 0 : i32
    %c0_i32_1 = arith.constant 0 : i32
    return %1, %c0_i32, %c0_i32_0 : i32, i32, i32
  }
}

module attributes {stable_mosaic.version = 11 : i64} {
  func.func @_bn_prelu_upsample_add_kernel(%arg0: i32, %arg1: i32, %arg2: memref<1x16x16x4xf32, #tpu.memory_space<vmem>>, %arg3: memref<1x4xf32, #tpu.memory_space<vmem>>, %arg4: memref<1x4xf32, #tpu.memory_space<vmem>>, %arg5: memref<1xf32, #tpu.memory_space<smem>>, %arg6: memref<1x32x16x8xf32, #tpu.memory_space<vmem>>, %arg7: memref<1x32x16x8xf32, #tpu.memory_space<vmem>>) attributes {dimension_semantics = [#tpu.dimension_semantics<parallel>, #tpu.dimension_semantics<parallel>], iteration_bounds = array<i64: 2, 1>, scalar_prefetch = 0 : i64, scratch_operands = 0 : i64, tpu.core_type = #tpu.core_type<tc>, window_params = [{transform_indices = @transform_0, window_bounds = array<i64: 1, 16, 16, 4>}, {pipeline_mode = #tpu.pipeline_mode<synchronous>, transform_indices = @transform_1, window_bounds = array<i64: 1, 4>}, {pipeline_mode = #tpu.pipeline_mode<synchronous>, transform_indices = @transform_2, window_bounds = array<i64: 1, 4>}, {transform_indices = @transform_3, window_bounds = array<i64: 1>}, {transform_indices = @transform_4, window_bounds = array<i64: 1, 32, 16, 8>}, {transform_indices = @transform_5, window_bounds = array<i64: 1, 32, 16, 8>}]} {
    %c0 = arith.constant 0 : index
    %c0_0 = arith.constant 0 : index
    %c0_1 = arith.constant 0 : index
    %c0_2 = arith.constant 0 : index
    %0 = vector.load %arg2[%c0, %c0_0, %c0_1, %c0_2] : memref<1x16x16x4xf32, #tpu.memory_space<vmem>>, vector<1x16x16x4xf32>
    %1 = vector.shape_cast %0 : vector<1x16x16x4xf32> to vector<16x16x4xf32>
    %c0_3 = arith.constant 0 : index
    %c0_4 = arith.constant 0 : index
    %2 = vector.load %arg3[%c0_3, %c0_4] : memref<1x4xf32, #tpu.memory_space<vmem>>, vector<1x4xf32>
    %3 = vector.shape_cast %2 : vector<1x4xf32> to vector<1x1x4xf32>
    %4 = vector.broadcast %3 : vector<1x1x4xf32> to vector<16x16x4xf32>
    %5 = arith.mulf %1, %4 : vector<16x16x4xf32>
    %c0_5 = arith.constant 0 : index
    %c0_6 = arith.constant 0 : index
    %6 = vector.load %arg4[%c0_5, %c0_6] : memref<1x4xf32, #tpu.memory_space<vmem>>, vector<1x4xf32>
    %7 = vector.shape_cast %6 : vector<1x4xf32> to vector<1x1x4xf32>
    %8 = vector.broadcast %7 : vector<1x1x4xf32> to vector<16x16x4xf32>
    %9 = arith.addf %5, %8 : vector<16x16x4xf32>
    %c0_7 = arith.constant 0 : index
    %10 = memref.load %arg5[%c0_7] : memref<1xf32, #tpu.memory_space<smem>>
    %cst = arith.constant 0.000000e+00 : f32
    %11 = vector.broadcast %cst : f32 to vector<16x16x4xf32>
    %12 = arith.cmpf oge, %9, %11 : vector<16x16x4xf32>
    %13 = vector.broadcast %10 : f32 to vector<16x16x4xf32>
    %14 = arith.mulf %13, %9 : vector<16x16x4xf32>
    %15 = arith.select %12, %9, %14 : vector<16x16x4xi1>, vector<16x16x4xf32>
    %16 = vector.shape_cast %15 : vector<16x16x4xf32> to vector<16x1x16x4xf32>
    %17 = vector.shape_cast %16 : vector<16x1x16x4xf32> to vector<16x1x16x4xf32>
    %18 = vector.broadcast %17 : vector<16x1x16x4xf32> to vector<16x2x16x4xf32>
    %19 = vector.shape_cast %18 : vector<16x2x16x4xf32> to vector<32x16x4xf32>
    %20 = tpu.concatenate %19, %19 in 2 : vector<32x16x4xf32>, vector<32x16x4xf32> -> vector<32x16x8xf32>
    %c0_8 = arith.constant 0 : index
    %c0_9 = arith.constant 0 : index
    %c0_10 = arith.constant 0 : index
    %c0_11 = arith.constant 0 : index
    %21 = vector.load %arg6[%c0_8, %c0_9, %c0_10, %c0_11] : memref<1x32x16x8xf32, #tpu.memory_space<vmem>>, vector<1x32x16x8xf32>
    %22 = vector.shape_cast %21 : vector<1x32x16x8xf32> to vector<32x16x8xf32>
    %23 = arith.addf %20, %22 : vector<32x16x8xf32>
    %c0_12 = arith.constant 0 : index
    %c0_13 = arith.constant 0 : index
    %c0_14 = arith.constant 0 : index
    %c0_15 = arith.constant 0 : index
    %24 = vector.load %arg7[%c0_12, %c0_13, %c0_14, %c0_15] : memref<1x32x16x8xf32, #tpu.memory_space<vmem>>, vector<1x32x16x8xf32>
    %25 = vector.shape_cast %24 : vector<1x32x16x8xf32> to vector<32x16x8xf32>
    %26 = vector.shape_cast %23 : vector<32x16x8xf32> to vector<1x32x16x8xf32>
    tpu.vector_store %arg7[%c0_12, %c0_13, %c0_14, %c0_15], %26 {strides = array<i32>} : memref<1x32x16x8xf32, #tpu.memory_space<vmem>>, vector<1x32x16x8xf32>,
    return
  }
  func.func @transform_0(%arg0: i32, %arg1: i32) -> (i32, i32, i32, i32) {
    %c0_i32 = arith.constant 0 : i32
    %c0_i32_0 = arith.constant 0 : i32
    %c0_i32_1 = arith.constant 0 : i32
    return %arg0, %arg1, %c0_i32, %c0_i32_0 : i32, i32, i32, i32
  }
  func.func @transform_1(%arg0: i32, %arg1: i32) -> (i32, i32) {
    %c0_i32 = arith.constant 0 : i32
    %c0_i32_0 = arith.constant 0 : i32
    %c0_i32_1 = arith.constant 0 : i32
    return %c0_i32, %c0_i32_0 : i32, i32
  }
  func.func @transform_2(%arg0: i32, %arg1: i32) -> (i32, i32) {
    %c0_i32 = arith.constant 0 : i32
    %c0_i32_0 = arith.constant 0 : i32
    %c0_i32_1 = arith.constant 0 : i32
    return %c0_i32, %c0_i32_0 : i32, i32
  }
  func.func @transform_3(%arg0: i32, %arg1: i32) -> i32 {
    %c0_i32 = arith.constant 0 : i32
    %c0_i32_0 = arith.constant 0 : i32
    return %c0_i32 : i32
  }
  func.func @transform_4(%arg0: i32, %arg1: i32) -> (i32, i32, i32, i32) {
    %c0_i32 = arith.constant 0 : i32
    %c0_i32_0 = arith.constant 0 : i32
    %c0_i32_1 = arith.constant 0 : i32
    return %arg0, %arg1, %c0_i32, %c0_i32_0 : i32, i32, i32, i32
  }
  func.func @transform_5(%arg0: i32, %arg1: i32) -> (i32, i32, i32, i32) {
    %c0_i32 = arith.constant 0 : i32
    %c0_i32_0 = arith.constant 0 : i32
    %c0_i32_1 = arith.constant 0 : i32
    return %arg0, %arg1, %c0_i32, %c0_i32_0 : i32, i32, i32, i32
  }
}

</mosaic_0001>

<llo_original>
// kernel: decoder_forward.8
$region0: #{decoder_forward.8}
  #allocation0 [shape = 'u32[]', space=smem, size = 0x4, offset = 0x4, fixed_abs, tag = 'smem constant byte address 0x4 - core index']
  #allocation1 [shape = 'u32[144,128]{1,0:T(1,128)}', space=vmem, size = 0x12000, scoped, tag = 'internal scratch']
  #allocation2 [shape = 'f32[1]{0:T(128)S(6)}', space=smem, size = 0x200, scoped, tag = 'scoped memory for decoder_forward.8']
  %s0 = inlined_call_operand.vmem [shape: f32[2,8,8,4], index: 0, kind: input, shape index: {}]
  %s1 = inlined_call_operand.vmem [shape: f32[1,4], index: 1, kind: input, shape index: {}]
  %s2 = inlined_call_operand.vmem [shape: f32[1,4], index: 2, kind: input, shape index: {}]
  %s3 = inlined_call_operand.<no memory space> [shape: f32[1], index: 3, kind: input, shape index: {}]
  %s4 = inlined_call_operand.vmem [shape: f32[2,16,8,8], index: 4, kind: input, shape index: {}]
  %s5 = inlined_call_operand.vmem [shape: f32[2,16,8,8], index: 5, kind: output, shape index: {}]
  %s6 = sld [smem:[#allocation0]]
  $region53: #{decoder_forward.8} parent=0
    _
  %s8 = ssub.s32 1, %s6
  %s9 = scalar_select 0, %s8, %s6
  %10 = sst [smem:[#allocation2]] %s3
  loop: start=0, step=1, limit=4
  $region2: #{decoder_forward.8} parent=0 // loop_pre_header
    _
  $region3: #{decoder_forward.8} parent=0 // loop_header
    %s12 = sphi 0, %s16
    %p13 = scmp.ge.s32.totalorder %s12, 4
    %s19 = sphi 0, %s31
    %s20 = sphi 0, %s27
    %s21 = sphi 0, %s19
    %s22 = sphi 0, %s20
    %s23 = sphi 0, %s21
    %s24 = sphi 0, %s22
    %s36 = sphi 0, %s38
    %s39 = sphi 0, %s36
    %s40 = sphi 0, %s39
    %s56 = sphi 0, %s40
    %s60 = sphi 0, %s60
    %s62 = sphi 0, %s60
    %s63 = sphi 0, %s62
    %s77 = sphi 0, %s63
    %s81 = sphi 0, %s81
    %s83 = sphi 0, %s81
    %s84 = sphi 0, %s83
    %s98 = sphi 0, %s84
    %s102 = sphi 0, %s102
    %s104 = sphi 0, %s102
    %s105 = sphi 0, %s104
    %s119 = sphi 0, %s105
    %s127 = sphi 0, %s129
    %s130 = sphi 0, %s127
    %s131 = sphi 0, %s130
    %s147 = sphi 0, %s131
    %s155 = sphi 0, %s157
    %s158 = sphi 0, %s155
    %s159 = sphi 0, %s158
    %s175 = sphi 0, %s159
  $region4: #{decoder_forward.8} parent=0 // loop_header_branch
    %15 = sbr.rel (%p13) target = $region8
  $region5: #{decoder_forward.8} parent=0 // loop_body
    %s17 = ssub.s32 %s12, 1
    %s18 = ssub.s32 %s12, 2
    %s25 = sadd.s32 1, %s20
    %p26 = scmp.ge.s32.totalorder %s25, 1
    %s27 = scalar_select %p26, 0, %s25
    %s28 = sadd.s32 1, %s19
    %s29 = scalar_select %p26, %s28, %s19
    %p30 = scmp.ge.s32.totalorder %s29, 2
    %s31 = scalar_select %p30, 0, %s29
    %s32 = ssub.s32 %s19, %s31
    %s33 = ssub.s32 %s20, %s27
    %s34 = sor.u32 %s32, %s33
    %p35 = scmp.eq.s32.totalorder %s34, 0
    %s37 = sadd.s32 %s36, 1
    %s38 = scalar_select %p35, %s36, %s37
    %p41 = pneg %p35
    %p42 = scmp.eq.s32.totalorder %s12, 1
    %p43 = por %p41, %p42
    %p44 = scmp.ne.s32.totalorder %s36, %s39
    %p45 = scmp.eq.s32.totalorder %s12, 0
    %p46 = por %p44, %p45
    %p47 = scmp.ne.s32.totalorder %s36, %s39
    %p48 = scmp.eq.s32.totalorder %s17, 1
    %p49 = por %p47, %p48
    %p50 = scmp.ne.s32.totalorder %s39, %s40
    %p51 = scmp.eq.s32.totalorder %s17, 0
    %p52 = por %p50, %p51
    %p53 = scmp.ne.s32.totalorder %s39, %s40
    %p54 = scmp.eq.s32.totalorder %s18, 1
    %p55 = por %p53, %p54
    %p57 = scmp.ne.s32.totalorder %s40, %s56
    %p58 = scmp.eq.s32.totalorder %s18, 0
    %p59 = por %p57, %p58
    %s61 = sadd.s32 %s60, 1
    %p64 = scmp.eq.s32.totalorder %s12, 1
    %p65 = scmp.ne.s32.totalorder %s60, %s62
    %p66 = scmp.eq.s32.totalorder %s12, 0
    %p67 = por %p65, %p66
    %p68 = scmp.ne.s32.totalorder %s60, %s62
    %p69 = scmp.eq.s32.totalorder %s17, 1
    %p70 = por %p68, %p69
    %p71 = scmp.ne.s32.totalorder %s62, %s63
    %p72 = scmp.eq.s32.totalorder %s17, 0
    %p73 = por %p71, %p72
    %p74 = scmp.ne.s32.totalorder %s62, %s63
    %p75 = scmp.eq.s32.totalorder %s18, 1
    %p76 = por %p74, %p75
    %p78 = scmp.ne.s32.totalorder %s63, %s77
    %p79 = scmp.eq.s32.totalorder %s18, 0
    %p80 = por %p78, %p79
    %s82 = sadd.s32 %s81, 1
    %p85 = scmp.eq.s32.totalorder %s12, 1
    %p86 = scmp.ne.s32.totalorder %s81, %s83
    %p87 = scmp.eq.s32.totalorder %s12, 0
    %p88 = por %p86, %p87
    %p89 = scmp.ne.s32.totalorder %s81, %s83
    %p90 = scmp.eq.s32.totalorder %s17, 1
    %p91 = por %p89, %p90
    %p92 = scmp.ne.s32.totalorder %s83, %s84
    %p93 = scmp.eq.s32.totalorder %s17, 0
    %p94 = por %p92, %p93
    %p95 = scmp.ne.s32.totalorder %s83, %s84
    %p96 = scmp.eq.s32.totalorder %s18, 1
    %p97 = por %p95, %p96
    %p99 = scmp.ne.s32.totalorder %s84, %s98
    %p100 = scmp.eq.s32.totalorder %s18, 0
    %p101 = por %p99, %p100
    %s103 = sadd.s32 %s102, 1
    %p106 = scmp.eq.s32.totalorder %s12, 1
    %p107 = scmp.ne.s32.totalorder %s102, %s104
    %p108 = scmp.eq.s32.totalorder %s12, 0
    %p109 = por %p107, %p108
    %p110 = scmp.ne.s32.totalorder %s102, %s104
    %p111 = scmp.eq.s32.totalorder %s17, 1
    %p112 = por %p110, %p111
    %p113 = scmp.ne.s32.totalorder %s104, %s105
    %p114 = scmp.eq.s32.totalorder %s17, 0
    %p115 = por %p113, %p114
    %p116 = scmp.ne.s32.totalorder %s104, %s105
    %p117 = scmp.eq.s32.totalorder %s18, 1
    %p118 = por %p116, %p117
    %p120 = scmp.ne.s32.totalorder %s105, %s119
    %p121 = scmp.eq.s32.totalorder %s18, 0
    %p122 = por %p120, %p121
    %s123 = ssub.s32 %s19, %s31
    %s124 = ssub.s32 %s20, %s27
    %s125 = sor.u32 %s123, %s124
    %p126 = scmp.eq.s32.totalorder %s125, 0
    %s128 = sadd.s32 %s127, 1
    %s129 = scalar_select %p126, %s127, %s128
    %p132 = pneg %p126
    %p133 = scmp.eq.s32.totalorder %s12, 1
    %p134 = por %p132, %p133
    %p135 = scmp.ne.s32.totalorder %s127, %s130
    %p136 = scmp.eq.s32.totalorder %s12, 0
    %p137 = por %p135, %p136
    %p138 = scmp.ne.s32.totalorder %s127, %s130
    %p139 = scmp.eq.s32.totalorder %s17, 1
    %p140 = por %p138, %p139
    %p141 = scmp.ne.s32.totalorder %s130, %s131
    %p142 = scmp.eq.s32.totalorder %s17, 0
    %p143 = por %p141, %p142
    %p144 = scmp.ne.s32.totalorder %s130, %s131
    %p145 = scmp.eq.s32.totalorder %s18, 1
    %p146 = por %p144, %p145
    %p148 = scmp.ne.s32.totalorder %s131, %s147
    %p149 = scmp.eq.s32.totalorder %s18, 0
    %p150 = por %p148, %p149
    %s151 = ssub.s32 %s19, %s31
    %s152 = ssub.s32 %s20, %s27
    %s153 = sor.u32 %s151, %s152
    %p154 = scmp.eq.s32.totalorder %s153, 0
    %s156 = sadd.s32 %s155, 1
    %s157 = scalar_select %p154, %s155, %s156
    %p160 = pneg %p154
    %p161 = scmp.eq.s32.totalorder %s12, 1
    %p162 = por %p160, %p161
    %p163 = scmp.ne.s32.totalorder %s155, %s158
    %p164 = scmp.eq.s32.totalorder %s12, 0
    %p165 = por %p163, %p164
    %p166 = scmp.ne.s32.totalorder %s155, %s158
    %p167 = scmp.eq.s32.totalorder %s17, 1
    %p168 = por %p166, %p167
    %p169 = scmp.ne.s32.totalorder %s158, %s159
    %p170 = scmp.eq.s32.totalorder %s17, 0
    %p171 = por %p169, %p170
    %p172 = scmp.ne.s32.totalorder %s158, %s159
    %p173 = scmp.eq.s32.totalorder %s18, 1
    %p174 = por %p172, %p173
    %p176 = scmp.ne.s32.totalorder %s159, %s175
    %p177 = scmp.eq.s32.totalorder %s18, 0
    %p178 = por %p176, %p177
    %p179 = scmp.le.s32.totalorder 1, %s12
    %p180 = scmp.lt.s32.totalorder %s12, 3
    %p181 = pnand %p179, %p180
    %p182 = pneg %p181
    // Predicated region
    $region9: #{decoder_forward.8} parent=5 // pred_check
      _
    $region10: #{decoder_forward.8} parent=5 // pred_check_branch
      %184 = sbr.rel (%p181) target = $region12
    $region11: #{decoder_forward.8} parent=5 // pred_region
      %s185 = ssub.s32 %s12, 1
      // Predicated region
      $region13: #{decoder_forward.8} parent=11 // pred_check
        %p186 = pneg %p73
      $region14: #{decoder_forward.8} parent=11 // pred_check_branch
        %188 = sbr.rel (%p186) target = $region16
      $region15: #{decoder_forward.8} parent=11 // pred_region
        _
      $region16: #{decoder_forward.8} parent=11 // pred_fallthru
        _
      // Predicated region
      $region17: #{decoder_forward.8} parent=11 // pred_check
        %p189 = pneg %p94
      $region18: #{decoder_forward.8} parent=11 // pred_check_branch
        %191 = sbr.rel (%p189) target = $region20
      $region19: #{decoder_forward.8} parent=11 // pred_region
        _
      $region20: #{decoder_forward.8} parent=11 // pred_fallthru
        _
      // Predicated region
      $region21: #{decoder_forward.8} parent=11 // pred_check
        %p192 = pneg %p115
      $region22: #{decoder_forward.8} parent=11 // pred_check_branch
        %194 = sbr.rel (%p192) target = $region24
      $region23: #{decoder_forward.8} parent=11 // pred_region
        _
      $region24: #{decoder_forward.8} parent=11 // pred_fallthru
        _
    $region12: #{decoder_forward.8} parent=5 // pred_fallthru
      _
    %p195 = scmp.lt.s32.totalorder %s12, 2
    // Predicated region
    $region25: #{decoder_forward.8} parent=5 // pred_check
      %p196 = pneg %p195
    $region26: #{decoder_forward.8} parent=5 // pred_check_branch
      %198 = sbr.rel (%p196) target = $region28
    $region27: #{decoder_forward.8} parent=5 // pred_region
      // Predicated region
      $region29: #{decoder_forward.8} parent=27 // pred_check
        %p199 = pneg %p46
      $region30: #{decoder_forward.8} parent=27 // pred_check_branch
        %201 = sbr.rel (%p199) target = $region32
      $region31: #{decoder_forward.8} parent=27 // pred_region
        %s202 = smul.u32 8, %s20
        %p203 = scmp.lt.s32.totalorder %s19, 1
        %s204 = scalar_select %p203, %s19, 1
        %p205 = scmp.lt.s32.totalorder %s202, 7
        %s206 = scalar_select %p205, %s202, 7
        %s207 = smul.addr %s204, 8
        %s208 = sadd.s32 %s206, %s207
        %s209 = smul.addr %s208, 8
        %s210 = scalar_lea.vmem %s0, %s209
        %s211 = smul.u32 8, %s20
      $region32: #{decoder_forward.8} parent=27 // pred_fallthru
        _
      // Predicated region
      $region33: #{decoder_forward.8} parent=27 // pred_check
        %p212 = pneg %p137
      $region34: #{decoder_forward.8} parent=27 // pred_check_branch
        %214 = sbr.rel (%p212) target = $region36
      $region35: #{decoder_forward.8} parent=27 // pred_region
        %s215 = smul.u32 16, %s20
        %p216 = scmp.lt.s32.totalorder %s19, 1
        %s217 = scalar_select %p216, %s19, 1
        %p218 = scmp.lt.s32.totalorder %s215, 15
        %s219 = scalar_select %p218, %s215, 15
        %s220 = smul.addr %s217, 16
        %s221 = sadd.s32 %s219, %s220
        %s222 = smul.addr %s221, 8
        %s223 = scalar_lea.vmem %s4, %s222
        %s224 = smul.u32 16, %s20
      $region36: #{decoder_forward.8} parent=27 // pred_fallthru
        _
    $region28: #{decoder_forward.8} parent=5 // pred_fallthru
      _
    %p225 = scmp.le.s32.totalorder 1, %s12
    %p226 = scmp.lt.s32.totalorder %s12, 3
    %p227 = pnand %p225, %p226
    %p228 = pneg %p227
    // Predicated region
    $region37: #{decoder_forward.8} parent=5 // pred_check
      _
    $region38: #{decoder_forward.8} parent=5 // pred_check_branch
      %230 = sbr.rel (%p227) target = $region40
    $region39: #{decoder_forward.8} parent=5 // pred_region
      %s231 = ssub.s32 %s12, 1
      %s232 = smul.u32 8, %s22
      %p233 = scmp.lt.s32.totalorder %s21, 1
      %s234 = scalar_select %p233, %s21, 1
      %p235 = scmp.lt.s32.totalorder %s232, 7
      %s236 = scalar_select %p235, %s232, 7
      %s237 = smul.addr %s234, 8
      %s238 = sadd.s32 %s236, %s237
      %s239 = smul.addr %s238, 8
      %s240 = scalar_lea.vmem %s0, %s239
      %p241 = pneg %p52
      %p242 = pneg %p49
      %p243 = pneg %p73
      %p244 = pneg %p70
      %p245 = pneg %p94
      %p246 = pneg %p91
      %p247 = pneg %p115
      %p248 = pneg %p112
      %s249 = smul.u32 16, %s22
      %p250 = scmp.lt.s32.totalorder %s21, 1
      %s251 = scalar_select %p250, %s21, 1
      %p252 = scmp.lt.s32.totalorder %s249, 15
      %s253 = scalar_select %p252, %s249, 15
      %s254 = smul.addr %s251, 16
      %s255 = sadd.s32 %s253, %s254
      %s256 = smul.addr %s255, 8
      %s257 = scalar_lea.vmem %s4, %s256
      %p258 = pneg %p143
      %p259 = pneg %p140
      %p260 = pneg %p171
      %p261 = pneg %p168
      %s262 = smul.u32 16, %s22
      %p263 = scmp.lt.s32.totalorder %s21, 1
      %s264 = scalar_select %p263, %s21, 1
      %p265 = scmp.lt.s32.totalorder %s262, 15
      %s266 = scalar_select %p265, %s262, 15
      %s267 = smul.addr %s264, 16
      %s268 = sadd.s32 %s266, %s267
      %s269 = smul.addr %s268, 8
      %s270 = scalar_lea.vmem %s5, %s269
      %s271 = smul.u32 8, %s22
      %p272 = scmp.lt.s32.totalorder %s21, 1
      %s273 = scalar_select %p272, %s21, 1
      %p274 = scmp.lt.s32.totalorder %s271, 7
      %s275 = scalar_select %p274, %s271, 7
      %s276 = smul.addr %s273, 8
      %s277 = sadd.s32 %s275, %s276
      %s278 = smul.addr %s277, 8
      %s279 = scalar_lea.vmem %s0, %s278
      %s280 = smul.u32 8, %s22
      %s281 = smul.u32 16, %s22
      %p282 = scmp.lt.s32.totalorder %s21, 1
      %s283 = scalar_select %p282, %s21, 1
      %p284 = scmp.lt.s32.totalorder %s281, 15
      %s285 = scalar_select %p284, %s281, 15
      %s286 = smul.addr %s283, 16
      %s287 = sadd.s32 %s285, %s286
      %s288 = smul.addr %s287, 8
      %s289 = scalar_lea.vmem %s4, %s288
      %s290 = smul.u32 16, %s22
      %s291 = smul.u32 16, %s22
      %p292 = scmp.lt.s32.totalorder %s21, 1
      %s293 = scalar_select %p292, %s21, 1
      %p294 = scmp.lt.s32.totalorder %s291, 15
      %s295 = scalar_select %p294, %s291, 15
      %s296 = smul.addr %s293, 16
      %s297 = sadd.s32 %s295, %s296
      %s298 = smul.addr %s297, 8
      %s299 = scalar_lea.vmem %s5, %s298
      %s300 = smul.u32 16, %s22
      %v301 = vld [vmem:[%s279] sm:$0xff]
      %v302 = vld [vmem:[%s279 + $0x8] sm:$0xff]
      %v303 = vld [vmem:[%s279 + $0x10] sm:$0xff]
      %v304 = vld [vmem:[%s279 + $0x18] sm:$0xff]
      %v305 = vld [vmem:[%s279 + $0x20] sm:$0xff]
      %v306 = vld [vmem:[%s279 + $0x28] sm:$0xff]
      %v307 = vld [vmem:[%s279 + $0x30] sm:$0xff]
      %v308 = vld [vmem:[%s279 + $0x38] sm:$0xff]
      %v309 = vld [vmem:[%s1] sm:$0x1]
      %v311 = vlaneseq
      %v312 = vshrl.u32 %v311, 7
      %v313 = vsub.s32 0, %v312
      %v314 = vrot.slane %v309, %v313
      %v316 = vmul.f32 %v301, %v314
      %v317 = vmul.f32 %v302, %v314
      %v318 = vmul.f32 %v303, %v314
      %v319 = vmul.f32 %v304, %v314
      %v320 = vmul.f32 %v305, %v314
      %v321 = vmul.f32 %v306, %v314
      %v322 = vmul.f32 %v307, %v314
      %v323 = vmul.f32 %v308, %v314
      %v324 = vld [vmem:[%s2] sm:$0x1]
      %v326 = vlaneseq
      %v327 = vshrl.u32 %v326, 7
      %v328 = vsub.s32 0, %v327
      %v329 = vrot.slane %v324, %v328
      %v331 = vadd.f32 %v316, %v329
      %v332 = vadd.f32 %v317, %v329
      %v333 = vadd.f32 %v318, %v329
      %v334 = vadd.f32 %v319, %v329
      %v335 = vadd.f32 %v320, %v329
      %v336 = vadd.f32 %v321, %v329
      %v337 = vadd.f32 %v322, %v329
      %v338 = vadd.f32 %v323, %v329
      %s339 = sld [smem:[#allocation2]]
      %vm340 = vcmp.ge.f32.partialorder %v331, 0.0
      %vm341 = vcmp.ge.f32.partialorder %v332, 0.0
      %vm342 = vcmp.ge.f32.partialorder %v333, 0.0
      %vm343 = vcmp.ge.f32.partialorder %v334, 0.0
      %vm344 = vcmp.ge.f32.partialorder %v335, 0.0
      %vm345 = vcmp.ge.f32.partialorder %v336, 0.0
      %vm346 = vcmp.ge.f32.partialorder %v337, 0.0
      %vm347 = vcmp.ge.f32.partialorder %v338, 0.0
      %v348 = vstv %s339
      %v349 = vmul.f32 %v348, %v331
      %v350 = vmul.f32 %v348, %v332
      %v351 = vmul.f32 %v348, %v333
      %v352 = vmul.f32 %v348, %v334
      %v353 = vmul.f32 %v348, %v335
      %v354 = vmul.f32 %v348, %v336
      %v355 = vmul.f32 %v348, %v337
      %v356 = vmul.f32 %v348, %v338
      %v357 = vsel %vm340, %v331, %v349
      %v358 = vsel %vm341, %v332, %v350
      %v359 = vsel %vm342, %v333, %v351
      %v360 = vsel %vm343, %v334, %v352
      %v361 = vsel %vm344, %v335, %v353
      %v362 = vsel %vm345, %v336, %v354
      %v363 = vsel %vm346, %v337, %v355
      %v364 = vsel %vm347, %v338, %v356
      %373 = vrot.lane.b32.xlu0 %v357, 4
      %v374 = vpop.permute.xlu0 %373
      %375 = vrot.lane.b32.xlu0 %v358, 4
      %v376 = vpop.permute.xlu0 %375
      %377 = vrot.lane.b32.xlu0 %v359, 4
      %v378 = vpop.permute.xlu0 %377
      %379 = vrot.lane.b32.xlu0 %v360, 4
      %v380 = vpop.permute.xlu0 %379
      %381 = vrot.lane.b32.xlu0 %v361, 4
      %v382 = vpop.permute.xlu0 %381
      %383 = vrot.lane.b32.xlu0 %v362, 4
      %v384 = vpop.permute.xlu0 %383
      %385 = vrot.lane.b32.xlu0 %v363, 4
      %v386 = vpop.permute.xlu0 %385
      %387 = vrot.lane.b32.xlu0 %v364, 4
      %v388 = vpop.permute.xlu0 %387
      %vm397 = vcmask 31744
      %v398 = vsel %vm397, %v357, %v374
      %v399 = vsel %vm397, %v358, %v376
      %v400 = vsel %vm397, %v359, %v378
      %v401 = vsel %vm397, %v360, %v380
      %v402 = vsel %vm397, %v361, %v382
      %v403 = vsel %vm397, %v362, %v384
      %v404 = vsel %vm397, %v363, %v386
      %v405 = vsel %vm397, %v364, %v388
      %v406 = vld [vmem:[%s289] sm:$0xff]
      %v407 = vld [vmem:[%s289 + $0x8] sm:$0xff]
      %v408 = vld [vmem:[%s289 + $0x10] sm:$0xff]
      %v409 = vld [vmem:[%s289 + $0x18] sm:$0xff]
      %v410 = vld [vmem:[%s289 + $0x20] sm:$0xff]
      %v411 = vld [vmem:[%s289 + $0x28] sm:$0xff]
      %v412 = vld [vmem:[%s289 + $0x30] sm:$0xff]
      %v413 = vld [vmem:[%s289 + $0x38] sm:$0xff]
      %v414 = vld [vmem:[%s289 + $0x40] sm:$0xff]
      %v415 = vld [vmem:[%s289 + $0x48] sm:$0xff]
      %v416 = vld [vmem:[%s289 + $0x50] sm:$0xff]
      %v417 = vld [vmem:[%s289 + $0x58] sm:$0xff]
      %v418 = vld [vmem:[%s289 + $0x60] sm:$0xff]
      %v419 = vld [vmem:[%s289 + $0x68] sm:$0xff]
      %v420 = vld [vmem:[%s289 + $0x70] sm:$0xff]
      %v421 = vld [vmem:[%s289 + $0x78] sm:$0xff]
      %v422 = vadd.f32 %v398, %v406
      %v423 = vadd.f32 %v398, %v407
      %v424 = vadd.f32 %v399, %v408
      %v425 = vadd.f32 %v399, %v409
      %v426 = vadd.f32 %v400, %v410
      %v427 = vadd.f32 %v400, %v411
      %v428 = vadd.f32 %v401, %v412
      %v429 = vadd.f32 %v401, %v413
      %v430 = vadd.f32 %v402, %v414
      %v431 = vadd.f32 %v402, %v415
      %v432 = vadd.f32 %v403, %v416
      %v433 = vadd.f32 %v403, %v417
      %v434 = vadd.f32 %v404, %v418
      %v435 = vadd.f32 %v404, %v419
      %v436 = vadd.f32 %v405, %v420
      %v437 = vadd.f32 %v405, %v421
      %vm438 = vcmask 64512
      %439 = vst.msk [vmem:[%s299] sm:$0xff] %vm438, %v422
      %440 = vst.msk [vmem:[%s299 + $0x8] sm:$0xff] %vm438, %v423
      %441 = vst.msk [vmem:[%s299 + $0x10] sm:$0xff] %vm438, %v424
      %442 = vst.msk [vmem:[%s299 + $0x18] sm:$0xff] %vm438, %v425
      %443 = vst.msk [vmem:[%s299 + $0x20] sm:$0xff] %vm438, %v426
      %444 = vst.msk [vmem:[%s299 + $0x28] sm:$0xff] %vm438, %v427
      %445 = vst.msk [vmem:[%s299 + $0x30] sm:$0xff] %vm438, %v428
      %446 = vst.msk [vmem:[%s299 + $0x38] sm:$0xff] %vm438, %v429
      %447 = vst.msk [vmem:[%s299 + $0x40] sm:$0xff] %vm438, %v430
      %448 = vst.msk [vmem:[%s299 + $0x48] sm:$0xff] %vm438, %v431
      %449 = vst.msk [vmem:[%s299 + $0x50] sm:$0xff] %vm438, %v432
      %450 = vst.msk [vmem:[%s299 + $0x58] sm:$0xff] %vm438, %v433
      %451 = vst.msk [vmem:[%s299 + $0x60] sm:$0xff] %vm438, %v434
      %452 = vst.msk [vmem:[%s299 + $0x68] sm:$0xff] %vm438, %v435
      %453 = vst.msk [vmem:[%s299 + $0x70] sm:$0xff] %vm438, %v436
      %454 = vst.msk [vmem:[%s299 + $0x78] sm:$0xff] %vm438, %v437
      %s455 = smul.u32 16, %s22
      %p456 = scmp.lt.s32.totalorder %s21, 1
      %s457 = scalar_select %p456, %s21, 1
      %p458 = scmp.lt.s32.totalorder %s455, 15
      %s459 = scalar_select %p458, %s455, 15
      %s460 = smul.addr %s457, 16
      %s461 = sadd.s32 %s459, %s460
      %s462 = smul.addr %s461, 8
      %s463 = scalar_lea.vmem %s5, %s462
      // Predicated region
      $region41: #{decoder_forward.8} parent=39 // pred_check
        %p464 = pneg %p168
      $region42: #{decoder_forward.8} parent=39 // pred_check_branch
        %466 = sbr.rel (%p464) target = $region44
      $region43: #{decoder_forward.8} parent=39 // pred_region
        %s467 = smul.u32 16, %s22
      $region44: #{decoder_forward.8} parent=39 // pred_fallthru
        _
    $region40: #{decoder_forward.8} parent=5 // pred_fallthru
      _
    %p468 = scmp.le.s32.totalorder 2, %s12
    // Predicated region
    $region45: #{decoder_forward.8} parent=5 // pred_check
      %p469 = pneg %p468
    $region46: #{decoder_forward.8} parent=5 // pred_check_branch
      %471 = sbr.rel (%p469) target = $region48
    $region47: #{decoder_forward.8} parent=5 // pred_region
      %s472 = ssub.s32 %s12, 2
      // Predicated region
      $region49: #{decoder_forward.8} parent=47 // pred_check
        %p473 = pneg %p174
      $region50: #{decoder_forward.8} parent=47 // pred_check_branch
        %475 = sbr.rel (%p473) target = $region52
      $region51: #{decoder_forward.8} parent=47 // pred_region
        %s476 = smul.u32 16, %s24
        %p477 = scmp.lt.s32.totalorder %s23, 1
        %s478 = scalar_select %p477, %s23, 1
        %p479 = scmp.lt.s32.totalorder %s476, 15
        %s480 = scalar_select %p479, %s476, 15
        %s481 = smul.addr %s478, 16
        %s482 = sadd.s32 %s480, %s481
        %s483 = smul.addr %s482, 8
        %s484 = scalar_lea.vmem %s5, %s483
      $region52: #{decoder_forward.8} parent=47 // pred_fallthru
        _
    $region48: #{decoder_forward.8} parent=5 // pred_fallthru
      _
  $region6: #{decoder_forward.8} parent=0 // loop_footer
    %s16 = sadd.s32 1, %s12
  $region7: #{decoder_forward.8} parent=0 // loop_footer_branch
    %11 = sbr.rel target = $region3
  $region8: #{decoder_forward.8} parent=0 // loop_exit
    _

// kernel: decoder_forward.6
$region0: #{decoder_forward.6}
  #allocation0 [shape = 'u32[]', space=smem, size = 0x4, offset = 0x4, fixed_abs, tag = 'smem constant byte address 0x4 - core index']
  #allocation1 [shape = 'u32[144,128]{1,0:T(1,128)}', space=vmem, size = 0x12000, scoped, tag = 'internal scratch']
  %s0 = inlined_call_operand.vmem [shape: f32[2,10,10,8], index: 0, kind: input, shape index: {}]
  %s1 = inlined_call_operand.vmem [shape: f32[72,4], index: 1, kind: input, shape index: {}]
  %s2 = inlined_call_operand.vmem [shape: f32[1,4], index: 2, kind: input, shape index: {}]
  %s3 = inlined_call_operand.vmem [shape: f32[2,8,8,4], index: 3, kind: output, shape index: {0}]
  %s4 = inlined_call_operand.vmem [shape: f32[2,1,4], index: 4, kind: output, shape index: {1}]
  %s5 = inlined_call_operand.vmem [shape: f32[2,1,4], index: 5, kind: output, shape index: {2}]
  %6 = xla_tuple %s3, %s4, %s5
  %s7 = sld [smem:[#allocation0]]
  $region61: #{decoder_forward.6} parent=0
    _
  %s9 = ssub.s32 1, %s7
  %s10 = scalar_select 0, %s9, %s7
  loop: start=0, step=1, limit=4
  $region2: #{decoder_forward.6} parent=0 // loop_pre_header
    _
  $region3: #{decoder_forward.6} parent=0 // loop_header
    %s12 = sphi 0, %s16
    %p13 = scmp.ge.s32.totalorder %s12, 4
    %s19 = sphi 0, %s31
    %s20 = sphi 0, %s27
    %s21 = sphi 0, %s19
    %s22 = sphi 0, %s20
    %s23 = sphi 0, %s21
    %s24 = sphi 0, %s22
    %s36 = sphi 0, %s38
    %s39 = sphi 0, %s36
    %s40 = sphi 0, %s39
    %s56 = sphi 0, %s40
    %s60 = sphi 0, %s60
    %s62 = sphi 0, %s60
    %s63 = sphi 0, %s62
    %s77 = sphi 0, %s63
    %s81 = sphi 0, %s81
    %s83 = sphi 0, %s81
    %s84 = sphi 0, %s83
    %s98 = sphi 0, %s84
    %s106 = sphi 0, %s108
    %s109 = sphi 0, %s106
    %s110 = sphi 0, %s109
    %s126 = sphi 0, %s110
    %s134 = sphi 0, %s136
    %s137 = sphi 0, %s134
    %s138 = sphi 0, %s137
    %s154 = sphi 0, %s138
    %s162 = sphi 0, %s164
    %s165 = sphi 0, %s162
    %s166 = sphi 0, %s165
    %s182 = sphi 0, %s166
  $region4: #{decoder_forward.6} parent=0 // loop_header_branch
    %15 = sbr.rel (%p13) target = $region8
  $region5: #{decoder_forward.6} parent=0 // loop_body
    %s17 = ssub.s32 %s12, 1
    %s18 = ssub.s32 %s12, 2
    %s25 = sadd.s32 1, %s20
    %p26 = scmp.ge.s32.totalorder %s25, 1
    %s27 = scalar_select %p26, 0, %s25
    %s28 = sadd.s32 1, %s19
    %s29 = scalar_select %p26, %s28, %s19
    %p30 = scmp.ge.s32.totalorder %s29, 2
    %s31 = scalar_select %p30, 0, %s29
    %s32 = sadd.s32 %s19, %s20
    %s33 = sadd.s32 %s31, %s27
    %s34 = ssub.s32 %s32, %s33
    %p35 = scmp.eq.s32.totalorder %s34, 0
    %s37 = sadd.s32 %s36, 1
    %s38 = scalar_select %p35, %s36, %s37
    %p41 = pneg %p35
    %p42 = scmp.eq.s32.totalorder %s12, 1
    %p43 = por %p41, %p42
    %p44 = scmp.ne.s32.totalorder %s36, %s39
    %p45 = scmp.eq.s32.totalorder %s12, 0
    %p46 = por %p44, %p45
    %p47 = scmp.ne.s32.totalorder %s36, %s39
    %p48 = scmp.eq.s32.totalorder %s17, 1
    %p49 = por %p47, %p48
    %p50 = scmp.ne.s32.totalorder %s39, %s40
    %p51 = scmp.eq.s32.totalorder %s17, 0
    %p52 = por %p50, %p51
    %p53 = scmp.ne.s32.totalorder %s39, %s40
    %p54 = scmp.eq.s32.totalorder %s18, 1
    %p55 = por %p53, %p54
    %p57 = scmp.ne.s32.totalorder %s40, %s56
    %p58 = scmp.eq.s32.totalorder %s18, 0
    %p59 = por %p57, %p58
    %s61 = sadd.s32 %s60, 1
    %p64 = scmp.eq.s32.totalorder %s12, 1
    %p65 = scmp.ne.s32.totalorder %s60, %s62
    %p66 = scmp.eq.s32.totalorder %s12, 0
    %p67 = por %p65, %p66
    %p68 = scmp.ne.s32.totalorder %s60, %s62
    %p69 = scmp.eq.s32.totalorder %s17, 1
    %p70 = por %p68, %p69
    %p71 = scmp.ne.s32.totalorder %s62, %s63
    %p72 = scmp.eq.s32.totalorder %s17, 0
    %p73 = por %p71, %p72
    %p74 = scmp.ne.s32.totalorder %s62, %s63
    %p75 = scmp.eq.s32.totalorder %s18, 1
    %p76 = por %p74, %p75
    %p78 = scmp.ne.s32.totalorder %s63, %s77
    %p79 = scmp.eq.s32.totalorder %s18, 0
    %p80 = por %p78, %p79
    %s82 = sadd.s32 %s81, 1
    %p85 = scmp.eq.s32.totalorder %s12, 1
    %p86 = scmp.ne.s32.totalorder %s81, %s83
    %p87 = scmp.eq.s32.totalorder %s12, 0
    %p88 = por %p86, %p87
    %p89 = scmp.ne.s32.totalorder %s81, %s83
    %p90 = scmp.eq.s32.totalorder %s17, 1
    %p91 = por %p89, %p90
    %p92 = scmp.ne.s32.totalorder %s83, %s84
    %p93 = scmp.eq.s32.totalorder %s17, 0
    %p94 = por %p92, %p93
    %p95 = scmp.ne.s32.totalorder %s83, %s84
    %p96 = scmp.eq.s32.totalorder %s18, 1
    %p97 = por %p95, %p96
    %p99 = scmp.ne.s32.totalorder %s84, %s98
    %p100 = scmp.eq.s32.totalorder %s18, 0
    %p101 = por %p99, %p100
    %s102 = ssub.s32 %s19, %s31
    %s103 = ssub.s32 %s20, %s27
    %s104 = sor.u32 %s102, %s103
    %p105 = scmp.eq.s32.totalorder %s104, 0
    %s107 = sadd.s32 %s106, 1
    %s108 = scalar_select %p105, %s106, %s107
    %p111 = pneg %p105
    %p112 = scmp.eq.s32.totalorder %s12, 1
    %p113 = por %p111, %p112
    %p114 = scmp.ne.s32.totalorder %s106, %s109
    %p115 = scmp.eq.s32.totalorder %s12, 0
    %p116 = por %p114, %p115
    %p117 = scmp.ne.s32.totalorder %s106, %s109
    %p118 = scmp.eq.s32.totalorder %s17, 1
    %p119 = por %p117, %p118
    %p120 = scmp.ne.s32.totalorder %s109, %s110
    %p121 = scmp.eq.s32.totalorder %s17, 0
    %p122 = por %p120, %p121
    %p123 = scmp.ne.s32.totalorder %s109, %s110
    %p124 = scmp.eq.s32.totalorder %s18, 1
    %p125 = por %p123, %p124
    %p127 = scmp.ne.s32.totalorder %s110, %s126
    %p128 = scmp.eq.s32.totalorder %s18, 0
    %p129 = por %p127, %p128
    %s130 = sadd.s32 %s19, %s20
    %s131 = sadd.s32 %s31, %s27
    %s132 = ssub.s32 %s130, %s131
    %p133 = scmp.eq.s32.totalorder %s132, 0
    %s135 = sadd.s32 %s134, 1
    %s136 = scalar_select %p133, %s134, %s135
    %p139 = pneg %p133
    %p140 = scmp.eq.s32.totalorder %s12, 1
    %p141 = por %p139, %p140
    %p142 = scmp.ne.s32.totalorder %s134, %s137
    %p143 = scmp.eq.s32.totalorder %s12, 0
    %p144 = por %p142, %p143
    %p145 = scmp.ne.s32.totalorder %s134, %s137
    %p146 = scmp.eq.s32.totalorder %s17, 1
    %p147 = por %p145, %p146
    %p148 = scmp.ne.s32.totalorder %s137, %s138
    %p149 = scmp.eq.s32.totalorder %s17, 0
    %p150 = por %p148, %p149
    %p151 = scmp.ne.s32.totalorder %s137, %s138
    %p152 = scmp.eq.s32.totalorder %s18, 1
    %p153 = por %p151, %p152
    %p155 = scmp.ne.s32.totalorder %s138, %s154
    %p156 = scmp.eq.s32.totalorder %s18, 0
    %p157 = por %p155, %p156
    %s158 = sadd.s32 %s19, %s20
    %s159 = sadd.s32 %s31, %s27
    %s160 = ssub.s32 %s158, %s159
    %p161 = scmp.eq.s32.totalorder %s160, 0
    %s163 = sadd.s32 %s162, 1
    %s164 = scalar_select %p161, %s162, %s163
    %p167 = pneg %p161
    %p168 = scmp.eq.s32.totalorder %s12, 1
    %p169 = por %p167, %p168
    %p170 = scmp.ne.s32.totalorder %s162, %s165
    %p171 = scmp.eq.s32.totalorder %s12, 0
    %p172 = por %p170, %p171
    %p173 = scmp.ne.s32.totalorder %s162, %s165
    %p174 = scmp.eq.s32.totalorder %s17, 1
    %p175 = por %p173, %p174
    %p176 = scmp.ne.s32.totalorder %s165, %s166
    %p177 = scmp.eq.s32.totalorder %s17, 0
    %p178 = por %p176, %p177
    %p179 = scmp.ne.s32.totalorder %s165, %s166
    %p180 = scmp.eq.s32.totalorder %s18, 1
    %p181 = por %p179, %p180
    %p183 = scmp.ne.s32.totalorder %s166, %s182
    %p184 = scmp.eq.s32.totalorder %s18, 0
    %p185 = por %p183, %p184
    %p186 = scmp.le.s32.totalorder 1, %s12
    %p187 = scmp.lt.s32.totalorder %s12, 3
    %p188 = pnand %p186, %p187
    %p189 = pneg %p188
    // Predicated region
    $region9: #{decoder_forward.6} parent=5 // pred_check
      _
    $region10: #{decoder_forward.6} parent=5 // pred_check_branch
      %191 = sbr.rel (%p188) target = $region12
    $region11: #{decoder_forward.6} parent=5 // pred_region
      %s192 = ssub.s32 %s12, 1
      // Predicated region
      $region13: #{decoder_forward.6} parent=11 // pred_check
        %p193 = pneg %p73
      $region14: #{decoder_forward.6} parent=11 // pred_check_branch
        %195 = sbr.rel (%p193) target = $region16
      $region15: #{decoder_forward.6} parent=11 // pred_region
        _
      $region16: #{decoder_forward.6} parent=11 // pred_fallthru
        _
      // Predicated region
      $region17: #{decoder_forward.6} parent=11 // pred_check
        %p196 = pneg %p94
      $region18: #{decoder_forward.6} parent=11 // pred_check_branch
        %198 = sbr.rel (%p196) target = $region20
      $region19: #{decoder_forward.6} parent=11 // pred_region
        _
      $region20: #{decoder_forward.6} parent=11 // pred_fallthru
        _
    $region12: #{decoder_forward.6} parent=5 // pred_fallthru
      _
    %p199 = scmp.lt.s32.totalorder %s12, 2
    // Predicated region
    $region21: #{decoder_forward.6} parent=5 // pred_check
      %p200 = pneg %p199
    $region22: #{decoder_forward.6} parent=5 // pred_check_branch
      %202 = sbr.rel (%p200) target = $region24
    $region23: #{decoder_forward.6} parent=5 // pred_region
      // Predicated region
      $region25: #{decoder_forward.6} parent=23 // pred_check
        %p203 = pneg %p46
      $region26: #{decoder_forward.6} parent=23 // pred_check_branch
        %205 = sbr.rel (%p203) target = $region28
      $region27: #{decoder_forward.6} parent=23 // pred_region
        %s206 = sadd.s32 %s19, %s20
        %p207 = scmp.lt.s32.totalorder %s206, 1
        %s208 = scalar_select %p207, %s206, 1
        %s209 = smul.addr %s208, 20
        %s210 = smul.addr %s209, 8
        %s211 = scalar_lea.vmem %s0, %s210
        %s212 = sadd.s32 %s19, %s20
      $region28: #{decoder_forward.6} parent=23 // pred_fallthru
        _
    $region24: #{decoder_forward.6} parent=5 // pred_fallthru
      _
    %p213 = scmp.le.s32.totalorder 1, %s12
    %p214 = scmp.lt.s32.totalorder %s12, 3
    %p215 = pnand %p213, %p214
    %p216 = pneg %p215
    // Predicated region
    $region29: #{decoder_forward.6} parent=5 // pred_check
      _
    $region30: #{decoder_forward.6} parent=5 // pred_check_branch
      %218 = sbr.rel (%p215) target = $region32
    $region31: #{decoder_forward.6} parent=5 // pred_region
      %s219 = ssub.s32 %s12, 1
      %s220 = sadd.s32 %s21, %s22
      %p221 = scmp.lt.s32.totalorder %s220, 1
      %s222 = scalar_select %p221, %s220, 1
      %s223 = smul.addr %s222, 20
      %s224 = smul.addr %s223, 8
      %s225 = scalar_lea.vmem %s0, %s224
      %p226 = pneg %p52
      %p227 = pneg %p49
      %p228 = pneg %p73
      %p229 = pneg %p70
      %p230 = pneg %p94
      %p231 = pneg %p91
      %p232 = pneg %p122
      %p233 = pneg %p119
      %s234 = smul.u32 8, %s22
      %p235 = scmp.lt.s32.totalorder %s21, 1
      %s236 = scalar_select %p235, %s21, 1
      %p237 = scmp.lt.s32.totalorder %s234, 7
      %s238 = scalar_select %p237, %s234, 7
      %s239 = smul.addr %s236, 8
      %s240 = sadd.s32 %s238, %s239
      %s241 = smul.addr %s240, 8
      %s242 = scalar_lea.vmem %s3, %s241
      %p243 = pneg %p150
      %p244 = pneg %p147
      %s245 = sadd.s32 %s21, %s22
      %p246 = scmp.lt.s32.totalorder %s245, 1
      %s247 = scalar_select %p246, %s245, 1
      %s248 = scalar_lea.vmem %s4, %s247
      %p249 = pneg %p178
      %p250 = pneg %p175
      %s251 = sadd.s32 %s21, %s22
      %p252 = scmp.lt.s32.totalorder %s251, 1
      %s253 = scalar_select %p252, %s251, 1
      %s254 = scalar_lea.vmem %s5, %s253
      %s255 = sadd.s32 %s21, %s22
      %p256 = scmp.lt.s32.totalorder %s255, 1
      %s257 = scalar_select %p256, %s255, 1
      %s258 = smul.addr %s257, 20
      %s259 = smul.addr %s258, 8
      %s260 = scalar_lea.vmem %s0, %s259
      %s261 = sadd.s32 %s21, %s22
      %s262 = smul.u32 8, %s22
      %p263 = scmp.lt.s32.totalorder %s21, 1
      %s264 = scalar_select %p263, %s21, 1
      %p265 = scmp.lt.s32.totalorder %s262, 7
      %s266 = scalar_select %p265, %s262, 7
      %s267 = smul.addr %s264, 8
      %s268 = sadd.s32 %s266, %s267
      %s269 = smul.addr %s268, 8
      %s270 = scalar_lea.vmem %s3, %s269
      %s271 = smul.u32 8, %s22
      %s272 = sadd.s32 %s21, %s22
      %p273 = scmp.lt.s32.totalorder %s272, 1
      %s274 = scalar_select %p273, %s272, 1
      %s275 = scalar_lea.vmem %s4, %s274
      %s276 = sadd.s32 %s21, %s22
      %s277 = sadd.s32 %s21, %s22
      %p278 = scmp.lt.s32.totalorder %s277, 1
      %s279 = scalar_select %p278, %s277, 1
      %s280 = scalar_lea.vmem %s5, %s279
      %s281 = sadd.s32 %s21, %s22
      %v282 = vld [vmem:[%s260] sm:$0xff]
      %v283 = vld [vmem:[%s260 + $0x10] sm:$0xff]
      %v284 = vld [vmem:[%s260 + $0x20] sm:$0xff]
      %v285 = vld [vmem:[%s260 + $0x30] sm:$0xff]
      %v286 = vld [vmem:[%s260 + $0x40] sm:$0xff]
      %v287 = vld [vmem:[%s260 + $0x50] sm:$0xff]
      %v288 = vld [vmem:[%s260 + $0x60] sm:$0xff]
      %v289 = vld [vmem:[%s260 + $0x70] sm:$0xff]
      %v290 = vld [vmem:[%s260 + $0x1] sm:$0xff]
      %v291 = vld [vmem:[%s260 + $0x11] sm:$0xff]
      %v292 = vld [vmem:[%s260 + $0x21] sm:$0xff]
      %v293 = vld [vmem:[%s260 + $0x31] sm:$0xff]
      %v294 = vld [vmem:[%s260 + $0x41] sm:$0xff]
      %v295 = vld [vmem:[%s260 + $0x51] sm:$0xff]
      %v296 = vld [vmem:[%s260 + $0x61] sm:$0xff]
      %v297 = vld [vmem:[%s260 + $0x71] sm:$0xff]
      %v298 = vld [vmem:[%s260 + $0x2] sm:$0xff]
      %v299 = vld [vmem:[%s260 + $0x12] sm:$0xff]
      %v300 = vld [vmem:[%s260 + $0x22] sm:$0xff]
      %v301 = vld [vmem:[%s260 + $0x32] sm:$0xff]
      %v302 = vld [vmem:[%s260 + $0x42] sm:$0xff]
      %v303 = vld [vmem:[%s260 + $0x52] sm:$0xff]
      %v304 = vld [vmem:[%s260 + $0x62] sm:$0xff]
      %v305 = vld [vmem:[%s260 + $0x72] sm:$0xff]
      %s306 = scalar_lea.vmem %s260, 16
      %v307 = vld [vmem:[%s306] sm:$0xff]
      %v308 = vld [vmem:[%s306 + $0x10] sm:$0xff]
      %v309 = vld [vmem:[%s306 + $0x20] sm:$0xff]
      %v310 = vld [vmem:[%s306 + $0x30] sm:$0xff]
      %v311 = vld [vmem:[%s306 + $0x40] sm:$0xff]
      %v312 = vld [vmem:[%s306 + $0x50] sm:$0xff]
      %v313 = vld [vmem:[%s306 + $0x60] sm:$0xff]
      %v314 = vld [vmem:[%s306 + $0x70] sm:$0xff]
      %v315 = vld [vmem:[%s306 + $0x1] sm:$0xff]
      %v316 = vld [vmem:[%s306 + $0x11] sm:$0xff]
      %v317 = vld [vmem:[%s306 + $0x21] sm:$0xff]
      %v318 = vld [vmem:[%s306 + $0x31] sm:$0xff]
      %v319 = vld [vmem:[%s306 + $0x41] sm:$0xff]
      %v320 = vld [vmem:[%s306 + $0x51] sm:$0xff]
      %v321 = vld [vmem:[%s306 + $0x61] sm:$0xff]
      %v322 = vld [vmem:[%s306 + $0x71] sm:$0xff]
      %v323 = vld [vmem:[%s306 + $0x2] sm:$0xff]
      %v324 = vld [vmem:[%s306 + $0x12] sm:$0xff]
      %v325 = vld [vmem:[%s306 + $0x22] sm:$0xff]
      %v326 = vld [vmem:[%s306 + $0x32] sm:$0xff]
      %v327 = vld [vmem:[%s306 + $0x42] sm:$0xff]
      %v328 = vld [vmem:[%s306 + $0x52] sm:$0xff]
      %v329 = vld [vmem:[%s306 + $0x62] sm:$0xff]
      %v330 = vld [vmem:[%s306 + $0x72] sm:$0xff]
      %s331 = scalar_lea.vmem %s260, 32
      %v332 = vld [vmem:[%s331] sm:$0xff]
      %v333 = vld [vmem:[%s331 + $0x10] sm:$0xff]
      %v334 = vld [vmem:[%s331 + $0x20] sm:$0xff]
      %v335 = vld [vmem:[%s331 + $0x30] sm:$0xff]
      %v336 = vld [vmem:[%s331 + $0x40] sm:$0xff]
      %v337 = vld [vmem:[%s331 + $0x50] sm:$0xff]
      %v338 = vld [vmem:[%s331 + $0x60] sm:$0xff]
      %v339 = vld [vmem:[%s331 + $0x70] sm:$0xff]
      %v340 = vld [vmem:[%s331 + $0x1] sm:$0xff]
      %v341 = vld [vmem:[%s331 + $0x11] sm:$0xff]
      %v342 = vld [vmem:[%s331 + $0x21] sm:$0xff]
      %v343 = vld [vmem:[%s331 + $0x31] sm:$0xff]
      %v344 = vld [vmem:[%s331 + $0x41] sm:$0xff]
      %v345 = vld [vmem:[%s331 + $0x51] sm:$0xff]
      %v346 = vld [vmem:[%s331 + $0x61] sm:$0xff]
      %v347 = vld [vmem:[%s331 + $0x71] sm:$0xff]
      %v348 = vld [vmem:[%s331 + $0x2] sm:$0xff]
      %v349 = vld [vmem:[%s331 + $0x12] sm:$0xff]
      %v350 = vld [vmem:[%s331 + $0x22] sm:$0xff]
      %v351 = vld [vmem:[%s331 + $0x32] sm:$0xff]
      %v352 = vld [vmem:[%s331 + $0x42] sm:$0xff]
      %v353 = vld [vmem:[%s331 + $0x52] sm:$0xff]
      %v354 = vld [vmem:[%s331 + $0x62] sm:$0xff]
      %v355 = vld [vmem:[%s331 + $0x72] sm:$0xff]
      %364 = vrot.lane.b32.xlu0 %v290, 8
      %v365 = vpop.permute.xlu0 %364
      %366 = vrot.lane.b32.xlu0 %v291, 8
      %v367 = vpop.permute.xlu0 %366
      %368 = vrot.lane.b32.xlu0 %v292, 8
      %v369 = vpop.permute.xlu0 %368
      %370 = vrot.lane.b32.xlu0 %v293, 8
      %v371 = vpop.permute.xlu0 %370
      %372 = vrot.lane.b32.xlu0 %v294, 8
      %v373 = vpop.permute.xlu0 %372
      %374 = vrot.lane.b32.xlu0 %v295, 8
      %v375 = vpop.permute.xlu0 %374
      %376 = vrot.lane.b32.xlu0 %v296, 8
      %v377 = vpop.permute.xlu0 %376
      %378 = vrot.lane.b32.xlu0 %v297, 8
      %v379 = vpop.permute.xlu0 %378
      %396 = vrot.lane.b32.xlu0 %v298, 16
      %v397 = vpop.permute.xlu0 %396
      %398 = vrot.lane.b32.xlu0 %v299, 16
      %v399 = vpop.permute.xlu0 %398
      %400 = vrot.lane.b32.xlu0 %v300, 16
      %v401 = vpop.permute.xlu0 %400
      %402 = vrot.lane.b32.xlu0 %v301, 16
      %v403 = vpop.permute.xlu0 %402
      %404 = vrot.lane.b32.xlu0 %v302, 16
      %v405 = vpop.permute.xlu0 %404
      %406 = vrot.lane.b32.xlu0 %v303, 16
      %v407 = vpop.permute.xlu0 %406
      %408 = vrot.lane.b32.xlu0 %v304, 16
      %v409 = vpop.permute.xlu0 %408
      %410 = vrot.lane.b32.xlu0 %v305, 16
      %v411 = vpop.permute.xlu0 %410
      %428 = vrot.lane.b32.xlu0 %v307, 24
      %v429 = vpop.permute.xlu0 %428
      %430 = vrot.lane.b32.xlu0 %v308, 24
      %v431 = vpop.permute.xlu0 %430
      %432 = vrot.lane.b32.xlu0 %v309, 24
      %v433 = vpop.permute.xlu0 %432
      %434 = vrot.lane.b32.xlu0 %v310, 24
      %v435 = vpop.permute.xlu0 %434
      %436 = vrot.lane.b32.xlu0 %v311, 24
      %v437 = vpop.permute.xlu0 %436
      %438 = vrot.lane.b32.xlu0 %v312, 24
      %v439 = vpop.permute.xlu0 %438
      %440 = vrot.lane.b32.xlu0 %v313, 24
      %v441 = vpop.permute.xlu0 %440
      %442 = vrot.lane.b32.xlu0 %v314, 24
      %v443 = vpop.permute.xlu0 %442
      %460 = vrot.lane.b32.xlu0 %v315, 32
      %v461 = vpop.permute.xlu0 %460
      %462 = vrot.lane.b32.xlu0 %v316, 32
      %v463 = vpop.permute.xlu0 %462
      %464 = vrot.lane.b32.xlu0 %v317, 32
      %v465 = vpop.permute.xlu0 %464
      %466 = vrot.lane.b32.xlu0 %v318, 32
      %v467 = vpop.permute.xlu0 %466
      %468 = vrot.lane.b32.xlu0 %v319, 32
      %v469 = vpop.permute.xlu0 %468
      %470 = vrot.lane.b32.xlu0 %v320, 32
      %v471 = vpop.permute.xlu0 %470
      %472 = vrot.lane.b32.xlu0 %v321, 32
      %v473 = vpop.permute.xlu0 %472
      %474 = vrot.lane.b32.xlu0 %v322, 32
      %v475 = vpop.permute.xlu0 %474
      %492 = vrot.lane.b32.xlu0 %v323, 40
      %v493 = vpop.permute.xlu0 %492
      %494 = vrot.lane.b32.xlu0 %v324, 40
      %v495 = vpop.permute.xlu0 %494
      %496 = vrot.lane.b32.xlu0 %v325, 40
      %v497 = vpop.permute.xlu0 %496
      %498 = vrot.lane.b32.xlu0 %v326, 40
      %v499 = vpop.permute.xlu0 %498
      %500 = vrot.lane.b32.xlu0 %v327, 40
      %v501 = vpop.permute.xlu0 %500
      %502 = vrot.lane.b32.xlu0 %v328, 40
      %v503 = vpop.permute.xlu0 %502
      %504 = vrot.lane.b32.xlu0 %v329, 40
      %v505 = vpop.permute.xlu0 %504
      %506 = vrot.lane.b32.xlu0 %v330, 40
      %v507 = vpop.permute.xlu0 %506
      %524 = vrot.lane.b32.xlu0 %v332, 48
      %v525 = vpop.permute.xlu0 %524
      %526 = vrot.lane.b32.xlu0 %v333, 48
      %v527 = vpop.permute.xlu0 %526
      %528 = vrot.lane.b32.xlu0 %v334, 48
      %v529 = vpop.permute.xlu0 %528
      %530 = vrot.lane.b32.xlu0 %v335, 48
      %v531 = vpop.permute.xlu0 %530
      %532 = vrot.lane.b32.xlu0 %v336, 48
      %v533 = vpop.permute.xlu0 %532
      %534 = vrot.lane.b32.xlu0 %v337, 48
      %v535 = vpop.permute.xlu0 %534
      %536 = vrot.lane.b32.xlu0 %v338, 48
      %v537 = vpop.permute.xlu0 %536
      %538 = vrot.lane.b32.xlu0 %v339, 48
      %v539 = vpop.permute.xlu0 %538
      %556 = vrot.lane.b32.xlu0 %v340, 56
      %v557 = vpop.permute.xlu0 %556
      %558 = vrot.lane.b32.xlu0 %v341, 56
      %v559 = vpop.permute.xlu0 %558
      %560 = vrot.lane.b32.xlu0 %v342, 56
      %v561 = vpop.permute.xlu0 %560
      %562 = vrot.lane.b32.xlu0 %v343, 56
      %v563 = vpop.permute.xlu0 %562
      %564 = vrot.lane.b32.xlu0 %v344, 56
      %v565 = vpop.permute.xlu0 %564
      %566 = vrot.lane.b32.xlu0 %v345, 56
      %v567 = vpop.permute.xlu0 %566
      %568 = vrot.lane.b32.xlu0 %v346, 56
      %v569 = vpop.permute.xlu0 %568
      %570 = vrot.lane.b32.xlu0 %v347, 56
      %v571 = vpop.permute.xlu0 %570
      %588 = vrot.lane.b32.xlu0 %v348, 64
      %v589 = vpop.permute.xlu0 %588
      %590 = vrot.lane.b32.xlu0 %v349, 64
      %v591 = vpop.permute.xlu0 %590
      %592 = vrot.lane.b32.xlu0 %v350, 64
      %v593 = vpop.permute.xlu0 %592
      %594 = vrot.lane.b32.xlu0 %v351, 64
      %v595 = vpop.permute.xlu0 %594
      %596 = vrot.lane.b32.xlu0 %v352, 64
      %v597 = vpop.permute.xlu0 %596
      %598 = vrot.lane.b32.xlu0 %v353, 64
      %v599 = vpop.permute.xlu0 %598
      %600 = vrot.lane.b32.xlu0 %v354, 64
      %v601 = vpop.permute.xlu0 %600
      %602 = vrot.lane.b32.xlu0 %v355, 64
      %v603 = vpop.permute.xlu0 %602
      %vm612 = vcmask 64512
      %v613 = vsel %vm612, %v282, %v365
      %v614 = vsel %vm612, %v283, %v367
      %v615 = vsel %vm612, %v284, %v369
      %v616 = vsel %vm612, %v285, %v371
      %v617 = vsel %vm612, %v286, %v373
      %v618 = vsel %vm612, %v287, %v375
      %v619 = vsel %vm612, %v288, %v377
      %v620 = vsel %vm612, %v289, %v379
      %vm621 = vcmask 130048
      %v622 = vsel %vm621, %v613, %v397
      %v623 = vsel %vm621, %v614, %v399
      %v624 = vsel %vm621, %v615, %v401
      %v625 = vsel %vm621, %v616, %v403
      %v626 = vsel %vm621, %v617, %v405
      %v627 = vsel %vm621, %v618, %v407
      %v628 = vsel %vm621, %v619, %v409
      %v629 = vsel %vm621, %v620, %v411
      %vm630 = vcmask 195584
      %v631 = vsel %vm630, %v622, %v429
      %v632 = vsel %vm630, %v623, %v431
      %v633 = vsel %vm630, %v624, %v433
      %v634 = vsel %vm630, %v625, %v435
      %v635 = vsel %vm630, %v626, %v437
      %v636 = vsel %vm630, %v627, %v439
      %v637 = vsel %vm630, %v628, %v441
      %v638 = vsel %vm630, %v629, %v443
      %vm639 = vcmask 261120
      %v640 = vsel %vm639, %v631, %v461
      %v641 = vsel %vm639, %v632, %v463
      %v642 = vsel %vm639, %v633, %v465
      %v643 = vsel %vm639, %v634, %v467
      %v644 = vsel %vm639, %v635, %v469
      %v645 = vsel %vm639, %v636, %v471
      %v646 = vsel %vm639, %v637, %v473
      %v647 = vsel %vm639, %v638, %v475
      %vm648 = vcmask 326656
      %v649 = vsel %vm648, %v640, %v493
      %v650 = vsel %vm648, %v641, %v495
      %v651 = vsel %vm648, %v642, %v497
      %v652 = vsel %vm648, %v643, %v499
      %v653 = vsel %vm648, %v644, %v501
      %v654 = vsel %vm648, %v645, %v503
      %v655 = vsel %vm648, %v646, %v505
      %v656 = vsel %vm648, %v647, %v507
      %vm657 = vcmask 392192
      %v658 = vsel %vm657, %v649, %v525
      %v659 = vsel %vm657, %v650, %v527
      %v660 = vsel %vm657, %v651, %v529
      %v661 = vsel %vm657, %v652, %v531
      %v662 = vsel %vm657, %v653, %v533
      %v663 = vsel %vm657, %v654, %v535
      %v664 = vsel %vm657, %v655, %v537
      %v665 = vsel %vm657, %v656, %v539
      %vm666 = vcmask 457728
      %v667 = vsel %vm666, %v658, %v557
      %v668 = vsel %vm666, %v659, %v559
      %v669 = vsel %vm666, %v660, %v561
      %v670 = vsel %vm666, %v661, %v563
      %v671 = vsel %vm666, %v662, %v565
      %v672 = vsel %vm666, %v663, %v567
      %v673 = vsel %vm666, %v664, %v569
      %v674 = vsel %vm666, %v665, %v571
      %vm675 = vcmask 523264
      %v676 = vsel %vm675, %v667, %v589
      %v677 = vsel %vm675, %v668, %v591
      %v678 = vsel %vm675, %v669, %v593
      %v679 = vsel %vm675, %v670, %v595
      %v680 = vsel %vm675, %v671, %v597
      %v681 = vsel %vm675, %v672, %v599
      %v682 = vsel %vm675, %v673, %v601
      %v683 = vsel %vm675, %v674, %v603
      %v684 = vld [vmem:[%s1] sm:$0xff]
      %v685 = vld [vmem:[%s1 + $0x8] sm:$0xff]
      %v686 = vld [vmem:[%s1 + $0x10] sm:$0xff]
      %v687 = vld [vmem:[%s1 + $0x18] sm:$0xff]
      %v688 = vld [vmem:[%s1 + $0x20] sm:$0xff]
      %v689 = vld [vmem:[%s1 + $0x28] sm:$0xff]
      %v690 = vld [vmem:[%s1 + $0x30] sm:$0xff]
      %v691 = vld [vmem:[%s1 + $0x38] sm:$0xff]
      %v692 = vld [vmem:[%s1 + $0x40] sm:$0xff]
      %v693 = vld [vmem:[%s2] sm:$0x1]
      %v695 = vlaneseq
      %v696 = vshrl.u32 %v695, 7
      %v697 = vsub.s32 0, %v696
      %v698 = vrot.slane %v693, %v697
      %vm700 = vcmask 588800
      %v702 = vsel %vm700, %v676, 0
      %v705 = vsel %vm700, %v677, 0
      %v708 = vsel %vm700, %v678, 0
      %v711 = vsel %vm700, %v679, 0
      %v714 = vsel %vm700, %v680, 0
      %v717 = vsel %vm700, %v681, 0
      %v720 = vsel %vm700, %v682, 0
      %v723 = vsel %vm700, %v683, 0
      %725 = vmatprep.subr.mxu0 0.0
      %726 = vmatpush1.msra.mxu0 0.0
      %727 = vmatprep.subr.mxu0 0.0
      %728 = vmatpush1.msra.mxu0 0.0
      %729 = vmatprep.subr.mxu0 0.0
      %730 = vmatpush1.msra.mxu0 0.0
      %731 = vmatprep.subr.mxu0 0.0
      %732 = vmatpush1.msra.mxu0 0.0
      %733 = vmatprep.subr.mxu0 0.0
      %734 = vmatpush1.msra.mxu0 0.0
      %735 = vmatprep.subr.mxu0 0.0
      %736 = vmatpush1.msra.mxu0 0.0
      %737 = vmatprep.subr.mxu0 0.0
      %738 = vmatpush1.msra.mxu0 0.0
      %739 = vmatprep.subr.mxu0 0.0
      %740 = vmatpush1.msra.mxu0 %v692
      %741 = vmatprep.subr.mxu0 0.0
      %742 = vmatpush1.msra.mxu0 %v691
      %743 = vmatprep.subr.mxu0 0.0
      %744 = vmatpush1.msra.mxu0 %v690
      %745 = vmatprep.subr.mxu0 0.0
      %746 = vmatpush1.msra.mxu0 %v689
      %747 = vmatprep.subr.mxu0 0.0
      %748 = vmatpush1.msra.mxu0 %v688
      %749 = vmatprep.subr.mxu0 0.0
      %750 = vmatpush1.msra.mxu0 %v687
      %751 = vmatprep.subr.mxu0 0.0
      %752 = vmatpush1.msra.mxu0 %v686
      %753 = vmatprep.subr.mxu0 0.0
      %754 = vmatpush1.msra.mxu0 %v685
      %755 = vmatprep.subr.mxu0 0.0
      %756 = vmatpush1.msra.mxu0 %v684
      %757 = vmatprep.subr.mxu0 0.0
      %758 = vmatpush2.msra.mxu0 0.0
      %759 = vmatprep.subr.mxu0 0.0
      %760 = vmatpush2.msra.mxu0 0.0
      %761 = vmatprep.subr.mxu0 0.0
      %762 = vmatpush2.msra.mxu0 0.0
      %763 = vmatprep.subr.mxu0 0.0
      %764 = vmatpush2.msra.mxu0 0.0
      %765 = vmatprep.subr.mxu0 0.0
      %766 = vmatpush2.msra.mxu0 0.0
      %767 = vmatprep.subr.mxu0 0.0
      %768 = vmatpush2.msra.mxu0 0.0
      %769 = vmatprep.subr.mxu0 0.0
      %770 = vmatpush2.msra.mxu0 0.0
      %771 = vmatprep.subr.mxu0 0.0
      %772 = vmatpush2.msra.mxu0 0.0
      %773 = vmatprep.subr.mxu0 0.0
      %774 = vmatpush2.msra.mxu0 0.0
      %775 = vmatprep.subr.mxu0 0.0
      %776 = vmatpush2.msra.mxu0 0.0
      %777 = vmatprep.subr.mxu0 0.0
      %778 = vmatpush2.msra.mxu0 0.0
      %779 = vmatprep.subr.mxu0 0.0
      %780 = vmatpush2.msra.mxu0 0.0
      %781 = vmatprep.subr.mxu0 0.0
      %782 = vmatpush2.msra.mxu0 0.0
      %783 = vmatprep.subr.mxu0 0.0
      %784 = vmatpush2.msra.mxu0 0.0
      %785 = vmatprep.subr.mxu0 0.0
      %786 = vmatpush2.msra.mxu0 0.0
      %787 = vmatprep.subr.mxu0 0.0
      %788 = vmatpush2.msra.mxu0 0.0
      %789 = vmatprep.mubr.f32.mxu0 0.0
      %790 = vmatmul.mubr.f32.gmra.mxu0 %v702
      %v791 = vpop.f32.mrf.mxu0
      %v792 = vadd.f32 %v698, %v791
      %v793 = vpop.f32.mrf.mxu0
      %794 = vmatprep.mubr.f32.mxu0 0.0
      %795 = vmatmul.mubr.f32.gmra.mxu0 %v705
      %v796 = vpop.f32.mrf.mxu0
      %v797 = vadd.f32 %v698, %v796
      %v798 = vpop.f32.mrf.mxu0
      %799 = vmatprep.mubr.f32.mxu0 0.0
      %800 = vmatmul.mubr.f32.gmra.mxu0 %v708
      %v801 = vpop.f32.mrf.mxu0
      %v802 = vadd.f32 %v698, %v801
      %v803 = vpop.f32.mrf.mxu0
      %804 = vmatprep.mubr.f32.mxu0 0.0
      %805 = vmatmul.mubr.f32.gmra.mxu0 %v711
      %v806 = vpop.f32.mrf.mxu0
      %v807 = vadd.f32 %v698, %v806
      %v808 = vpop.f32.mrf.mxu0
      %809 = vmatprep.mubr.f32.mxu0 0.0
      %810 = vmatmul.mubr.f32.gmra.mxu0 %v714
      %v811 = vpop.f32.mrf.mxu0
      %v812 = vadd.f32 %v698, %v811
      %v813 = vpop.f32.mrf.mxu0
      %814 = vmatprep.mubr.f32.mxu0 0.0
      %815 = vmatmul.mubr.f32.gmra.mxu0 %v717
      %v816 = vpop.f32.mrf.mxu0
      %v817 = vadd.f32 %v698, %v816
      %v818 = vpop.f32.mrf.mxu0
      %819 = vmatprep.mubr.f32.mxu0 0.0
      %820 = vmatmul.mubr.f32.gmra.mxu0 %v720
      %v821 = vpop.f32.mrf.mxu0
      %v822 = vadd.f32 %v698, %v821
      %v823 = vpop.f32.mrf.mxu0
      %824 = vmatprep.mubr.f32.mxu0 0.0
      %825 = vmatmul.mubr.f32.gmra.mxu0 %v723
      %v826 = vpop.f32.mrf.mxu0
      %v827 = vadd.f32 %v698, %v826
      %v828 = vpop.f32.mrf.mxu0
      %829 = vdwg.mxu0
      %vm830 = vcmask 31744
      %831 = vst.msk [vmem:[%s270] sm:$0xff] %vm830, %v792
      %832 = vst.msk [vmem:[%s270 + $0x8] sm:$0xff] %vm830, %v797
      %833 = vst.msk [vmem:[%s270 + $0x10] sm:$0xff] %vm830, %v802
      %834 = vst.msk [vmem:[%s270 + $0x18] sm:$0xff] %vm830, %v807
      %835 = vst.msk [vmem:[%s270 + $0x20] sm:$0xff] %vm830, %v812
      %836 = vst.msk [vmem:[%s270 + $0x28] sm:$0xff] %vm830, %v817
      %837 = vst.msk [vmem:[%s270 + $0x30] sm:$0xff] %vm830, %v822
      %838 = vst.msk [vmem:[%s270 + $0x38] sm:$0xff] %vm830, %v827
      %v839 = vsel %vm830, %v792, 0.0
      %v840 = vsel %vm830, %v797, 0.0
      %v841 = vadd.f32 %v839, %v840
      %v842 = vsel %vm830, %v802, 0.0
      %v843 = vadd.f32 %v841, %v842
      %v844 = vsel %vm830, %v807, 0.0
      %v845 = vadd.f32 %v843, %v844
      %v846 = vsel %vm830, %v812, 0.0
      %v847 = vadd.f32 %v845, %v846
      %v848 = vsel %vm830, %v817, 0.0
      %v849 = vadd.f32 %v847, %v848
      %v850 = vsel %vm830, %v822, 0.0
      %v851 = vadd.f32 %v849, %v850
      %v852 = vsel %vm830, %v827, 0.0
      %v853 = vadd.f32 %v851, %v852
      %v854 = vrot.slane %v853, 4
      %v855 = vadd.f32 %v853, %v854
      %v856 = vrot.slane %v855, 2
      %v857 = vadd.f32 %v855, %v856
      %v858 = vrot.slane %v857, 1
      %v859 = vadd.f32 %v857, %v858
      %vm860 = vcmask 24576
      %861 = vst.msk [vmem:[%s275] sm:$0x1] %vm860, %v859
      %v862 = vmul.f32 %v792, %v792
      %v863 = vmul.f32 %v797, %v797
      %v864 = vmul.f32 %v802, %v802
      %v865 = vmul.f32 %v807, %v807
      %v866 = vmul.f32 %v812, %v812
      %v867 = vmul.f32 %v817, %v817
      %v868 = vmul.f32 %v822, %v822
      %v869 = vmul.f32 %v827, %v827
      %v870 = vsel %vm830, %v862, 0.0
      %v871 = vsel %vm830, %v863, 0.0
      %v872 = vadd.f32 %v870, %v871
      %v873 = vsel %vm830, %v864, 0.0
      %v874 = vadd.f32 %v872, %v873
      %v875 = vsel %vm830, %v865, 0.0
      %v876 = vadd.f32 %v874, %v875
      %v877 = vsel %vm830, %v866, 0.0
      %v878 = vadd.f32 %v876, %v877
      %v879 = vsel %vm830, %v867, 0.0
      %v880 = vadd.f32 %v878, %v879
      %v881 = vsel %vm830, %v868, 0.0
      %v882 = vadd.f32 %v880, %v881
      %v883 = vsel %vm830, %v869, 0.0
      %v884 = vadd.f32 %v882, %v883
      %v885 = vrot.slane %v884, 4
      %v886 = vadd.f32 %v884, %v885
      %v887 = vrot.slane %v886, 2
      %v888 = vadd.f32 %v886, %v887
      %v889 = vrot.slane %v888, 1
      %v890 = vadd.f32 %v888, %v889
      %891 = vst.msk [vmem:[%s280] sm:$0x1] %vm860, %v890
      %s892 = smul.u32 8, %s22
      %p893 = scmp.lt.s32.totalorder %s21, 1
      %s894 = scalar_select %p893, %s21, 1
      %p895 = scmp.lt.s32.totalorder %s892, 7
      %s896 = scalar_select %p895, %s892, 7
      %s897 = smul.addr %s894, 8
      %s898 = sadd.s32 %s896, %s897
      %s899 = smul.addr %s898, 8
      %s900 = scalar_lea.vmem %s3, %s899
      %s901 = sadd.s32 %s21, %s22
      %p902 = scmp.lt.s32.totalorder %s901, 1
      %s903 = scalar_select %p902, %s901, 1
      %s904 = scalar_lea.vmem %s4, %s903
      %s905 = sadd.s32 %s21, %s22
      %p906 = scmp.lt.s32.totalorder %s905, 1
      %s907 = scalar_select %p906, %s905, 1
      %s908 = scalar_lea.vmem %s5, %s907
      // Predicated region
      $region33: #{decoder_forward.6} parent=31 // pred_check
        %p909 = pneg %p119
      $region34: #{decoder_forward.6} parent=31 // pred_check_branch
        %911 = sbr.rel (%p909) target = $region36
      $region35: #{decoder_forward.6} parent=31 // pred_region
        %s912 = smul.u32 8, %s22
      $region36: #{decoder_forward.6} parent=31 // pred_fallthru
        _
      // Predicated region
      $region37: #{decoder_forward.6} parent=31 // pred_check
        %p913 = pneg %p147
      $region38: #{decoder_forward.6} parent=31 // pred_check_branch
        %915 = sbr.rel (%p913) target = $region40
      $region39: #{decoder_forward.6} parent=31 // pred_region
        %s916 = sadd.s32 %s21, %s22
      $region40: #{decoder_forward.6} parent=31 // pred_fallthru
        _
      // Predicated region
      $region41: #{decoder_forward.6} parent=31 // pred_check
        %p917 = pneg %p175
      $region42: #{decoder_forward.6} parent=31 // pred_check_branch
        %919 = sbr.rel (%p917) target = $region44
      $region43: #{decoder_forward.6} parent=31 // pred_region
        %s920 = sadd.s32 %s21, %s22
      $region44: #{decoder_forward.6} parent=31 // pred_fallthru
        _
    $region32: #{decoder_forward.6} parent=5 // pred_fallthru
      _
    %p921 = scmp.le.s32.totalorder 2, %s12
    // Predicated region
    $region45: #{decoder_forward.6} parent=5 // pred_check
      %p922 = pneg %p921
    $region46: #{decoder_forward.6} parent=5 // pred_check_branch
      %924 = sbr.rel (%p922) target = $region48
    $region47: #{decoder_forward.6} parent=5 // pred_region
      %s925 = ssub.s32 %s12, 2
      // Predicated region
      $region49: #{decoder_forward.6} parent=47 // pred_check
        %p926 = pneg %p125
      $region50: #{decoder_forward.6} parent=47 // pred_check_branch
        %928 = sbr.rel (%p926) target = $region52
      $region51: #{decoder_forward.6} parent=47 // pred_region
        %s929 = smul.u32 8, %s24
        %p930 = scmp.lt.s32.totalorder %s23, 1
        %s931 = scalar_select %p930, %s23, 1
        %p932 = scmp.lt.s32.totalorder %s929, 7
        %s933 = scalar_select %p932, %s929, 7
        %s934 = smul.addr %s931, 8
        %s935 = sadd.s32 %s933, %s934
        %s936 = smul.addr %s935, 8
        %s937 = scalar_lea.vmem %s3, %s936
      $region52: #{decoder_forward.6} parent=47 // pred_fallthru
        _
      // Predicated region
      $region53: #{decoder_forward.6} parent=47 // pred_check
        %p938 = pneg %p153
      $region54: #{decoder_forward.6} parent=47 // pred_check_branch
        %940 = sbr.rel (%p938) target = $region56
      $region55: #{decoder_forward.6} parent=47 // pred_region
        %s941 = sadd.s32 %s23, %s24
        %p942 = scmp.lt.s32.totalorder %s941, 1
        %s943 = scalar_select %p942, %s941, 1
        %s944 = scalar_lea.vmem %s4, %s943
      $region56: #{decoder_forward.6} parent=47 // pred_fallthru
        _
      // Predicated region
      $region57: #{decoder_forward.6} parent=47 // pred_check
        %p945 = pneg %p181
      $region58: #{decoder_forward.6} parent=47 // pred_check_branch
        %947 = sbr.rel (%p945) target = $region60
      $region59: #{decoder_forward.6} parent=47 // pred_region
        %s948 = sadd.s32 %s23, %s24
        %p949 = scmp.lt.s32.totalorder %s948, 1
        %s950 = scalar_select %p949, %s948, 1
        %s951 = scalar_lea.vmem %s5, %s950
      $region60: #{decoder_forward.6} parent=47 // pred_fallthru
        _
    $region48: #{decoder_forward.6} parent=5 // pred_fallthru
      _
  $region6: #{decoder_forward.6} parent=0 // loop_footer
    %s16 = sadd.s32 1, %s12
  $region7: #{decoder_forward.6} parent=0 // loop_footer_branch
    %11 = sbr.rel target = $region3
  $region8: #{decoder_forward.6} parent=0 // loop_exit
    _

// kernel: decoder_forward.7
$region0: #{decoder_forward.7}
  #allocation0 [shape = 'u32[]', space=smem, size = 0x4, offset = 0x4, fixed_abs, tag = 'smem constant byte address 0x4 - core index']
  #allocation1 [shape = 'u32[144,128]{1,0:T(1,128)}', space=vmem, size = 0x12000, scoped, tag = 'internal scratch']
  %s0 = inlined_call_operand.vmem [shape: f32[2,10,10,4], index: 0, kind: input, shape index: {}]
  %s1 = inlined_call_operand.vmem [shape: f32[36,4], index: 1, kind: input, shape index: {}]
  %s2 = inlined_call_operand.vmem [shape: f32[1,4], index: 2, kind: input, shape index: {}]
  %s3 = inlined_call_operand.vmem [shape: f32[2,8,8,4], index: 3, kind: output, shape index: {0}]
  %s4 = inlined_call_operand.vmem [shape: f32[2,1,4], index: 4, kind: output, shape index: {1}]
  %s5 = inlined_call_operand.vmem [shape: f32[2,1,4], index: 5, kind: output, shape index: {2}]
  %6 = xla_tuple %s3, %s4, %s5
  %s7 = sld [smem:[#allocation0]]
  $region61: #{decoder_forward.7} parent=0
    _
  %s9 = ssub.s32 1, %s7
  %s10 = scalar_select 0, %s9, %s7
  loop: start=0, step=1, limit=4
  $region2: #{decoder_forward.7} parent=0 // loop_pre_header
    _
  $region3: #{decoder_forward.7} parent=0 // loop_header
    %s12 = sphi 0, %s16
    %p13 = scmp.ge.s32.totalorder %s12, 4
    %s19 = sphi 0, %s31
    %s20 = sphi 0, %s27
    %s21 = sphi 0, %s19
    %s22 = sphi 0, %s20
    %s23 = sphi 0, %s21
    %s24 = sphi 0, %s22
    %s36 = sphi 0, %s38
    %s39 = sphi 0, %s36
    %s40 = sphi 0, %s39
    %s56 = sphi 0, %s40
    %s60 = sphi 0, %s60
    %s62 = sphi 0, %s60
    %s63 = sphi 0, %s62
    %s77 = sphi 0, %s63
    %s81 = sphi 0, %s81
    %s83 = sphi 0, %s81
    %s84 = sphi 0, %s83
    %s98 = sphi 0, %s84
    %s106 = sphi 0, %s108
    %s109 = sphi 0, %s106
    %s110 = sphi 0, %s109
    %s126 = sphi 0, %s110
    %s134 = sphi 0, %s136
    %s137 = sphi 0, %s134
    %s138 = sphi 0, %s137
    %s154 = sphi 0, %s138
    %s162 = sphi 0, %s164
    %s165 = sphi 0, %s162
    %s166 = sphi 0, %s165
    %s182 = sphi 0, %s166
  $region4: #{decoder_forward.7} parent=0 // loop_header_branch
    %15 = sbr.rel (%p13) target = $region8
  $region5: #{decoder_forward.7} parent=0 // loop_body
    %s17 = ssub.s32 %s12, 1
    %s18 = ssub.s32 %s12, 2
    %s25 = sadd.s32 1, %s20
    %p26 = scmp.ge.s32.totalorder %s25, 1
    %s27 = scalar_select %p26, 0, %s25
    %s28 = sadd.s32 1, %s19
    %s29 = scalar_select %p26, %s28, %s19
    %p30 = scmp.ge.s32.totalorder %s29, 2
    %s31 = scalar_select %p30, 0, %s29
    %s32 = sadd.s32 %s19, %s20
    %s33 = sadd.s32 %s31, %s27
    %s34 = ssub.s32 %s32, %s33
    %p35 = scmp.eq.s32.totalorder %s34, 0
    %s37 = sadd.s32 %s36, 1
    %s38 = scalar_select %p35, %s36, %s37
    %p41 = pneg %p35
    %p42 = scmp.eq.s32.totalorder %s12, 1
    %p43 = por %p41, %p42
    %p44 = scmp.ne.s32.totalorder %s36, %s39
    %p45 = scmp.eq.s32.totalorder %s12, 0
    %p46 = por %p44, %p45
    %p47 = scmp.ne.s32.totalorder %s36, %s39
    %p48 = scmp.eq.s32.totalorder %s17, 1
    %p49 = por %p47, %p48
    %p50 = scmp.ne.s32.totalorder %s39, %s40
    %p51 = scmp.eq.s32.totalorder %s17, 0
    %p52 = por %p50, %p51
    %p53 = scmp.ne.s32.totalorder %s39, %s40
    %p54 = scmp.eq.s32.totalorder %s18, 1
    %p55 = por %p53, %p54
    %p57 = scmp.ne.s32.totalorder %s40, %s56
    %p58 = scmp.eq.s32.totalorder %s18, 0
    %p59 = por %p57, %p58
    %s61 = sadd.s32 %s60, 1
    %p64 = scmp.eq.s32.totalorder %s12, 1
    %p65 = scmp.ne.s32.totalorder %s60, %s62
    %p66 = scmp.eq.s32.totalorder %s12, 0
    %p67 = por %p65, %p66
    %p68 = scmp.ne.s32.totalorder %s60, %s62
    %p69 = scmp.eq.s32.totalorder %s17, 1
    %p70 = por %p68, %p69
    %p71 = scmp.ne.s32.totalorder %s62, %s63
    %p72 = scmp.eq.s32.totalorder %s17, 0
    %p73 = por %p71, %p72
    %p74 = scmp.ne.s32.totalorder %s62, %s63
    %p75 = scmp.eq.s32.totalorder %s18, 1
    %p76 = por %p74, %p75
    %p78 = scmp.ne.s32.totalorder %s63, %s77
    %p79 = scmp.eq.s32.totalorder %s18, 0
    %p80 = por %p78, %p79
    %s82 = sadd.s32 %s81, 1
    %p85 = scmp.eq.s32.totalorder %s12, 1
    %p86 = scmp.ne.s32.totalorder %s81, %s83
    %p87 = scmp.eq.s32.totalorder %s12, 0
    %p88 = por %p86, %p87
    %p89 = scmp.ne.s32.totalorder %s81, %s83
    %p90 = scmp.eq.s32.totalorder %s17, 1
    %p91 = por %p89, %p90
    %p92 = scmp.ne.s32.totalorder %s83, %s84
    %p93 = scmp.eq.s32.totalorder %s17, 0
    %p94 = por %p92, %p93
    %p95 = scmp.ne.s32.totalorder %s83, %s84
    %p96 = scmp.eq.s32.totalorder %s18, 1
    %p97 = por %p95, %p96
    %p99 = scmp.ne.s32.totalorder %s84, %s98
    %p100 = scmp.eq.s32.totalorder %s18, 0
    %p101 = por %p99, %p100
    %s102 = ssub.s32 %s19, %s31
    %s103 = ssub.s32 %s20, %s27
    %s104 = sor.u32 %s102, %s103
    %p105 = scmp.eq.s32.totalorder %s104, 0
    %s107 = sadd.s32 %s106, 1
    %s108 = scalar_select %p105, %s106, %s107
    %p111 = pneg %p105
    %p112 = scmp.eq.s32.totalorder %s12, 1
    %p113 = por %p111, %p112
    %p114 = scmp.ne.s32.totalorder %s106, %s109
    %p115 = scmp.eq.s32.totalorder %s12, 0
    %p116 = por %p114, %p115
    %p117 = scmp.ne.s32.totalorder %s106, %s109
    %p118 = scmp.eq.s32.totalorder %s17, 1
    %p119 = por %p117, %p118
    %p120 = scmp.ne.s32.totalorder %s109, %s110
    %p121 = scmp.eq.s32.totalorder %s17, 0
    %p122 = por %p120, %p121
    %p123 = scmp.ne.s32.totalorder %s109, %s110
    %p124 = scmp.eq.s32.totalorder %s18, 1
    %p125 = por %p123, %p124
    %p127 = scmp.ne.s32.totalorder %s110, %s126
    %p128 = scmp.eq.s32.totalorder %s18, 0
    %p129 = por %p127, %p128
    %s130 = sadd.s32 %s19, %s20
    %s131 = sadd.s32 %s31, %s27
    %s132 = ssub.s32 %s130, %s131
    %p133 = scmp.eq.s32.totalorder %s132, 0
    %s135 = sadd.s32 %s134, 1
    %s136 = scalar_select %p133, %s134, %s135
    %p139 = pneg %p133
    %p140 = scmp.eq.s32.totalorder %s12, 1
    %p141 = por %p139, %p140
    %p142 = scmp.ne.s32.totalorder %s134, %s137
    %p143 = scmp.eq.s32.totalorder %s12, 0
    %p144 = por %p142, %p143
    %p145 = scmp.ne.s32.totalorder %s134, %s137
    %p146 = scmp.eq.s32.totalorder %s17, 1
    %p147 = por %p145, %p146
    %p148 = scmp.ne.s32.totalorder %s137, %s138
    %p149 = scmp.eq.s32.totalorder %s17, 0
    %p150 = por %p148, %p149
    %p151 = scmp.ne.s32.totalorder %s137, %s138
    %p152 = scmp.eq.s32.totalorder %s18, 1
    %p153 = por %p151, %p152
    %p155 = scmp.ne.s32.totalorder %s138, %s154
    %p156 = scmp.eq.s32.totalorder %s18, 0
    %p157 = por %p155, %p156
    %s158 = sadd.s32 %s19, %s20
    %s159 = sadd.s32 %s31, %s27
    %s160 = ssub.s32 %s158, %s159
    %p161 = scmp.eq.s32.totalorder %s160, 0
    %s163 = sadd.s32 %s162, 1
    %s164 = scalar_select %p161, %s162, %s163
    %p167 = pneg %p161
    %p168 = scmp.eq.s32.totalorder %s12, 1
    %p169 = por %p167, %p168
    %p170 = scmp.ne.s32.totalorder %s162, %s165
    %p171 = scmp.eq.s32.totalorder %s12, 0
    %p172 = por %p170, %p171
    %p173 = scmp.ne.s32.totalorder %s162, %s165
    %p174 = scmp.eq.s32.totalorder %s17, 1
    %p175 = por %p173, %p174
    %p176 = scmp.ne.s32.totalorder %s165, %s166
    %p177 = scmp.eq.s32.totalorder %s17, 0
    %p178 = por %p176, %p177
    %p179 = scmp.ne.s32.totalorder %s165, %s166
    %p180 = scmp.eq.s32.totalorder %s18, 1
    %p181 = por %p179, %p180
    %p183 = scmp.ne.s32.totalorder %s166, %s182
    %p184 = scmp.eq.s32.totalorder %s18, 0
    %p185 = por %p183, %p184
    %p186 = scmp.le.s32.totalorder 1, %s12
    %p187 = scmp.lt.s32.totalorder %s12, 3
    %p188 = pnand %p186, %p187
    %p189 = pneg %p188
    // Predicated region
    $region9: #{decoder_forward.7} parent=5 // pred_check
      _
    $region10: #{decoder_forward.7} parent=5 // pred_check_branch
      %191 = sbr.rel (%p188) target = $region12
    $region11: #{decoder_forward.7} parent=5 // pred_region
      %s192 = ssub.s32 %s12, 1
      // Predicated region
      $region13: #{decoder_forward.7} parent=11 // pred_check
        %p193 = pneg %p73
      $region14: #{decoder_forward.7} parent=11 // pred_check_branch
        %195 = sbr.rel (%p193) target = $region16
      $region15: #{decoder_forward.7} parent=11 // pred_region
        _
      $region16: #{decoder_forward.7} parent=11 // pred_fallthru
        _
      // Predicated region
      $region17: #{decoder_forward.7} parent=11 // pred_check
        %p196 = pneg %p94
      $region18: #{decoder_forward.7} parent=11 // pred_check_branch
        %198 = sbr.rel (%p196) target = $region20
      $region19: #{decoder_forward.7} parent=11 // pred_region
        _
      $region20: #{decoder_forward.7} parent=11 // pred_fallthru
        _
    $region12: #{decoder_forward.7} parent=5 // pred_fallthru
      _
    %p199 = scmp.lt.s32.totalorder %s12, 2
    // Predicated region
    $region21: #{decoder_forward.7} parent=5 // pred_check
      %p200 = pneg %p199
    $region22: #{decoder_forward.7} parent=5 // pred_check_branch
      %202 = sbr.rel (%p200) target = $region24
    $region23: #{decoder_forward.7} parent=5 // pred_region
      // Predicated region
      $region25: #{decoder_forward.7} parent=23 // pred_check
        %p203 = pneg %p46
      $region26: #{decoder_forward.7} parent=23 // pred_check_branch
        %205 = sbr.rel (%p203) target = $region28
      $region27: #{decoder_forward.7} parent=23 // pred_region
        %s206 = sadd.s32 %s19, %s20
        %p207 = scmp.lt.s32.totalorder %s206, 1
        %s208 = scalar_select %p207, %s206, 1
        %s209 = smul.addr %s208, 20
        %s210 = smul.addr %s209, 8
        %s211 = scalar_lea.vmem %s0, %s210
        %s212 = sadd.s32 %s19, %s20
      $region28: #{decoder_forward.7} parent=23 // pred_fallthru
        _
    $region24: #{decoder_forward.7} parent=5 // pred_fallthru
      _
    %p213 = scmp.le.s32.totalorder 1, %s12
    %p214 = scmp.lt.s32.totalorder %s12, 3
    %p215 = pnand %p213, %p214
    %p216 = pneg %p215
    // Predicated region
    $region29: #{decoder_forward.7} parent=5 // pred_check
      _
    $region30: #{decoder_forward.7} parent=5 // pred_check_branch
      %218 = sbr.rel (%p215) target = $region32
    $region31: #{decoder_forward.7} parent=5 // pred_region
      %s219 = ssub.s32 %s12, 1
      %s220 = sadd.s32 %s21, %s22
      %p221 = scmp.lt.s32.totalorder %s220, 1
      %s222 = scalar_select %p221, %s220, 1
      %s223 = smul.addr %s222, 20
      %s224 = smul.addr %s223, 8
      %s225 = scalar_lea.vmem %s0, %s224
      %p226 = pneg %p52
      %p227 = pneg %p49
      %p228 = pneg %p73
      %p229 = pneg %p70
      %p230 = pneg %p94
      %p231 = pneg %p91
      %p232 = pneg %p122
      %p233 = pneg %p119
      %s234 = smul.u32 8, %s22
      %p235 = scmp.lt.s32.totalorder %s21, 1
      %s236 = scalar_select %p235, %s21, 1
      %p237 = scmp.lt.s32.totalorder %s234, 7
      %s238 = scalar_select %p237, %s234, 7
      %s239 = smul.addr %s236, 8
      %s240 = sadd.s32 %s238, %s239
      %s241 = smul.addr %s240, 8
      %s242 = scalar_lea.vmem %s3, %s241
      %p243 = pneg %p150
      %p244 = pneg %p147
      %s245 = sadd.s32 %s21, %s22
      %p246 = scmp.lt.s32.totalorder %s245, 1
      %s247 = scalar_select %p246, %s245, 1
      %s248 = scalar_lea.vmem %s4, %s247
      %p249 = pneg %p178
      %p250 = pneg %p175
      %s251 = sadd.s32 %s21, %s22
      %p252 = scmp.lt.s32.totalorder %s251, 1
      %s253 = scalar_select %p252, %s251, 1
      %s254 = scalar_lea.vmem %s5, %s253
      %s255 = sadd.s32 %s21, %s22
      %p256 = scmp.lt.s32.totalorder %s255, 1
      %s257 = scalar_select %p256, %s255, 1
      %s258 = smul.addr %s257, 20
      %s259 = smul.addr %s258, 8
      %s260 = scalar_lea.vmem %s0, %s259
      %s261 = sadd.s32 %s21, %s22
      %s262 = smul.u32 8, %s22
      %p263 = scmp.lt.s32.totalorder %s21, 1
      %s264 = scalar_select %p263, %s21, 1
      %p265 = scmp.lt.s32.totalorder %s262, 7
      %s266 = scalar_select %p265, %s262, 7
      %s267 = smul.addr %s264, 8
      %s268 = sadd.s32 %s266, %s267
      %s269 = smul.addr %s268, 8
      %s270 = scalar_lea.vmem %s3, %s269
      %s271 = smul.u32 8, %s22
      %s272 = sadd.s32 %s21, %s22
      %p273 = scmp.lt.s32.totalorder %s272, 1
      %s274 = scalar_select %p273, %s272, 1
      %s275 = scalar_lea.vmem %s4, %s274
      %s276 = sadd.s32 %s21, %s22
      %s277 = sadd.s32 %s21, %s22
      %p278 = scmp.lt.s32.totalorder %s277, 1
      %s279 = scalar_select %p278, %s277, 1
      %s280 = scalar_lea.vmem %s5, %s279
      %s281 = sadd.s32 %s21, %s22
      %v282 = vld [vmem:[%s260] sm:$0xff]
      %v283 = vld [vmem:[%s260 + $0x10] sm:$0xff]
      %v284 = vld [vmem:[%s260 + $0x20] sm:$0xff]
      %v285 = vld [vmem:[%s260 + $0x30] sm:$0xff]
      %v286 = vld [vmem:[%s260 + $0x40] sm:$0xff]
      %v287 = vld [vmem:[%s260 + $0x50] sm:$0xff]
      %v288 = vld [vmem:[%s260 + $0x60] sm:$0xff]
      %v289 = vld [vmem:[%s260 + $0x70] sm:$0xff]
      %v290 = vld [vmem:[%s260 + $0x1] sm:$0xff]
      %v291 = vld [vmem:[%s260 + $0x11] sm:$0xff]
      %v292 = vld [vmem:[%s260 + $0x21] sm:$0xff]
      %v293 = vld [vmem:[%s260 + $0x31] sm:$0xff]
      %v294 = vld [vmem:[%s260 + $0x41] sm:$0xff]
      %v295 = vld [vmem:[%s260 + $0x51] sm:$0xff]
      %v296 = vld [vmem:[%s260 + $0x61] sm:$0xff]
      %v297 = vld [vmem:[%s260 + $0x71] sm:$0xff]
      %v298 = vld [vmem:[%s260 + $0x2] sm:$0xff]
      %v299 = vld [vmem:[%s260 + $0x12] sm:$0xff]
      %v300 = vld [vmem:[%s260 + $0x22] sm:$0xff]
      %v301 = vld [vmem:[%s260 + $0x32] sm:$0xff]
      %v302 = vld [vmem:[%s260 + $0x42] sm:$0xff]
      %v303 = vld [vmem:[%s260 + $0x52] sm:$0xff]
      %v304 = vld [vmem:[%s260 + $0x62] sm:$0xff]
      %v305 = vld [vmem:[%s260 + $0x72] sm:$0xff]
      %s306 = scalar_lea.vmem %s260, 16
      %v307 = vld [vmem:[%s306] sm:$0xff]
      %v308 = vld [vmem:[%s306 + $0x10] sm:$0xff]
      %v309 = vld [vmem:[%s306 + $0x20] sm:$0xff]
      %v310 = vld [vmem:[%s306 + $0x30] sm:$0xff]
      %v311 = vld [vmem:[%s306 + $0x40] sm:$0xff]
      %v312 = vld [vmem:[%s306 + $0x50] sm:$0xff]
      %v313 = vld [vmem:[%s306 + $0x60] sm:$0xff]
      %v314 = vld [vmem:[%s306 + $0x70] sm:$0xff]
      %v315 = vld [vmem:[%s306 + $0x1] sm:$0xff]
      %v316 = vld [vmem:[%s306 + $0x11] sm:$0xff]
      %v317 = vld [vmem:[%s306 + $0x21] sm:$0xff]
      %v318 = vld [vmem:[%s306 + $0x31] sm:$0xff]
      %v319 = vld [vmem:[%s306 + $0x41] sm:$0xff]
      %v320 = vld [vmem:[%s306 + $0x51] sm:$0xff]
      %v321 = vld [vmem:[%s306 + $0x61] sm:$0xff]
      %v322 = vld [vmem:[%s306 + $0x71] sm:$0xff]
      %v323 = vld [vmem:[%s306 + $0x2] sm:$0xff]
      %v324 = vld [vmem:[%s306 + $0x12] sm:$0xff]
      %v325 = vld [vmem:[%s306 + $0x22] sm:$0xff]
      %v326 = vld [vmem:[%s306 + $0x32] sm:$0xff]
      %v327 = vld [vmem:[%s306 + $0x42] sm:$0xff]
      %v328 = vld [vmem:[%s306 + $0x52] sm:$0xff]
      %v329 = vld [vmem:[%s306 + $0x62] sm:$0xff]
      %v330 = vld [vmem:[%s306 + $0x72] sm:$0xff]
      %s331 = scalar_lea.vmem %s260, 32
      %v332 = vld [vmem:[%s331] sm:$0xff]
      %v333 = vld [vmem:[%s331 + $0x10] sm:$0xff]
      %v334 = vld [vmem:[%s331 + $0x20] sm:$0xff]
      %v335 = vld [vmem:[%s331 + $0x30] sm:$0xff]
      %v336 = vld [vmem:[%s331 + $0x40] sm:$0xff]
      %v337 = vld [vmem:[%s331 + $0x50] sm:$0xff]
      %v338 = vld [vmem:[%s331 + $0x60] sm:$0xff]
      %v339 = vld [vmem:[%s331 + $0x70] sm:$0xff]
      %v340 = vld [vmem:[%s331 + $0x1] sm:$0xff]
      %v341 = vld [vmem:[%s331 + $0x11] sm:$0xff]
      %v342 = vld [vmem:[%s331 + $0x21] sm:$0xff]
      %v343 = vld [vmem:[%s331 + $0x31] sm:$0xff]
      %v344 = vld [vmem:[%s331 + $0x41] sm:$0xff]
      %v345 = vld [vmem:[%s331 + $0x51] sm:$0xff]
      %v346 = vld [vmem:[%s331 + $0x61] sm:$0xff]
      %v347 = vld [vmem:[%s331 + $0x71] sm:$0xff]
      %v348 = vld [vmem:[%s331 + $0x2] sm:$0xff]
      %v349 = vld [vmem:[%s331 + $0x12] sm:$0xff]
      %v350 = vld [vmem:[%s331 + $0x22] sm:$0xff]
      %v351 = vld [vmem:[%s331 + $0x32] sm:$0xff]
      %v352 = vld [vmem:[%s331 + $0x42] sm:$0xff]
      %v353 = vld [vmem:[%s331 + $0x52] sm:$0xff]
      %v354 = vld [vmem:[%s331 + $0x62] sm:$0xff]
      %v355 = vld [vmem:[%s331 + $0x72] sm:$0xff]
      %364 = vrot.lane.b32.xlu0 %v290, 4
      %v365 = vpop.permute.xlu0 %364
      %366 = vrot.lane.b32.xlu0 %v291, 4
      %v367 = vpop.permute.xlu0 %366
      %368 = vrot.lane.b32.xlu0 %v292, 4
      %v369 = vpop.permute.xlu0 %368
      %370 = vrot.lane.b32.xlu0 %v293, 4
      %v371 = vpop.permute.xlu0 %370
      %372 = vrot.lane.b32.xlu0 %v294, 4
      %v373 = vpop.permute.xlu0 %372
      %374 = vrot.lane.b32.xlu0 %v295, 4
      %v375 = vpop.permute.xlu0 %374
      %376 = vrot.lane.b32.xlu0 %v296, 4
      %v377 = vpop.permute.xlu0 %376
      %378 = vrot.lane.b32.xlu0 %v297, 4
      %v379 = vpop.permute.xlu0 %378
      %396 = vrot.lane.b32.xlu0 %v298, 8
      %v397 = vpop.permute.xlu0 %396
      %398 = vrot.lane.b32.xlu0 %v299, 8
      %v399 = vpop.permute.xlu0 %398
      %400 = vrot.lane.b32.xlu0 %v300, 8
      %v401 = vpop.permute.xlu0 %400
      %402 = vrot.lane.b32.xlu0 %v301, 8
      %v403 = vpop.permute.xlu0 %402
      %404 = vrot.lane.b32.xlu0 %v302, 8
      %v405 = vpop.permute.xlu0 %404
      %406 = vrot.lane.b32.xlu0 %v303, 8
      %v407 = vpop.permute.xlu0 %406
      %408 = vrot.lane.b32.xlu0 %v304, 8
      %v409 = vpop.permute.xlu0 %408
      %410 = vrot.lane.b32.xlu0 %v305, 8
      %v411 = vpop.permute.xlu0 %410
      %428 = vrot.lane.b32.xlu0 %v307, 12
      %v429 = vpop.permute.xlu0 %428
      %430 = vrot.lane.b32.xlu0 %v308, 12
      %v431 = vpop.permute.xlu0 %430
      %432 = vrot.lane.b32.xlu0 %v309, 12
      %v433 = vpop.permute.xlu0 %432
      %434 = vrot.lane.b32.xlu0 %v310, 12
      %v435 = vpop.permute.xlu0 %434
      %436 = vrot.lane.b32.xlu0 %v311, 12
      %v437 = vpop.permute.xlu0 %436
      %438 = vrot.lane.b32.xlu0 %v312, 12
      %v439 = vpop.permute.xlu0 %438
      %440 = vrot.lane.b32.xlu0 %v313, 12
      %v441 = vpop.permute.xlu0 %440
      %442 = vrot.lane.b32.xlu0 %v314, 12
      %v443 = vpop.permute.xlu0 %442
      %460 = vrot.lane.b32.xlu0 %v315, 16
      %v461 = vpop.permute.xlu0 %460
      %462 = vrot.lane.b32.xlu0 %v316, 16
      %v463 = vpop.permute.xlu0 %462
      %464 = vrot.lane.b32.xlu0 %v317, 16
      %v465 = vpop.permute.xlu0 %464
      %466 = vrot.lane.b32.xlu0 %v318, 16
      %v467 = vpop.permute.xlu0 %466
      %468 = vrot.lane.b32.xlu0 %v319, 16
      %v469 = vpop.permute.xlu0 %468
      %470 = vrot.lane.b32.xlu0 %v320, 16
      %v471 = vpop.permute.xlu0 %470
      %472 = vrot.lane.b32.xlu0 %v321, 16
      %v473 = vpop.permute.xlu0 %472
      %474 = vrot.lane.b32.xlu0 %v322, 16
      %v475 = vpop.permute.xlu0 %474
      %492 = vrot.lane.b32.xlu0 %v323, 20
      %v493 = vpop.permute.xlu0 %492
      %494 = vrot.lane.b32.xlu0 %v324, 20
      %v495 = vpop.permute.xlu0 %494
      %496 = vrot.lane.b32.xlu0 %v325, 20
      %v497 = vpop.permute.xlu0 %496
      %498 = vrot.lane.b32.xlu0 %v326, 20
      %v499 = vpop.permute.xlu0 %498
      %500 = vrot.lane.b32.xlu0 %v327, 20
      %v501 = vpop.permute.xlu0 %500
      %502 = vrot.lane.b32.xlu0 %v328, 20
      %v503 = vpop.permute.xlu0 %502
      %504 = vrot.lane.b32.xlu0 %v329, 20
      %v505 = vpop.permute.xlu0 %504
      %506 = vrot.lane.b32.xlu0 %v330, 20
      %v507 = vpop.permute.xlu0 %506
      %524 = vrot.lane.b32.xlu0 %v332, 24
      %v525 = vpop.permute.xlu0 %524
      %526 = vrot.lane.b32.xlu0 %v333, 24
      %v527 = vpop.permute.xlu0 %526
      %528 = vrot.lane.b32.xlu0 %v334, 24
      %v529 = vpop.permute.xlu0 %528
      %530 = vrot.lane.b32.xlu0 %v335, 24
      %v531 = vpop.permute.xlu0 %530
      %532 = vrot.lane.b32.xlu0 %v336, 24
      %v533 = vpop.permute.xlu0 %532
      %534 = vrot.lane.b32.xlu0 %v337, 24
      %v535 = vpop.permute.xlu0 %534
      %536 = vrot.lane.b32.xlu0 %v338, 24
      %v537 = vpop.permute.xlu0 %536
      %538 = vrot.lane.b32.xlu0 %v339, 24
      %v539 = vpop.permute.xlu0 %538
      %556 = vrot.lane.b32.xlu0 %v340, 28
      %v557 = vpop.permute.xlu0 %556
      %558 = vrot.lane.b32.xlu0 %v341, 28
      %v559 = vpop.permute.xlu0 %558
      %560 = vrot.lane.b32.xlu0 %v342, 28
      %v561 = vpop.permute.xlu0 %560
      %562 = vrot.lane.b32.xlu0 %v343, 28
      %v563 = vpop.permute.xlu0 %562
      %564 = vrot.lane.b32.xlu0 %v344, 28
      %v565 = vpop.permute.xlu0 %564
      %566 = vrot.lane.b32.xlu0 %v345, 28
      %v567 = vpop.permute.xlu0 %566
      %568 = vrot.lane.b32.xlu0 %v346, 28
      %v569 = vpop.permute.xlu0 %568
      %570 = vrot.lane.b32.xlu0 %v347, 28
      %v571 = vpop.permute.xlu0 %570
      %588 = vrot.lane.b32.xlu0 %v348, 32
      %v589 = vpop.permute.xlu0 %588
      %590 = vrot.lane.b32.xlu0 %v349, 32
      %v591 = vpop.permute.xlu0 %590
      %592 = vrot.lane.b32.xlu0 %v350, 32
      %v593 = vpop.permute.xlu0 %592
      %594 = vrot.lane.b32.xlu0 %v351, 32
      %v595 = vpop.permute.xlu0 %594
      %596 = vrot.lane.b32.xlu0 %v352, 32
      %v597 = vpop.permute.xlu0 %596
      %598 = vrot.lane.b32.xlu0 %v353, 32
      %v599 = vpop.permute.xlu0 %598
      %600 = vrot.lane.b32.xlu0 %v354, 32
      %v601 = vpop.permute.xlu0 %600
      %602 = vrot.lane.b32.xlu0 %v355, 32
      %v603 = vpop.permute.xlu0 %602
      %vm612 = vcmask 31744
      %v613 = vsel %vm612, %v282, %v365
      %v614 = vsel %vm612, %v283, %v367
      %v615 = vsel %vm612, %v284, %v369
      %v616 = vsel %vm612, %v285, %v371
      %v617 = vsel %vm612, %v286, %v373
      %v618 = vsel %vm612, %v287, %v375
      %v619 = vsel %vm612, %v288, %v377
      %v620 = vsel %vm612, %v289, %v379
      %vm621 = vcmask 64512
      %v622 = vsel %vm621, %v613, %v397
      %v623 = vsel %vm621, %v614, %v399
      %v624 = vsel %vm621, %v615, %v401
      %v625 = vsel %vm621, %v616, %v403
      %v626 = vsel %vm621, %v617, %v405
      %v627 = vsel %vm621, %v618, %v407
      %v628 = vsel %vm621, %v619, %v409
      %v629 = vsel %vm621, %v620, %v411
      %vm630 = vcmask 97280
      %v631 = vsel %vm630, %v622, %v429
      %v632 = vsel %vm630, %v623, %v431
      %v633 = vsel %vm630, %v624, %v433
      %v634 = vsel %vm630, %v625, %v435
      %v635 = vsel %vm630, %v626, %v437
      %v636 = vsel %vm630, %v627, %v439
      %v637 = vsel %vm630, %v628, %v441
      %v638 = vsel %vm630, %v629, %v443
      %vm639 = vcmask 130048
      %v640 = vsel %vm639, %v631, %v461
      %v641 = vsel %vm639, %v632, %v463
      %v642 = vsel %vm639, %v633, %v465
      %v643 = vsel %vm639, %v634, %v467
      %v644 = vsel %vm639, %v635, %v469
      %v645 = vsel %vm639, %v636, %v471
      %v646 = vsel %vm639, %v637, %v473
      %v647 = vsel %vm639, %v638, %v475
      %vm648 = vcmask 162816
      %v649 = vsel %vm648, %v640, %v493
      %v650 = vsel %vm648, %v641, %v495
      %v651 = vsel %vm648, %v642, %v497
      %v652 = vsel %vm648, %v643, %v499
      %v653 = vsel %vm648, %v644, %v501
      %v654 = vsel %vm648, %v645, %v503
      %v655 = vsel %vm648, %v646, %v505
      %v656 = vsel %vm648, %v647, %v507
      %vm657 = vcmask 195584
      %v658 = vsel %vm657, %v649, %v525
      %v659 = vsel %vm657, %v650, %v527
      %v660 = vsel %vm657, %v651, %v529
      %v661 = vsel %vm657, %v652, %v531
      %v662 = vsel %vm657, %v653, %v533
      %v663 = vsel %vm657, %v654, %v535
      %v664 = vsel %vm657, %v655, %v537
      %v665 = vsel %vm657, %v656, %v539
      %vm666 = vcmask 228352
      %v667 = vsel %vm666, %v658, %v557
      %v668 = vsel %vm666, %v659, %v559
      %v669 = vsel %vm666, %v660, %v561
      %v670 = vsel %vm666, %v661, %v563
      %v671 = vsel %vm666, %v662, %v565
      %v672 = vsel %vm666, %v663, %v567
      %v673 = vsel %vm666, %v664, %v569
      %v674 = vsel %vm666, %v665, %v571
      %vm675 = vcmask 261120
      %v676 = vsel %vm675, %v667, %v589
      %v677 = vsel %vm675, %v668, %v591
      %v678 = vsel %vm675, %v669, %v593
      %v679 = vsel %vm675, %v670, %v595
      %v680 = vsel %vm675, %v671, %v597
      %v681 = vsel %vm675, %v672, %v599
      %v682 = vsel %vm675, %v673, %v601
      %v683 = vsel %vm675, %v674, %v603
      %v684 = vld [vmem:[%s1] sm:$0xff]
      %v685 = vld [vmem:[%s1 + $0x8] sm:$0xff]
      %v686 = vld [vmem:[%s1 + $0x10] sm:$0xff]
      %v687 = vld [vmem:[%s1 + $0x18] sm:$0xff]
      %v688 = vld [vmem:[%s1 + $0x20] sm:$0xf]
      %v689 = vld [vmem:[%s2] sm:$0x1]
      %v691 = vlaneseq
      %v692 = vshrl.u32 %v691, 7
      %v693 = vsub.s32 0, %v692
      %v694 = vrot.slane %v689, %v693
      %vm696 = vcmask 293888
      %v698 = vsel %vm696, %v676, 0
      %v701 = vsel %vm696, %v677, 0
      %v704 = vsel %vm696, %v678, 0
      %v707 = vsel %vm696, %v679, 0
      %v710 = vsel %vm696, %v680, 0
      %v713 = vsel %vm696, %v681, 0
      %v716 = vsel %vm696, %v682, 0
      %v719 = vsel %vm696, %v683, 0
      %vm721 = vcmask 1043456
      %v723 = vsel %vm721, %v688, 0
      %725 = vmatprep.subr.mxu0 0.0
      %726 = vmatpush1.msra.mxu0 0.0
      %727 = vmatprep.subr.mxu0 0.0
      %728 = vmatpush1.msra.mxu0 0.0
      %729 = vmatprep.subr.mxu0 0.0
      %730 = vmatpush1.msra.mxu0 0.0
      %731 = vmatprep.subr.mxu0 0.0
      %732 = vmatpush1.msra.mxu0 0.0
      %733 = vmatprep.subr.mxu0 0.0
      %734 = vmatpush1.msra.mxu0 0.0
      %735 = vmatprep.subr.mxu0 0.0
      %736 = vmatpush1.msra.mxu0 0.0
      %737 = vmatprep.subr.mxu0 0.0
      %738 = vmatpush1.msra.mxu0 0.0
      %739 = vmatprep.subr.mxu0 0.0
      %740 = vmatpush1.msra.mxu0 0.0
      %741 = vmatprep.subr.mxu0 0.0
      %742 = vmatpush1.msra.mxu0 0.0
      %743 = vmatprep.subr.mxu0 0.0
      %744 = vmatpush1.msra.mxu0 0.0
      %745 = vmatprep.subr.mxu0 0.0
      %746 = vmatpush1.msra.mxu0 0.0
      %747 = vmatprep.subr.mxu0 0.0
      %748 = vmatpush1.msra.mxu0 %v723
      %749 = vmatprep.subr.mxu0 0.0
      %750 = vmatpush1.msra.mxu0 %v687
      %751 = vmatprep.subr.mxu0 0.0
      %752 = vmatpush1.msra.mxu0 %v686
      %753 = vmatprep.subr.mxu0 0.0
      %754 = vmatpush1.msra.mxu0 %v685
      %755 = vmatprep.subr.mxu0 0.0
      %756 = vmatpush1.msra.mxu0 %v684
      %757 = vmatprep.subr.mxu0 0.0
      %758 = vmatpush2.msra.mxu0 0.0
      %759 = vmatprep.subr.mxu0 0.0
      %760 = vmatpush2.msra.mxu0 0.0
      %761 = vmatprep.subr.mxu0 0.0
      %762 = vmatpush2.msra.mxu0 0.0
      %763 = vmatprep.subr.mxu0 0.0
      %764 = vmatpush2.msra.mxu0 0.0
      %765 = vmatprep.subr.mxu0 0.0
      %766 = vmatpush2.msra.mxu0 0.0
      %767 = vmatprep.subr.mxu0 0.0
      %768 = vmatpush2.msra.mxu0 0.0
      %769 = vmatprep.subr.mxu0 0.0
      %770 = vmatpush2.msra.mxu0 0.0
      %771 = vmatprep.subr.mxu0 0.0
      %772 = vmatpush2.msra.mxu0 0.0
      %773 = vmatprep.subr.mxu0 0.0
      %774 = vmatpush2.msra.mxu0 0.0
      %775 = vmatprep.subr.mxu0 0.0
      %776 = vmatpush2.msra.mxu0 0.0
      %777 = vmatprep.subr.mxu0 0.0
      %778 = vmatpush2.msra.mxu0 0.0
      %779 = vmatprep.subr.mxu0 0.0
      %780 = vmatpush2.msra.mxu0 0.0
      %781 = vmatprep.subr.mxu0 0.0
      %782 = vmatpush2.msra.mxu0 0.0
      %783 = vmatprep.subr.mxu0 0.0
      %784 = vmatpush2.msra.mxu0 0.0
      %785 = vmatprep.subr.mxu0 0.0
      %786 = vmatpush2.msra.mxu0 0.0
      %787 = vmatprep.subr.mxu0 0.0
      %788 = vmatpush2.msra.mxu0 0.0
      %789 = vmatprep.mubr.f32.mxu0 0.0
      %790 = vmatmul.mubr.f32.gmra.mxu0 %v698
      %v791 = vpop.f32.mrf.mxu0
      %v792 = vadd.f32 %v694, %v791
      %v793 = vpop.f32.mrf.mxu0
      %794 = vmatprep.mubr.f32.mxu0 0.0
      %795 = vmatmul.mubr.f32.gmra.mxu0 %v701
      %v796 = vpop.f32.mrf.mxu0
      %v797 = vadd.f32 %v694, %v796
      %v798 = vpop.f32.mrf.mxu0
      %799 = vmatprep.mubr.f32.mxu0 0.0
      %800 = vmatmul.mubr.f32.gmra.mxu0 %v704
      %v801 = vpop.f32.mrf.mxu0
      %v802 = vadd.f32 %v694, %v801
      %v803 = vpop.f32.mrf.mxu0
      %804 = vmatprep.mubr.f32.mxu0 0.0
      %805 = vmatmul.mubr.f32.gmra.mxu0 %v707
      %v806 = vpop.f32.mrf.mxu0
      %v807 = vadd.f32 %v694, %v806
      %v808 = vpop.f32.mrf.mxu0
      %809 = vmatprep.mubr.f32.mxu0 0.0
      %810 = vmatmul.mubr.f32.gmra.mxu0 %v710
      %v811 = vpop.f32.mrf.mxu0
      %v812 = vadd.f32 %v694, %v811
      %v813 = vpop.f32.mrf.mxu0
      %814 = vmatprep.mubr.f32.mxu0 0.0
      %815 = vmatmul.mubr.f32.gmra.mxu0 %v713
      %v816 = vpop.f32.mrf.mxu0
      %v817 = vadd.f32 %v694, %v816
      %v818 = vpop.f32.mrf.mxu0
      %819 = vmatprep.mubr.f32.mxu0 0.0
      %820 = vmatmul.mubr.f32.gmra.mxu0 %v716
      %v821 = vpop.f32.mrf.mxu0
      %v822 = vadd.f32 %v694, %v821
      %v823 = vpop.f32.mrf.mxu0
      %824 = vmatprep.mubr.f32.mxu0 0.0
      %825 = vmatmul.mubr.f32.gmra.mxu0 %v719
      %v826 = vpop.f32.mrf.mxu0
      %v827 = vadd.f32 %v694, %v826
      %v828 = vpop.f32.mrf.mxu0
      %829 = vdwg.mxu0
      %830 = vst.msk [vmem:[%s270] sm:$0xff] %vm612, %v792
      %831 = vst.msk [vmem:[%s270 + $0x8] sm:$0xff] %vm612, %v797
      %832 = vst.msk [vmem:[%s270 + $0x10] sm:$0xff] %vm612, %v802
      %833 = vst.msk [vmem:[%s270 + $0x18] sm:$0xff] %vm612, %v807
      %834 = vst.msk [vmem:[%s270 + $0x20] sm:$0xff] %vm612, %v812
      %835 = vst.msk [vmem:[%s270 + $0x28] sm:$0xff] %vm612, %v817
      %836 = vst.msk [vmem:[%s270 + $0x30] sm:$0xff] %vm612, %v822
      %837 = vst.msk [vmem:[%s270 + $0x38] sm:$0xff] %vm612, %v827
      %v838 = vsel %vm612, %v792, 0.0
      %v839 = vsel %vm612, %v797, 0.0
      %v840 = vadd.f32 %v838, %v839
      %v841 = vsel %vm612, %v802, 0.0
      %v842 = vadd.f32 %v840, %v841
      %v843 = vsel %vm612, %v807, 0.0
      %v844 = vadd.f32 %v842, %v843
      %v845 = vsel %vm612, %v812, 0.0
      %v846 = vadd.f32 %v844, %v845
      %v847 = vsel %vm612, %v817, 0.0
      %v848 = vadd.f32 %v846, %v847
      %v849 = vsel %vm612, %v822, 0.0
      %v850 = vadd.f32 %v848, %v849
      %v851 = vsel %vm612, %v827, 0.0
      %v852 = vadd.f32 %v850, %v851
      %v853 = vrot.slane %v852, 4
      %v854 = vadd.f32 %v852, %v853
      %v855 = vrot.slane %v854, 2
      %v856 = vadd.f32 %v854, %v855
      %v857 = vrot.slane %v856, 1
      %v858 = vadd.f32 %v856, %v857
      %vm859 = vcmask 24576
      %860 = vst.msk [vmem:[%s275] sm:$0x1] %vm859, %v858
      %v861 = vmul.f32 %v792, %v792
      %v862 = vmul.f32 %v797, %v797
      %v863 = vmul.f32 %v802, %v802
      %v864 = vmul.f32 %v807, %v807
      %v865 = vmul.f32 %v812, %v812
      %v866 = vmul.f32 %v817, %v817
      %v867 = vmul.f32 %v822, %v822
      %v868 = vmul.f32 %v827, %v827
      %v869 = vsel %vm612, %v861, 0.0
      %v870 = vsel %vm612, %v862, 0.0
      %v871 = vadd.f32 %v869, %v870
      %v872 = vsel %vm612, %v863, 0.0
      %v873 = vadd.f32 %v871, %v872
      %v874 = vsel %vm612, %v864, 0.0
      %v875 = vadd.f32 %v873, %v874
      %v876 = vsel %vm612, %v865, 0.0
      %v877 = vadd.f32 %v875, %v876
      %v878 = vsel %vm612, %v866, 0.0
      %v879 = vadd.f32 %v877, %v878
      %v880 = vsel %vm612, %v867, 0.0
      %v881 = vadd.f32 %v879, %v880
      %v882 = vsel %vm612, %v868, 0.0
      %v883 = vadd.f32 %v881, %v882
      %v884 = vrot.slane %v883, 4
      %v885 = vadd.f32 %v883, %v884
      %v886 = vrot.slane %v885, 2
      %v887 = vadd.f32 %v885, %v886
      %v888 = vrot.slane %v887, 1
      %v889 = vadd.f32 %v887, %v888
      %890 = vst.msk [vmem:[%s280] sm:$0x1] %vm859, %v889
      %s891 = smul.u32 8, %s22
      %p892 = scmp.lt.s32.totalorder %s21, 1
      %s893 = scalar_select %p892, %s21, 1
      %p894 = scmp.lt.s32.totalorder %s891, 7
      %s895 = scalar_select %p894, %s891, 7
      %s896 = smul.addr %s893, 8
      %s897 = sadd.s32 %s895, %s896
      %s898 = smul.addr %s897, 8
      %s899 = scalar_lea.vmem %s3, %s898
      %s900 = sadd.s32 %s21, %s22
      %p901 = scmp.lt.s32.totalorder %s900, 1
      %s902 = scalar_select %p901, %s900, 1
      %s903 = scalar_lea.vmem %s4, %s902
      %s904 = sadd.s32 %s21, %s22
      %p905 = scmp.lt.s32.totalorder %s904, 1
      %s906 = scalar_select %p905, %s904, 1
      %s907 = scalar_lea.vmem %s5, %s906
      // Predicated region
      $region33: #{decoder_forward.7} parent=31 // pred_check
        %p908 = pneg %p119
      $region34: #{decoder_forward.7} parent=31 // pred_check_branch
        %910 = sbr.rel (%p908) target = $region36
      $region35: #{decoder_forward.7} parent=31 // pred_region
        %s911 = smul.u32 8, %s22
      $region36: #{decoder_forward.7} parent=31 // pred_fallthru
        _
      // Predicated region
      $region37: #{decoder_forward.7} parent=31 // pred_check
        %p912 = pneg %p147
      $region38: #{decoder_forward.7} parent=31 // pred_check_branch
        %914 = sbr.rel (%p912) target = $region40
      $region39: #{decoder_forward.7} parent=31 // pred_region
        %s915 = sadd.s32 %s21, %s22
      $region40: #{decoder_forward.7} parent=31 // pred_fallthru
        _
      // Predicated region
      $region41: #{decoder_forward.7} parent=31 // pred_check
        %p916 = pneg %p175
      $region42: #{decoder_forward.7} parent=31 // pred_check_branch
        %918 = sbr.rel (%p916) target = $region44
      $region43: #{decoder_forward.7} parent=31 // pred_region
        %s919 = sadd.s32 %s21, %s22
      $region44: #{decoder_forward.7} parent=31 // pred_fallthru
        _
    $region32: #{decoder_forward.7} parent=5 // pred_fallthru
      _
    %p920 = scmp.le.s32.totalorder 2, %s12
    // Predicated region
    $region45: #{decoder_forward.7} parent=5 // pred_check
      %p921 = pneg %p920
    $region46: #{decoder_forward.7} parent=5 // pred_check_branch
      %923 = sbr.rel (%p921) target = $region48
    $region47: #{decoder_forward.7} parent=5 // pred_region
      %s924 = ssub.s32 %s12, 2
      // Predicated region
      $region49: #{decoder_forward.7} parent=47 // pred_check
        %p925 = pneg %p125
      $region50: #{decoder_forward.7} parent=47 // pred_check_branch
        %927 = sbr.rel (%p925) target = $region52
      $region51: #{decoder_forward.7} parent=47 // pred_region
        %s928 = smul.u32 8, %s24
        %p929 = scmp.lt.s32.totalorder %s23, 1
        %s930 = scalar_select %p929, %s23, 1
        %p931 = scmp.lt.s32.totalorder %s928, 7
        %s932 = scalar_select %p931, %s928, 7
        %s933 = smul.addr %s930, 8
        %s934 = sadd.s32 %s932, %s933
        %s935 = smul.addr %s934, 8
        %s936 = scalar_lea.vmem %s3, %s935
      $region52: #{decoder_forward.7} parent=47 // pred_fallthru
        _
      // Predicated region
      $region53: #{decoder_forward.7} parent=47 // pred_check
        %p937 = pneg %p153
      $region54: #{decoder_forward.7} parent=47 // pred_check_branch
        %939 = sbr.rel (%p937) target = $region56
      $region55: #{decoder_forward.7} parent=47 // pred_region
        %s940 = sadd.s32 %s23, %s24
        %p941 = scmp.lt.s32.totalorder %s940, 1
        %s942 = scalar_select %p941, %s940, 1
        %s943 = scalar_lea.vmem %s4, %s942
      $region56: #{decoder_forward.7} parent=47 // pred_fallthru
        _
      // Predicated region
      $region57: #{decoder_forward.7} parent=47 // pred_check
        %p944 = pneg %p181
      $region58: #{decoder_forward.7} parent=47 // pred_check_branch
        %946 = sbr.rel (%p944) target = $region60
      $region59: #{decoder_forward.7} parent=47 // pred_region
        %s947 = sadd.s32 %s23, %s24
        %p948 = scmp.lt.s32.totalorder %s947, 1
        %s949 = scalar_select %p948, %s947, 1
        %s950 = scalar_lea.vmem %s5, %s949
      $region60: #{decoder_forward.7} parent=47 // pred_fallthru
        _
    $region48: #{decoder_forward.7} parent=5 // pred_fallthru
      _
  $region6: #{decoder_forward.7} parent=0 // loop_footer
    %s16 = sadd.s32 1, %s12
  $region7: #{decoder_forward.7} parent=0 // loop_footer_branch
    %11 = sbr.rel target = $region3
  $region8: #{decoder_forward.7} parent=0 // loop_exit
    _

// kernel: decoder_forward.11
$region0: #{decoder_forward.11}
  #allocation0 [shape = 'u32[]', space=smem, size = 0x4, offset = 0x4, fixed_abs, tag = 'smem constant byte address 0x4 - core index']
  #allocation1 [shape = 'u32[144,128]{1,0:T(1,128)}', space=vmem, size = 0x12000, scoped, tag = 'internal scratch']
  #allocation2 [shape = 'f32[1]{0:T(128)S(6)}', space=smem, size = 0x200, scoped, tag = 'scoped memory for decoder_forward.11']
  %s0 = inlined_call_operand.vmem [shape: f32[2,16,16,4], index: 0, kind: input, shape index: {}]
  %s1 = inlined_call_operand.vmem [shape: f32[1,4], index: 1, kind: input, shape index: {}]
  %s2 = inlined_call_operand.vmem [shape: f32[1,4], index: 2, kind: input, shape index: {}]
  %s3 = inlined_call_operand.<no memory space> [shape: f32[1], index: 3, kind: input, shape index: {}]
  %s4 = inlined_call_operand.vmem [shape: f32[2,32,16,8], index: 4, kind: input, shape index: {}]
  %s5 = inlined_call_operand.vmem [shape: f32[2,32,16,8], index: 5, kind: output, shape index: {}]
  %s6 = sld [smem:[#allocation0]]
  $region53: #{decoder_forward.11} parent=0
    _
  %s8 = ssub.s32 1, %s6
  %s9 = scalar_select 0, %s8, %s6
  %10 = sst [smem:[#allocation2]] %s3
  loop: start=0, step=1, limit=4
  $region2: #{decoder_forward.11} parent=0 // loop_pre_header
    _
  $region3: #{decoder_forward.11} parent=0 // loop_header
    %s12 = sphi 0, %s16
    %p13 = scmp.ge.s32.totalorder %s12, 4
    %s19 = sphi 0, %s31
    %s20 = sphi 0, %s27
    %s21 = sphi 0, %s19
    %s22 = sphi 0, %s20
    %s23 = sphi 0, %s21
    %s24 = sphi 0, %s22
    %s36 = sphi 0, %s38
    %s39 = sphi 0, %s36
    %s40 = sphi 0, %s39
    %s56 = sphi 0, %s40
    %s60 = sphi 0, %s60
    %s62 = sphi 0, %s60
    %s63 = sphi 0, %s62
    %s77 = sphi 0, %s63
    %s81 = sphi 0, %s81
    %s83 = sphi 0, %s81
    %s84 = sphi 0, %s83
    %s98 = sphi 0, %s84
    %s102 = sphi 0, %s102
    %s104 = sphi 0, %s102
    %s105 = sphi 0, %s104
    %s119 = sphi 0, %s105
    %s127 = sphi 0, %s129
    %s130 = sphi 0, %s127
    %s131 = sphi 0, %s130
    %s147 = sphi 0, %s131
    %s155 = sphi 0, %s157
    %s158 = sphi 0, %s155
    %s159 = sphi 0, %s158
    %s175 = sphi 0, %s159
  $region4: #{decoder_forward.11} parent=0 // loop_header_branch
    %15 = sbr.rel (%p13) target = $region8
  $region5: #{decoder_forward.11} parent=0 // loop_body
    %s17 = ssub.s32 %s12, 1
    %s18 = ssub.s32 %s12, 2
    %s25 = sadd.s32 1, %s20
    %p26 = scmp.ge.s32.totalorder %s25, 1
    %s27 = scalar_select %p26, 0, %s25
    %s28 = sadd.s32 1, %s19
    %s29 = scalar_select %p26, %s28, %s19
    %p30 = scmp.ge.s32.totalorder %s29, 2
    %s31 = scalar_select %p30, 0, %s29
    %s32 = ssub.s32 %s19, %s31
    %s33 = ssub.s32 %s20, %s27
    %s34 = sor.u32 %s32, %s33
    %p35 = scmp.eq.s32.totalorder %s34, 0
    %s37 = sadd.s32 %s36, 1
    %s38 = scalar_select %p35, %s36, %s37
    %p41 = pneg %p35
    %p42 = scmp.eq.s32.totalorder %s12, 1
    %p43 = por %p41, %p42
    %p44 = scmp.ne.s32.totalorder %s36, %s39
    %p45 = scmp.eq.s32.totalorder %s12, 0
    %p46 = por %p44, %p45
    %p47 = scmp.ne.s32.totalorder %s36, %s39
    %p48 = scmp.eq.s32.totalorder %s17, 1
    %p49 = por %p47, %p48
    %p50 = scmp.ne.s32.totalorder %s39, %s40
    %p51 = scmp.eq.s32.totalorder %s17, 0
    %p52 = por %p50, %p51
    %p53 = scmp.ne.s32.totalorder %s39, %s40
    %p54 = scmp.eq.s32.totalorder %s18, 1
    %p55 = por %p53, %p54
    %p57 = scmp.ne.s32.totalorder %s40, %s56
    %p58 = scmp.eq.s32.totalorder %s18, 0
    %p59 = por %p57, %p58
    %s61 = sadd.s32 %s60, 1
    %p64 = scmp.eq.s32.totalorder %s12, 1
    %p65 = scmp.ne.s32.totalorder %s60, %s62
    %p66 = scmp.eq.s32.totalorder %s12, 0
    %p67 = por %p65, %p66
    %p68 = scmp.ne.s32.totalorder %s60, %s62
    %p69 = scmp.eq.s32.totalorder %s17, 1
    %p70 = por %p68, %p69
    %p71 = scmp.ne.s32.totalorder %s62, %s63
    %p72 = scmp.eq.s32.totalorder %s17, 0
    %p73 = por %p71, %p72
    %p74 = scmp.ne.s32.totalorder %s62, %s63
    %p75 = scmp.eq.s32.totalorder %s18, 1
    %p76 = por %p74, %p75
    %p78 = scmp.ne.s32.totalorder %s63, %s77
    %p79 = scmp.eq.s32.totalorder %s18, 0
    %p80 = por %p78, %p79
    %s82 = sadd.s32 %s81, 1
    %p85 = scmp.eq.s32.totalorder %s12, 1
    %p86 = scmp.ne.s32.totalorder %s81, %s83
    %p87 = scmp.eq.s32.totalorder %s12, 0
    %p88 = por %p86, %p87
    %p89 = scmp.ne.s32.totalorder %s81, %s83
    %p90 = scmp.eq.s32.totalorder %s17, 1
    %p91 = por %p89, %p90
    %p92 = scmp.ne.s32.totalorder %s83, %s84
    %p93 = scmp.eq.s32.totalorder %s17, 0
    %p94 = por %p92, %p93
    %p95 = scmp.ne.s32.totalorder %s83, %s84
    %p96 = scmp.eq.s32.totalorder %s18, 1
    %p97 = por %p95, %p96
    %p99 = scmp.ne.s32.totalorder %s84, %s98
    %p100 = scmp.eq.s32.totalorder %s18, 0
    %p101 = por %p99, %p100
    %s103 = sadd.s32 %s102, 1
    %p106 = scmp.eq.s32.totalorder %s12, 1
    %p107 = scmp.ne.s32.totalorder %s102, %s104
    %p108 = scmp.eq.s32.totalorder %s12, 0
    %p109 = por %p107, %p108
    %p110 = scmp.ne.s32.totalorder %s102, %s104
    %p111 = scmp.eq.s32.totalorder %s17, 1
    %p112 = por %p110, %p111
    %p113 = scmp.ne.s32.totalorder %s104, %s105
    %p114 = scmp.eq.s32.totalorder %s17, 0
    %p115 = por %p113, %p114
    %p116 = scmp.ne.s32.totalorder %s104, %s105
    %p117 = scmp.eq.s32.totalorder %s18, 1
    %p118 = por %p116, %p117
    %p120 = scmp.ne.s32.totalorder %s105, %s119
    %p121 = scmp.eq.s32.totalorder %s18, 0
    %p122 = por %p120, %p121
    %s123 = ssub.s32 %s19, %s31
    %s124 = ssub.s32 %s20, %s27
    %s125 = sor.u32 %s123, %s124
    %p126 = scmp.eq.s32.totalorder %s125, 0
    %s128 = sadd.s32 %s127, 1
    %s129 = scalar_select %p126, %s127, %s128
    %p132 = pneg %p126
    %p133 = scmp.eq.s32.totalorder %s12, 1
    %p134 = por %p132, %p133
    %p135 = scmp.ne.s32.totalorder %s127, %s130
    %p136 = scmp.eq.s32.totalorder %s12, 0
    %p137 = por %p135, %p136
    %p138 = scmp.ne.s32.totalorder %s127, %s130
    %p139 = scmp.eq.s32.totalorder %s17, 1
    %p140 = por %p138, %p139
    %p141 = scmp.ne.s32.totalorder %s130, %s131
    %p142 = scmp.eq.s32.totalorder %s17, 0
    %p143 = por %p141, %p142
    %p144 = scmp.ne.s32.totalorder %s130, %s131
    %p145 = scmp.eq.s32.totalorder %s18, 1
    %p146 = por %p144, %p145
    %p148 = scmp.ne.s32.totalorder %s131, %s147
    %p149 = scmp.eq.s32.totalorder %s18, 0
    %p150 = por %p148, %p149
    %s151 = ssub.s32 %s19, %s31
    %s152 = ssub.s32 %s20, %s27
    %s153 = sor.u32 %s151, %s152
    %p154 = scmp.eq.s32.totalorder %s153, 0
    %s156 = sadd.s32 %s155, 1
    %s157 = scalar_select %p154, %s155, %s156
    %p160 = pneg %p154
    %p161 = scmp.eq.s32.totalorder %s12, 1
    %p162 = por %p160, %p161
    %p163 = scmp.ne.s32.totalorder %s155, %s158
    %p164 = scmp.eq.s32.totalorder %s12, 0
    %p165 = por %p163, %p164
    %p166 = scmp.ne.s32.totalorder %s155, %s158
    %p167 = scmp.eq.s32.totalorder %s17, 1
    %p168 = por %p166, %p167
    %p169 = scmp.ne.s32.totalorder %s158, %s159
    %p170 = scmp.eq.s32.totalorder %s17, 0
    %p171 = por %p169, %p170
    %p172 = scmp.ne.s32.totalorder %s158, %s159
    %p173 = scmp.eq.s32.totalorder %s18, 1
    %p174 = por %p172, %p173
    %p176 = scmp.ne.s32.totalorder %s159, %s175
    %p177 = scmp.eq.s32.totalorder %s18, 0
    %p178 = por %p176, %p177
    %p179 = scmp.le.s32.totalorder 1, %s12
    %p180 = scmp.lt.s32.totalorder %s12, 3
    %p181 = pnand %p179, %p180
    %p182 = pneg %p181
    // Predicated region
    $region9: #{decoder_forward.11} parent=5 // pred_check
      _
    $region10: #{decoder_forward.11} parent=5 // pred_check_branch
      %184 = sbr.rel (%p181) target = $region12
    $region11: #{decoder_forward.11} parent=5 // pred_region
      %s185 = ssub.s32 %s12, 1
      // Predicated region
      $region13: #{decoder_forward.11} parent=11 // pred_check
        %p186 = pneg %p73
      $region14: #{decoder_forward.11} parent=11 // pred_check_branch
        %188 = sbr.rel (%p186) target = $region16
      $region15: #{decoder_forward.11} parent=11 // pred_region
        _
      $region16: #{decoder_forward.11} parent=11 // pred_fallthru
        _
      // Predicated region
      $region17: #{decoder_forward.11} parent=11 // pred_check
        %p189 = pneg %p94
      $region18: #{decoder_forward.11} parent=11 // pred_check_branch
        %191 = sbr.rel (%p189) target = $region20
      $region19: #{decoder_forward.11} parent=11 // pred_region
        _
      $region20: #{decoder_forward.11} parent=11 // pred_fallthru
        _
      // Predicated region
      $region21: #{decoder_forward.11} parent=11 // pred_check
        %p192 = pneg %p115
      $region22: #{decoder_forward.11} parent=11 // pred_check_branch
        %194 = sbr.rel (%p192) target = $region24
      $region23: #{decoder_forward.11} parent=11 // pred_region
        _
      $region24: #{decoder_forward.11} parent=11 // pred_fallthru
        _
    $region12: #{decoder_forward.11} parent=5 // pred_fallthru
      _
    %p195 = scmp.lt.s32.totalorder %s12, 2
    // Predicated region
    $region25: #{decoder_forward.11} parent=5 // pred_check
      %p196 = pneg %p195
    $region26: #{decoder_forward.11} parent=5 // pred_check_branch
      %198 = sbr.rel (%p196) target = $region28
    $region27: #{decoder_forward.11} parent=5 // pred_region
      // Predicated region
      $region29: #{decoder_forward.11} parent=27 // pred_check
        %p199 = pneg %p46
      $region30: #{decoder_forward.11} parent=27 // pred_check_branch
        %201 = sbr.rel (%p199) target = $region32
      $region31: #{decoder_forward.11} parent=27 // pred_region
        %s202 = smul.u32 16, %s20
        %p203 = scmp.lt.s32.totalorder %s19, 1
        %s204 = scalar_select %p203, %s19, 1
        %p205 = scmp.lt.s32.totalorder %s202, 15
        %s206 = scalar_select %p205, %s202, 15
        %s207 = smul.addr %s206, 2
        %s208 = smul.addr %s204, 32
        %s209 = sadd.s32 %s207, %s208
        %s210 = smul.addr %s209, 8
        %s211 = scalar_lea.vmem %s0, %s210
        %s212 = smul.u32 16, %s20
      $region32: #{decoder_forward.11} parent=27 // pred_fallthru
        _
      // Predicated region
      $region33: #{decoder_forward.11} parent=27 // pred_check
        %p213 = pneg %p137
      $region34: #{decoder_forward.11} parent=27 // pred_check_branch
        %215 = sbr.rel (%p213) target = $region36
      $region35: #{decoder_forward.11} parent=27 // pred_region
        %s216 = smul.u32 32, %s20
        %p217 = scmp.lt.s32.totalorder %s19, 1
        %s218 = scalar_select %p217, %s19, 1
        %p219 = scmp.lt.s32.totalorder %s216, 31
        %s220 = scalar_select %p219, %s216, 31
        %s221 = smul.addr %s220, 2
        %s222 = smul.addr %s218, 64
        %s223 = sadd.s32 %s221, %s222
        %s224 = smul.addr %s223, 8
        %s225 = scalar_lea.vmem %s4, %s224
        %s226 = smul.u32 32, %s20
      $region36: #{decoder_forward.11} parent=27 // pred_fallthru
        _
    $region28: #{decoder_forward.11} parent=5 // pred_fallthru
      _
    %p227 = scmp.le.s32.totalorder 1, %s12
    %p228 = scmp.lt.s32.totalorder %s12, 3
    %p229 = pnand %p227, %p228
    %p230 = pneg %p229
    // Predicated region
    $region37: #{decoder_forward.11} parent=5 // pred_check
      _
    $region38: #{decoder_forward.11} parent=5 // pred_check_branch
      %232 = sbr.rel (%p229) target = $region40
    $region39: #{decoder_forward.11} parent=5 // pred_region
      %s233 = ssub.s32 %s12, 1
      %s234 = smul.u32 16, %s22
      %p235 = scmp.lt.s32.totalorder %s21, 1
      %s236 = scalar_select %p235, %s21, 1
      %p237 = scmp.lt.s32.totalorder %s234, 15
      %s238 = scalar_select %p237, %s234, 15
      %s239 = smul.addr %s238, 2
      %s240 = smul.addr %s236, 32
      %s241 = sadd.s32 %s239, %s240
      %s242 = smul.addr %s241, 8
      %s243 = scalar_lea.vmem %s0, %s242
      %p244 = pneg %p52
      %p245 = pneg %p49
      %p246 = pneg %p73
      %p247 = pneg %p70
      %p248 = pneg %p94
      %p249 = pneg %p91
      %p250 = pneg %p115
      %p251 = pneg %p112
      %s252 = smul.u32 32, %s22
      %p253 = scmp.lt.s32.totalorder %s21, 1
      %s254 = scalar_select %p253, %s21, 1
      %p255 = scmp.lt.s32.totalorder %s252, 31
      %s256 = scalar_select %p255, %s252, 31
      %s257 = smul.addr %s256, 2
      %s258 = smul.addr %s254, 64
      %s259 = sadd.s32 %s257, %s258
      %s260 = smul.addr %s259, 8
      %s261 = scalar_lea.vmem %s4, %s260
      %p262 = pneg %p143
      %p263 = pneg %p140
      %p264 = pneg %p171
      %p265 = pneg %p168
      %s266 = smul.u32 32, %s22
      %p267 = scmp.lt.s32.totalorder %s21, 1
      %s268 = scalar_select %p267, %s21, 1
      %p269 = scmp.lt.s32.totalorder %s266, 31
      %s270 = scalar_select %p269, %s266, 31
      %s271 = smul.addr %s270, 2
      %s272 = smul.addr %s268, 64
      %s273 = sadd.s32 %s271, %s272
      %s274 = smul.addr %s273, 8
      %s275 = scalar_lea.vmem %s5, %s274
      %s276 = smul.u32 16, %s22
      %p277 = scmp.lt.s32.totalorder %s21, 1
      %s278 = scalar_select %p277, %s21, 1
      %p279 = scmp.lt.s32.totalorder %s276, 15
      %s280 = scalar_select %p279, %s276, 15
      %s281 = smul.addr %s280, 2
      %s282 = smul.addr %s278, 32
      %s283 = sadd.s32 %s281, %s282
      %s284 = smul.addr %s283, 8
      %s285 = scalar_lea.vmem %s0, %s284
      %s286 = smul.u32 16, %s22
      %s287 = smul.u32 32, %s22
      %p288 = scmp.lt.s32.totalorder %s21, 1
      %s289 = scalar_select %p288, %s21, 1
      %p290 = scmp.lt.s32.totalorder %s287, 31
      %s291 = scalar_select %p290, %s287, 31
      %s292 = smul.addr %s291, 2
      %s293 = smul.addr %s289, 64
      %s294 = sadd.s32 %s292, %s293
      %s295 = smul.addr %s294, 8
      %s296 = scalar_lea.vmem %s4, %s295
      %s297 = smul.u32 32, %s22
      %s298 = smul.u32 32, %s22
      %p299 = scmp.lt.s32.totalorder %s21, 1
      %s300 = scalar_select %p299, %s21, 1
      %p301 = scmp.lt.s32.totalorder %s298, 31
      %s302 = scalar_select %p301, %s298, 31
      %s303 = smul.addr %s302, 2
      %s304 = smul.addr %s300, 64
      %s305 = sadd.s32 %s303, %s304
      %s306 = smul.addr %s305, 8
      %s307 = scalar_lea.vmem %s5, %s306
      %s308 = smul.u32 32, %s22
      %v309 = vld [vmem:[%s285] sm:$0xff]
      %v310 = vld [vmem:[%s285 + $0x8] sm:$0xff]
      %v311 = vld [vmem:[%s285 + $0x10] sm:$0xff]
      %v312 = vld [vmem:[%s285 + $0x18] sm:$0xff]
      %v313 = vld [vmem:[%s285 + $0x20] sm:$0xff]
      %v314 = vld [vmem:[%s285 + $0x28] sm:$0xff]
      %v315 = vld [vmem:[%s285 + $0x30] sm:$0xff]
      %v316 = vld [vmem:[%s285 + $0x38] sm:$0xff]
      %v317 = vld [vmem:[%s285 + $0x40] sm:$0xff]
      %v318 = vld [vmem:[%s285 + $0x48] sm:$0xff]
      %v319 = vld [vmem:[%s285 + $0x50] sm:$0xff]
      %v320 = vld [vmem:[%s285 + $0x58] sm:$0xff]
      %v321 = vld [vmem:[%s285 + $0x60] sm:$0xff]
      %v322 = vld [vmem:[%s285 + $0x68] sm:$0xff]
      %v323 = vld [vmem:[%s285 + $0x70] sm:$0xff]
      %v324 = vld [vmem:[%s285 + $0x78] sm:$0xff]
      %v325 = vld [vmem:[%s285 + $0x80] sm:$0xff]
      %v326 = vld [vmem:[%s285 + $0x88] sm:$0xff]
      %v327 = vld [vmem:[%s285 + $0x90] sm:$0xff]
      %v328 = vld [vmem:[%s285 + $0x98] sm:$0xff]
      %v329 = vld [vmem:[%s285 + $0xa0] sm:$0xff]
      %v330 = vld [vmem:[%s285 + $0xa8] sm:$0xff]
      %v331 = vld [vmem:[%s285 + $0xb0] sm:$0xff]
      %v332 = vld [vmem:[%s285 + $0xb8] sm:$0xff]
      %v333 = vld [vmem:[%s285 + $0xc0] sm:$0xff]
      %v334 = vld [vmem:[%s285 + $0xc8] sm:$0xff]
      %v335 = vld [vmem:[%s285 + $0xd0] sm:$0xff]
      %v336 = vld [vmem:[%s285 + $0xd8] sm:$0xff]
      %v337 = vld [vmem:[%s285 + $0xe0] sm:$0xff]
      %v338 = vld [vmem:[%s285 + $0xe8] sm:$0xff]
      %v339 = vld [vmem:[%s285 + $0xf0] sm:$0xff]
      %v340 = vld [vmem:[%s285 + $0xf8] sm:$0xff]
      %v341 = vld [vmem:[%s1] sm:$0x1]
      %v343 = vlaneseq
      %v344 = vshrl.u32 %v343, 7
      %v345 = vsub.s32 0, %v344
      %v346 = vrot.slane %v341, %v345
      %v348 = vmul.f32 %v309, %v346
      %v349 = vmul.f32 %v310, %v346
      %v350 = vmul.f32 %v311, %v346
      %v351 = vmul.f32 %v312, %v346
      %v352 = vmul.f32 %v313, %v346
      %v353 = vmul.f32 %v314, %v346
      %v354 = vmul.f32 %v315, %v346
      %v355 = vmul.f32 %v316, %v346
      %v356 = vmul.f32 %v317, %v346
      %v357 = vmul.f32 %v318, %v346
      %v358 = vmul.f32 %v319, %v346
      %v359 = vmul.f32 %v320, %v346
      %v360 = vmul.f32 %v321, %v346
      %v361 = vmul.f32 %v322, %v346
      %v362 = vmul.f32 %v323, %v346
      %v363 = vmul.f32 %v324, %v346
      %v364 = vmul.f32 %v325, %v346
      %v365 = vmul.f32 %v326, %v346
      %v366 = vmul.f32 %v327, %v346
      %v367 = vmul.f32 %v328, %v346
      %v368 = vmul.f32 %v329, %v346
      %v369 = vmul.f32 %v330, %v346
      %v370 = vmul.f32 %v331, %v346
      %v371 = vmul.f32 %v332, %v346
      %v372 = vmul.f32 %v333, %v346
      %v373 = vmul.f32 %v334, %v346
      %v374 = vmul.f32 %v335, %v346
      %v375 = vmul.f32 %v336, %v346
      %v376 = vmul.f32 %v337, %v346
      %v377 = vmul.f32 %v338, %v346
      %v378 = vmul.f32 %v339, %v346
      %v379 = vmul.f32 %v340, %v346
      %v380 = vld [vmem:[%s2] sm:$0x1]
      %v382 = vlaneseq
      %v383 = vshrl.u32 %v382, 7
      %v384 = vsub.s32 0, %v383
      %v385 = vrot.slane %v380, %v384
      %v387 = vadd.f32 %v348, %v385
      %v388 = vadd.f32 %v349, %v385
      %v389 = vadd.f32 %v350, %v385
      %v390 = vadd.f32 %v351, %v385
      %v391 = vadd.f32 %v352, %v385
      %v392 = vadd.f32 %v353, %v385
      %v393 = vadd.f32 %v354, %v385
      %v394 = vadd.f32 %v355, %v385
      %v395 = vadd.f32 %v356, %v385
      %v396 = vadd.f32 %v357, %v385
      %v397 = vadd.f32 %v358, %v385
      %v398 = vadd.f32 %v359, %v385
      %v399 = vadd.f32 %v360, %v385
      %v400 = vadd.f32 %v361, %v385
      %v401 = vadd.f32 %v362, %v385
      %v402 = vadd.f32 %v363, %v385
      %v403 = vadd.f32 %v364, %v385
      %v404 = vadd.f32 %v365, %v385
      %v405 = vadd.f32 %v366, %v385
      %v406 = vadd.f32 %v367, %v385
      %v407 = vadd.f32 %v368, %v385
      %v408 = vadd.f32 %v369, %v385
      %v409 = vadd.f32 %v370, %v385
      %v410 = vadd.f32 %v371, %v385
      %v411 = vadd.f32 %v372, %v385
      %v412 = vadd.f32 %v373, %v385
      %v413 = vadd.f32 %v374, %v385
      %v414 = vadd.f32 %v375, %v385
      %v415 = vadd.f32 %v376, %v385
      %v416 = vadd.f32 %v377, %v385
      %v417 = vadd.f32 %v378, %v385
      %v418 = vadd.f32 %v379, %v385
      %s419 = sld [smem:[#allocation2]]
      %vm420 = vcmp.ge.f32.partialorder %v387, 0.0
      %vm421 = vcmp.ge.f32.partialorder %v388, 0.0
      %vm422 = vcmp.ge.f32.partialorder %v389, 0.0
      %vm423 = vcmp.ge.f32.partialorder %v390, 0.0
      %vm424 = vcmp.ge.f32.partialorder %v391, 0.0
      %vm425 = vcmp.ge.f32.partialorder %v392, 0.0
      %vm426 = vcmp.ge.f32.partialorder %v393, 0.0
      %vm427 = vcmp.ge.f32.partialorder %v394, 0.0
      %vm428 = vcmp.ge.f32.partialorder %v395, 0.0
      %vm429 = vcmp.ge.f32.partialorder %v396, 0.0
      %vm430 = vcmp.ge.f32.partialorder %v397, 0.0
      %vm431 = vcmp.ge.f32.partialorder %v398, 0.0
      %vm432 = vcmp.ge.f32.partialorder %v399, 0.0
      %vm433 = vcmp.ge.f32.partialorder %v400, 0.0
      %vm434 = vcmp.ge.f32.partialorder %v401, 0.0
      %vm435 = vcmp.ge.f32.partialorder %v402, 0.0
      %vm436 = vcmp.ge.f32.partialorder %v403, 0.0
      %vm437 = vcmp.ge.f32.partialorder %v404, 0.0
      %vm438 = vcmp.ge.f32.partialorder %v405, 0.0
      %vm439 = vcmp.ge.f32.partialorder %v406, 0.0
      %vm440 = vcmp.ge.f32.partialorder %v407, 0.0
      %vm441 = vcmp.ge.f32.partialorder %v408, 0.0
      %vm442 = vcmp.ge.f32.partialorder %v409, 0.0
      %vm443 = vcmp.ge.f32.partialorder %v410, 0.0
      %vm444 = vcmp.ge.f32.partialorder %v411, 0.0
      %vm445 = vcmp.ge.f32.partialorder %v412, 0.0
      %vm446 = vcmp.ge.f32.partialorder %v413, 0.0
      %vm447 = vcmp.ge.f32.partialorder %v414, 0.0
      %vm448 = vcmp.ge.f32.partialorder %v415, 0.0
      %vm449 = vcmp.ge.f32.partialorder %v416, 0.0
      %vm450 = vcmp.ge.f32.partialorder %v417, 0.0
      %vm451 = vcmp.ge.f32.partialorder %v418, 0.0
      %v452 = vstv %s419
      %v453 = vmul.f32 %v452, %v387
      %v454 = vmul.f32 %v452, %v388
      %v455 = vmul.f32 %v452, %v389
      %v456 = vmul.f32 %v452, %v390
      %v457 = vmul.f32 %v452, %v391
      %v458 = vmul.f32 %v452, %v392
      %v459 = vmul.f32 %v452, %v393
      %v460 = vmul.f32 %v452, %v394
      %v461 = vmul.f32 %v452, %v395
      %v462 = vmul.f32 %v452, %v396
      %v463 = vmul.f32 %v452, %v397
      %v464 = vmul.f32 %v452, %v398
      %v465 = vmul.f32 %v452, %v399
      %v466 = vmul.f32 %v452, %v400
      %v467 = vmul.f32 %v452, %v401
      %v468 = vmul.f32 %v452, %v402
      %v469 = vmul.f32 %v452, %v403
      %v470 = vmul.f32 %v452, %v404
      %v471 = vmul.f32 %v452, %v405
      %v472 = vmul.f32 %v452, %v406
      %v473 = vmul.f32 %v452, %v407
      %v474 = vmul.f32 %v452, %v408
      %v475 = vmul.f32 %v452, %v409
      %v476 = vmul.f32 %v452, %v410
      %v477 = vmul.f32 %v452, %v411
      %v478 = vmul.f32 %v452, %v412
      %v479 = vmul.f32 %v452, %v413
      %v480 = vmul.f32 %v452, %v414
      %v481 = vmul.f32 %v452, %v415
      %v482 = vmul.f32 %v452, %v416
      %v483 = vmul.f32 %v452, %v417
      %v484 = vmul.f32 %v452, %v418
      %v485 = vsel %vm420, %v387, %v453
      %v486 = vsel %vm421, %v388, %v454
      %v487 = vsel %vm422, %v389, %v455
      %v488 = vsel %vm423, %v390, %v456
      %v489 = vsel %vm424, %v391, %v457
      %v490 = vsel %vm425, %v392, %v458
      %v491 = vsel %vm426, %v393, %v459
      %v492 = vsel %vm427, %v394, %v460
      %v493 = vsel %vm428, %v395, %v461
      %v494 = vsel %vm429, %v396, %v462
      %v495 = vsel %vm430, %v397, %v463
      %v496 = vsel %vm431, %v398, %v464
      %v497 = vsel %vm432, %v399, %v465
      %v498 = vsel %vm433, %v400, %v466
      %v499 = vsel %vm434, %v401, %v467
      %v500 = vsel %vm435, %v402, %v468
      %v501 = vsel %vm436, %v403, %v469
      %v502 = vsel %vm437, %v404, %v470
      %v503 = vsel %vm438, %v405, %v471
      %v504 = vsel %vm439, %v406, %v472
      %v505 = vsel %vm440, %v407, %v473
      %v506 = vsel %vm441, %v408, %v474
      %v507 = vsel %vm442, %v409, %v475
      %v508 = vsel %vm443, %v410, %v476
      %v509 = vsel %vm444, %v411, %v477
      %v510 = vsel %vm445, %v412, %v478
      %v511 = vsel %vm446, %v413, %v479
      %v512 = vsel %vm447, %v414, %v480
      %v513 = vsel %vm448, %v415, %v481
      %v514 = vsel %vm449, %v416, %v482
      %v515 = vsel %vm450, %v417, %v483
      %v516 = vsel %vm451, %v418, %v484
      %549 = vrot.lane.b32.xlu0 %v485, 4
      %v550 = vpop.permute.xlu0 %549
      %551 = vrot.lane.b32.xlu0 %v486, 4
      %v552 = vpop.permute.xlu0 %551
      %553 = vrot.lane.b32.xlu0 %v487, 4
      %v554 = vpop.permute.xlu0 %553
      %555 = vrot.lane.b32.xlu0 %v488, 4
      %v556 = vpop.permute.xlu0 %555
      %557 = vrot.lane.b32.xlu0 %v489, 4
      %v558 = vpop.permute.xlu0 %557
      %559 = vrot.lane.b32.xlu0 %v490, 4
      %v560 = vpop.permute.xlu0 %559
      %561 = vrot.lane.b32.xlu0 %v491, 4
      %v562 = vpop.permute.xlu0 %561
      %563 = vrot.lane.b32.xlu0 %v492, 4
      %v564 = vpop.permute.xlu0 %563
      %565 = vrot.lane.b32.xlu0 %v493, 4
      %v566 = vpop.permute.xlu0 %565
      %567 = vrot.lane.b32.xlu0 %v494, 4
      %v568 = vpop.permute.xlu0 %567
      %569 = vrot.lane.b32.xlu0 %v495, 4
      %v570 = vpop.permute.xlu0 %569
      %571 = vrot.lane.b32.xlu0 %v496, 4
      %v572 = vpop.permute.xlu0 %571
      %573 = vrot.lane.b32.xlu0 %v497, 4
      %v574 = vpop.permute.xlu0 %573
      %575 = vrot.lane.b32.xlu0 %v498, 4
      %v576 = vpop.permute.xlu0 %575
      %577 = vrot.lane.b32.xlu0 %v499, 4
      %v578 = vpop.permute.xlu0 %577
      %579 = vrot.lane.b32.xlu0 %v500, 4
      %v580 = vpop.permute.xlu0 %579
      %581 = vrot.lane.b32.xlu0 %v501, 4
      %v582 = vpop.permute.xlu0 %581
      %583 = vrot.lane.b32.xlu0 %v502, 4
      %v584 = vpop.permute.xlu0 %583
      %585 = vrot.lane.b32.xlu0 %v503, 4
      %v586 = vpop.permute.xlu0 %585
      %587 = vrot.lane.b32.xlu0 %v504, 4
      %v588 = vpop.permute.xlu0 %587
      %589 = vrot.lane.b32.xlu0 %v505, 4
      %v590 = vpop.permute.xlu0 %589
      %591 = vrot.lane.b32.xlu0 %v506, 4
      %v592 = vpop.permute.xlu0 %591
      %593 = vrot.lane.b32.xlu0 %v507, 4
      %v594 = vpop.permute.xlu0 %593
      %595 = vrot.lane.b32.xlu0 %v508, 4
      %v596 = vpop.permute.xlu0 %595
      %597 = vrot.lane.b32.xlu0 %v509, 4
      %v598 = vpop.permute.xlu0 %597
      %599 = vrot.lane.b32.xlu0 %v510, 4
      %v600 = vpop.permute.xlu0 %599
      %601 = vrot.lane.b32.xlu0 %v511, 4
      %v602 = vpop.permute.xlu0 %601
      %603 = vrot.lane.b32.xlu0 %v512, 4
      %v604 = vpop.permute.xlu0 %603
      %605 = vrot.lane.b32.xlu0 %v513, 4
      %v606 = vpop.permute.xlu0 %605
      %607 = vrot.lane.b32.xlu0 %v514, 4
      %v608 = vpop.permute.xlu0 %607
      %609 = vrot.lane.b32.xlu0 %v515, 4
      %v610 = vpop.permute.xlu0 %609
      %611 = vrot.lane.b32.xlu0 %v516, 4
      %v612 = vpop.permute.xlu0 %611
      %vm645 = vcmask 31744
      %v646 = vsel %vm645, %v485, %v550
      %v647 = vsel %vm645, %v486, %v552
      %v648 = vsel %vm645, %v487, %v554
      %v649 = vsel %vm645, %v488, %v556
      %v650 = vsel %vm645, %v489, %v558
      %v651 = vsel %vm645, %v490, %v560
      %v652 = vsel %vm645, %v491, %v562
      %v653 = vsel %vm645, %v492, %v564
      %v654 = vsel %vm645, %v493, %v566
      %v655 = vsel %vm645, %v494, %v568
      %v656 = vsel %vm645, %v495, %v570
      %v657 = vsel %vm645, %v496, %v572
      %v658 = vsel %vm645, %v497, %v574
      %v659 = vsel %vm645, %v498, %v576
      %v660 = vsel %vm645, %v499, %v578
      %v661 = vsel %vm645, %v500, %v580
      %v662 = vsel %vm645, %v501, %v582
      %v663 = vsel %vm645, %v502, %v584
      %v664 = vsel %vm645, %v503, %v586
      %v665 = vsel %vm645, %v504, %v588
      %v666 = vsel %vm645, %v505, %v590
      %v667 = vsel %vm645, %v506, %v592
      %v668 = vsel %vm645, %v507, %v594
      %v669 = vsel %vm645, %v508, %v596
      %v670 = vsel %vm645, %v509, %v598
      %v671 = vsel %vm645, %v510, %v600
      %v672 = vsel %vm645, %v511, %v602
      %v673 = vsel %vm645, %v512, %v604
      %v674 = vsel %vm645, %v513, %v606
      %v675 = vsel %vm645, %v514, %v608
      %v676 = vsel %vm645, %v515, %v610
      %v677 = vsel %vm645, %v516, %v612
      %v678 = vld [vmem:[%s296] sm:$0xff]
      %v679 = vld [vmem:[%s296 + $0x8] sm:$0xff]
      %v680 = vld [vmem:[%s296 + $0x10] sm:$0xff]
      %v681 = vld [vmem:[%s296 + $0x18] sm:$0xff]
      %v682 = vld [vmem:[%s296 + $0x20] sm:$0xff]
      %v683 = vld [vmem:[%s296 + $0x28] sm:$0xff]
      %v684 = vld [vmem:[%s296 + $0x30] sm:$0xff]
      %v685 = vld [vmem:[%s296 + $0x38] sm:$0xff]
      %v686 = vld [vmem:[%s296 + $0x40] sm:$0xff]
      %v687 = vld [vmem:[%s296 + $0x48] sm:$0xff]
      %v688 = vld [vmem:[%s296 + $0x50] sm:$0xff]
      %v689 = vld [vmem:[%s296 + $0x58] sm:$0xff]
      %v690 = vld [vmem:[%s296 + $0x60] sm:$0xff]
      %v691 = vld [vmem:[%s296 + $0x68] sm:$0xff]
      %v692 = vld [vmem:[%s296 + $0x70] sm:$0xff]
      %v693 = vld [vmem:[%s296 + $0x78] sm:$0xff]
      %v694 = vld [vmem:[%s296 + $0x80] sm:$0xff]
      %v695 = vld [vmem:[%s296 + $0x88] sm:$0xff]
      %v696 = vld [vmem:[%s296 + $0x90] sm:$0xff]
      %v697 = vld [vmem:[%s296 + $0x98] sm:$0xff]
      %v698 = vld [vmem:[%s296 + $0xa0] sm:$0xff]
      %v699 = vld [vmem:[%s296 + $0xa8] sm:$0xff]
      %v700 = vld [vmem:[%s296 + $0xb0] sm:$0xff]
      %v701 = vld [vmem:[%s296 + $0xb8] sm:$0xff]
      %v702 = vld [vmem:[%s296 + $0xc0] sm:$0xff]
      %v703 = vld [vmem:[%s296 + $0xc8] sm:$0xff]
      %v704 = vld [vmem:[%s296 + $0xd0] sm:$0xff]
      %v705 = vld [vmem:[%s296 + $0xd8] sm:$0xff]
      %v706 = vld [vmem:[%s296 + $0xe0] sm:$0xff]
      %v707 = vld [vmem:[%s296 + $0xe8] sm:$0xff]
      %v708 = vld [vmem:[%s296 + $0xf0] sm:$0xff]
      %v709 = vld [vmem:[%s296 + $0xf8] sm:$0xff]
      %v710 = vld [vmem:[%s296 + $0x100] sm:$0xff]
      %v711 = vld [vmem:[%s296 + $0x108] sm:$0xff]
      %v712 = vld [vmem:[%s296 + $0x110] sm:$0xff]
      %v713 = vld [vmem:[%s296 + $0x118] sm:$0xff]
      %v714 = vld [vmem:[%s296 + $0x120] sm:$0xff]
      %v715 = vld [vmem:[%s296 + $0x128] sm:$0xff]
      %v716 = vld [vmem:[%s296 + $0x130] sm:$0xff]
      %v717 = vld [vmem:[%s296 + $0x138] sm:$0xff]
      %v718 = vld [vmem:[%s296 + $0x140] sm:$0xff]
      %v719 = vld [vmem:[%s296 + $0x148] sm:$0xff]
      %v720 = vld [vmem:[%s296 + $0x150] sm:$0xff]
      %v721 = vld [vmem:[%s296 + $0x158] sm:$0xff]
      %v722 = vld [vmem:[%s296 + $0x160] sm:$0xff]
      %v723 = vld [vmem:[%s296 + $0x168] sm:$0xff]
      %v724 = vld [vmem:[%s296 + $0x170] sm:$0xff]
      %v725 = vld [vmem:[%s296 + $0x178] sm:$0xff]
      %v726 = vld [vmem:[%s296 + $0x180] sm:$0xff]
      %v727 = vld [vmem:[%s296 + $0x188] sm:$0xff]
      %v728 = vld [vmem:[%s296 + $0x190] sm:$0xff]
      %v729 = vld [vmem:[%s296 + $0x198] sm:$0xff]
      %v730 = vld [vmem:[%s296 + $0x1a0] sm:$0xff]
      %v731 = vld [vmem:[%s296 + $0x1a8] sm:$0xff]
      %v732 = vld [vmem:[%s296 + $0x1b0] sm:$0xff]
      %v733 = vld [vmem:[%s296 + $0x1b8] sm:$0xff]
      %v734 = vld [vmem:[%s296 + $0x1c0] sm:$0xff]
      %v735 = vld [vmem:[%s296 + $0x1c8] sm:$0xff]
      %v736 = vld [vmem:[%s296 + $0x1d0] sm:$0xff]
      %v737 = vld [vmem:[%s296 + $0x1d8] sm:$0xff]
      %v738 = vld [vmem:[%s296 + $0x1e0] sm:$0xff]
      %v739 = vld [vmem:[%s296 + $0x1e8] sm:$0xff]
      %v740 = vld [vmem:[%s296 + $0x1f0] sm:$0xff]
      %v741 = vld [vmem:[%s296 + $0x1f8] sm:$0xff]
      %v742 = vadd.f32 %v646, %v678
      %v743 = vadd.f32 %v647, %v679
      %v744 = vadd.f32 %v646, %v680
      %v745 = vadd.f32 %v647, %v681
      %v746 = vadd.f32 %v648, %v682
      %v747 = vadd.f32 %v649, %v683
      %v748 = vadd.f32 %v648, %v684
      %v749 = vadd.f32 %v649, %v685
      %v750 = vadd.f32 %v650, %v686
      %v751 = vadd.f32 %v651, %v687
      %v752 = vadd.f32 %v650, %v688
      %v753 = vadd.f32 %v651, %v689
      %v754 = vadd.f32 %v652, %v690
      %v755 = vadd.f32 %v653, %v691
      %v756 = vadd.f32 %v652, %v692
      %v757 = vadd.f32 %v653, %v693
      %v758 = vadd.f32 %v654, %v694
      %v759 = vadd.f32 %v655, %v695
      %v760 = vadd.f32 %v654, %v696
      %v761 = vadd.f32 %v655, %v697
      %v762 = vadd.f32 %v656, %v698
      %v763 = vadd.f32 %v657, %v699
      %v764 = vadd.f32 %v656, %v700
      %v765 = vadd.f32 %v657, %v701
      %v766 = vadd.f32 %v658, %v702
      %v767 = vadd.f32 %v659, %v703
      %v768 = vadd.f32 %v658, %v704
      %v769 = vadd.f32 %v659, %v705
      %v770 = vadd.f32 %v660, %v706
      %v771 = vadd.f32 %v661, %v707
      %v772 = vadd.f32 %v660, %v708
      %v773 = vadd.f32 %v661, %v709
      %v774 = vadd.f32 %v662, %v710
      %v775 = vadd.f32 %v663, %v711
      %v776 = vadd.f32 %v662, %v712
      %v777 = vadd.f32 %v663, %v713
      %v778 = vadd.f32 %v664, %v714
      %v779 = vadd.f32 %v665, %v715
      %v780 = vadd.f32 %v664, %v716
      %v781 = vadd.f32 %v665, %v717
      %v782 = vadd.f32 %v666, %v718
      %v783 = vadd.f32 %v667, %v719
      %v784 = vadd.f32 %v666, %v720
      %v785 = vadd.f32 %v667, %v721
      %v786 = vadd.f32 %v668, %v722
      %v787 = vadd.f32 %v669, %v723
      %v788 = vadd.f32 %v668, %v724
      %v789 = vadd.f32 %v669, %v725
      %v790 = vadd.f32 %v670, %v726
      %v791 = vadd.f32 %v671, %v727
      %v792 = vadd.f32 %v670, %v728
      %v793 = vadd.f32 %v671, %v729
      %v794 = vadd.f32 %v672, %v730
      %v795 = vadd.f32 %v673, %v731
      %v796 = vadd.f32 %v672, %v732
      %v797 = vadd.f32 %v673, %v733
      %v798 = vadd.f32 %v674, %v734
      %v799 = vadd.f32 %v675, %v735
      %v800 = vadd.f32 %v674, %v736
      %v801 = vadd.f32 %v675, %v737
      %v802 = vadd.f32 %v676, %v738
      %v803 = vadd.f32 %v677, %v739
      %v804 = vadd.f32 %v676, %v740
      %v805 = vadd.f32 %v677, %v741
      %vm806 = vcmask 64512
      %807 = vst.msk [vmem:[%s307] sm:$0xff] %vm806, %v742
      %808 = vst.msk [vmem:[%s307 + $0x8] sm:$0xff] %vm806, %v743
      %809 = vst.msk [vmem:[%s307 + $0x10] sm:$0xff] %vm806, %v744
      %810 = vst.msk [vmem:[%s307 + $0x18] sm:$0xff] %vm806, %v745
      %811 = vst.msk [vmem:[%s307 + $0x20] sm:$0xff] %vm806, %v746
      %812 = vst.msk [vmem:[%s307 + $0x28] sm:$0xff] %vm806, %v747
      %813 = vst.msk [vmem:[%s307 + $0x30] sm:$0xff] %vm806, %v748
      %814 = vst.msk [vmem:[%s307 + $0x38] sm:$0xff] %vm806, %v749
      %815 = vst.msk [vmem:[%s307 + $0x40] sm:$0xff] %vm806, %v750
      %816 = vst.msk [vmem:[%s307 + $0x48] sm:$0xff] %vm806, %v751
      %817 = vst.msk [vmem:[%s307 + $0x50] sm:$0xff] %vm806, %v752
      %818 = vst.msk [vmem:[%s307 + $0x58] sm:$0xff] %vm806, %v753
      %819 = vst.msk [vmem:[%s307 + $0x60] sm:$0xff] %vm806, %v754
      %820 = vst.msk [vmem:[%s307 + $0x68] sm:$0xff] %vm806, %v755
      %821 = vst.msk [vmem:[%s307 + $0x70] sm:$0xff] %vm806, %v756
      %822 = vst.msk [vmem:[%s307 + $0x78] sm:$0xff] %vm806, %v757
      %823 = vst.msk [vmem:[%s307 + $0x80] sm:$0xff] %vm806, %v758
      %824 = vst.msk [vmem:[%s307 + $0x88] sm:$0xff] %vm806, %v759
      %825 = vst.msk [vmem:[%s307 + $0x90] sm:$0xff] %vm806, %v760
      %826 = vst.msk [vmem:[%s307 + $0x98] sm:$0xff] %vm806, %v761
      %827 = vst.msk [vmem:[%s307 + $0xa0] sm:$0xff] %vm806, %v762
      %828 = vst.msk [vmem:[%s307 + $0xa8] sm:$0xff] %vm806, %v763
      %829 = vst.msk [vmem:[%s307 + $0xb0] sm:$0xff] %vm806, %v764
      %830 = vst.msk [vmem:[%s307 + $0xb8] sm:$0xff] %vm806, %v765
      %831 = vst.msk [vmem:[%s307 + $0xc0] sm:$0xff] %vm806, %v766
      %832 = vst.msk [vmem:[%s307 + $0xc8] sm:$0xff] %vm806, %v767
      %833 = vst.msk [vmem:[%s307 + $0xd0] sm:$0xff] %vm806, %v768
      %834 = vst.msk [vmem:[%s307 + $0xd8] sm:$0xff] %vm806, %v769
      %835 = vst.msk [vmem:[%s307 + $0xe0] sm:$0xff] %vm806, %v770
      %836 = vst.msk [vmem:[%s307 + $0xe8] sm:$0xff] %vm806, %v771
      %837 = vst.msk [vmem:[%s307 + $0xf0] sm:$0xff] %vm806, %v772
      %838 = vst.msk [vmem:[%s307 + $0xf8] sm:$0xff] %vm806, %v773
      %839 = vst.msk [vmem:[%s307 + $0x100] sm:$0xff] %vm806, %v774
      %840 = vst.msk [vmem:[%s307 + $0x108] sm:$0xff] %vm806, %v775
      %841 = vst.msk [vmem:[%s307 + $0x110] sm:$0xff] %vm806, %v776
      %842 = vst.msk [vmem:[%s307 + $0x118] sm:$0xff] %vm806, %v777
      %843 = vst.msk [vmem:[%s307 + $0x120] sm:$0xff] %vm806, %v778
      %844 = vst.msk [vmem:[%s307 + $0x128] sm:$0xff] %vm806, %v779
      %845 = vst.msk [vmem:[%s307 + $0x130] sm:$0xff] %vm806, %v780
      %846 = vst.msk [vmem:[%s307 + $0x138] sm:$0xff] %vm806, %v781
      %847 = vst.msk [vmem:[%s307 + $0x140] sm:$0xff] %vm806, %v782
      %848 = vst.msk [vmem:[%s307 + $0x148] sm:$0xff] %vm806, %v783
      %849 = vst.msk [vmem:[%s307 + $0x150] sm:$0xff] %vm806, %v784
      %850 = vst.msk [vmem:[%s307 + $0x158] sm:$0xff] %vm806, %v785
      %851 = vst.msk [vmem:[%s307 + $0x160] sm:$0xff] %vm806, %v786
      %852 = vst.msk [vmem:[%s307 + $0x168] sm:$0xff] %vm806, %v787
      %853 = vst.msk [vmem:[%s307 + $0x170] sm:$0xff] %vm806, %v788
      %854 = vst.msk [vmem:[%s307 + $0x178] sm:$0xff] %vm806, %v789
      %855 = vst.msk [vmem:[%s307 + $0x180] sm:$0xff] %vm806, %v790
      %856 = vst.msk [vmem:[%s307 + $0x188] sm:$0xff] %vm806, %v791
      %857 = vst.msk [vmem:[%s307 + $0x190] sm:$0xff] %vm806, %v792
      %858 = vst.msk [vmem:[%s307 + $0x198] sm:$0xff] %vm806, %v793
      %859 = vst.msk [vmem:[%s307 + $0x1a0] sm:$0xff] %vm806, %v794
      %860 = vst.msk [vmem:[%s307 + $0x1a8] sm:$0xff] %vm806, %v795
      %861 = vst.msk [vmem:[%s307 + $0x1b0] sm:$0xff] %vm806, %v796
      %862 = vst.msk [vmem:[%s307 + $0x1b8] sm:$0xff] %vm806, %v797
      %863 = vst.msk [vmem:[%s307 + $0x1c0] sm:$0xff] %vm806, %v798
      %864 = vst.msk [vmem:[%s307 + $0x1c8] sm:$0xff] %vm806, %v799
      %865 = vst.msk [vmem:[%s307 + $0x1d0] sm:$0xff] %vm806, %v800
      %866 = vst.msk [vmem:[%s307 + $0x1d8] sm:$0xff] %vm806, %v801
      %867 = vst.msk [vmem:[%s307 + $0x1e0] sm:$0xff] %vm806, %v802
      %868 = vst.msk [vmem:[%s307 + $0x1e8] sm:$0xff] %vm806, %v803
      %869 = vst.msk [vmem:[%s307 + $0x1f0] sm:$0xff] %vm806, %v804
      %870 = vst.msk [vmem:[%s307 + $0x1f8] sm:$0xff] %vm806, %v805
      %s871 = smul.u32 32, %s22
      %p872 = scmp.lt.s32.totalorder %s21, 1
      %s873 = scalar_select %p872, %s21, 1
      %p874 = scmp.lt.s32.totalorder %s871, 31
      %s875 = scalar_select %p874, %s871, 31
      %s876 = smul.addr %s875, 2
      %s877 = smul.addr %s873, 64
      %s878 = sadd.s32 %s876, %s877
      %s879 = smul.addr %s878, 8
      %s880 = scalar_lea.vmem %s5, %s879
      // Predicated region
      $region41: #{decoder_forward.11} parent=39 // pred_check
        %p881 = pneg %p168
      $region42: #{decoder_forward.11} parent=39 // pred_check_branch
        %883 = sbr.rel (%p881) target = $region44
      $region43: #{decoder_forward.11} parent=39 // pred_region
        %s884 = smul.u32 32, %s22
      $region44: #{decoder_forward.11} parent=39 // pred_fallthru
        _
    $region40: #{decoder_forward.11} parent=5 // pred_fallthru
      _
    %p885 = scmp.le.s32.totalorder 2, %s12
    // Predicated region
    $region45: #{decoder_forward.11} parent=5 // pred_check
      %p886 = pneg %p885
    $region46: #{decoder_forward.11} parent=5 // pred_check_branch
      %888 = sbr.rel (%p886) target = $region48
    $region47: #{decoder_forward.11} parent=5 // pred_region
      %s889 = ssub.s32 %s12, 2
      // Predicated region
      $region49: #{decoder_forward.11} parent=47 // pred_check
        %p890 = pneg %p174
      $region50: #{decoder_forward.11} parent=47 // pred_check_branch
        %892 = sbr.rel (%p890) target = $region52
      $region51: #{decoder_forward.11} parent=47 // pred_region
        %s893 = smul.u32 32, %s24
        %p894 = scmp.lt.s32.totalorder %s23, 1
        %s895 = scalar_select %p894, %s23, 1
        %p896 = scmp.lt.s32.totalorder %s893, 31
        %s897 = scalar_select %p896, %s893, 31
        %s898 = smul.addr %s897, 2
        %s899 = smul.addr %s895, 64
        %s900 = sadd.s32 %s898, %s899
        %s901 = smul.addr %s900, 8
        %s902 = scalar_lea.vmem %s5, %s901
      $region52: #{decoder_forward.11} parent=47 // pred_fallthru
        _
    $region48: #{decoder_forward.11} parent=5 // pred_fallthru
      _
  $region6: #{decoder_forward.11} parent=0 // loop_footer
    %s16 = sadd.s32 1, %s12
  $region7: #{decoder_forward.11} parent=0 // loop_footer_branch
    %11 = sbr.rel target = $region3
  $region8: #{decoder_forward.11} parent=0 // loop_exit
    _

// kernel: decoder_forward.9
$region0: #{decoder_forward.9}
  #allocation0 [shape = 'u32[]', space=smem, size = 0x4, offset = 0x4, fixed_abs, tag = 'smem constant byte address 0x4 - core index']
  #allocation1 [shape = 'u32[144,128]{1,0:T(1,128)}', space=vmem, size = 0x12000, scoped, tag = 'internal scratch']
  %s0 = inlined_call_operand.vmem [shape: f32[2,18,18,4], index: 0, kind: input, shape index: {}]
  %s1 = inlined_call_operand.vmem [shape: f32[36,4], index: 1, kind: input, shape index: {}]
  %s2 = inlined_call_operand.vmem [shape: f32[1,4], index: 2, kind: input, shape index: {}]
  %s3 = inlined_call_operand.vmem [shape: f32[2,16,16,4], index: 3, kind: output, shape index: {0}]
  %s4 = inlined_call_operand.vmem [shape: f32[2,1,4], index: 4, kind: output, shape index: {1}]
  %s5 = inlined_call_operand.vmem [shape: f32[2,1,4], index: 5, kind: output, shape index: {2}]
  %6 = xla_tuple %s3, %s4, %s5
  %s7 = sld [smem:[#allocation0]]
  $region61: #{decoder_forward.9} parent=0
    _
  %s9 = ssub.s32 1, %s7
  %s10 = scalar_select 0, %s9, %s7
  loop: start=0, step=1, limit=4
  $region2: #{decoder_forward.9} parent=0 // loop_pre_header
    _
  $region3: #{decoder_forward.9} parent=0 // loop_header
    %s12 = sphi 0, %s16
    %p13 = scmp.ge.s32.totalorder %s12, 4
    %s19 = sphi 0, %s31
    %s20 = sphi 0, %s27
    %s21 = sphi 0, %s19
    %s22 = sphi 0, %s20
    %s23 = sphi 0, %s21
    %s24 = sphi 0, %s22
    %s36 = sphi 0, %s38
    %s39 = sphi 0, %s36
    %s40 = sphi 0, %s39
    %s56 = sphi 0, %s40
    %s60 = sphi 0, %s60
    %s62 = sphi 0, %s60
    %s63 = sphi 0, %s62
    %s77 = sphi 0, %s63
    %s81 = sphi 0, %s81
    %s83 = sphi 0, %s81
    %s84 = sphi 0, %s83
    %s98 = sphi 0, %s84
    %s106 = sphi 0, %s108
    %s109 = sphi 0, %s106
    %s110 = sphi 0, %s109
    %s126 = sphi 0, %s110
    %s134 = sphi 0, %s136
    %s137 = sphi 0, %s134
    %s138 = sphi 0, %s137
    %s154 = sphi 0, %s138
    %s162 = sphi 0, %s164
    %s165 = sphi 0, %s162
    %s166 = sphi 0, %s165
    %s182 = sphi 0, %s166
  $region4: #{decoder_forward.9} parent=0 // loop_header_branch
    %15 = sbr.rel (%p13) target = $region8
  $region5: #{decoder_forward.9} parent=0 // loop_body
    %s17 = ssub.s32 %s12, 1
    %s18 = ssub.s32 %s12, 2
    %s25 = sadd.s32 1, %s20
    %p26 = scmp.ge.s32.totalorder %s25, 1
    %s27 = scalar_select %p26, 0, %s25
    %s28 = sadd.s32 1, %s19
    %s29 = scalar_select %p26, %s28, %s19
    %p30 = scmp.ge.s32.totalorder %s29, 2
    %s31 = scalar_select %p30, 0, %s29
    %s32 = sadd.s32 %s19, %s20
    %s33 = sadd.s32 %s31, %s27
    %s34 = ssub.s32 %s32, %s33
    %p35 = scmp.eq.s32.totalorder %s34, 0
    %s37 = sadd.s32 %s36, 1
    %s38 = scalar_select %p35, %s36, %s37
    %p41 = pneg %p35
    %p42 = scmp.eq.s32.totalorder %s12, 1
    %p43 = por %p41, %p42
    %p44 = scmp.ne.s32.totalorder %s36, %s39
    %p45 = scmp.eq.s32.totalorder %s12, 0
    %p46 = por %p44, %p45
    %p47 = scmp.ne.s32.totalorder %s36, %s39
    %p48 = scmp.eq.s32.totalorder %s17, 1
    %p49 = por %p47, %p48
    %p50 = scmp.ne.s32.totalorder %s39, %s40
    %p51 = scmp.eq.s32.totalorder %s17, 0
    %p52 = por %p50, %p51
    %p53 = scmp.ne.s32.totalorder %s39, %s40
    %p54 = scmp.eq.s32.totalorder %s18, 1
    %p55 = por %p53, %p54
    %p57 = scmp.ne.s32.totalorder %s40, %s56
    %p58 = scmp.eq.s32.totalorder %s18, 0
    %p59 = por %p57, %p58
    %s61 = sadd.s32 %s60, 1
    %p64 = scmp.eq.s32.totalorder %s12, 1
    %p65 = scmp.ne.s32.totalorder %s60, %s62
    %p66 = scmp.eq.s32.totalorder %s12, 0
    %p67 = por %p65, %p66
    %p68 = scmp.ne.s32.totalorder %s60, %s62
    %p69 = scmp.eq.s32.totalorder %s17, 1
    %p70 = por %p68, %p69
    %p71 = scmp.ne.s32.totalorder %s62, %s63
    %p72 = scmp.eq.s32.totalorder %s17, 0
    %p73 = por %p71, %p72
    %p74 = scmp.ne.s32.totalorder %s62, %s63
    %p75 = scmp.eq.s32.totalorder %s18, 1
    %p76 = por %p74, %p75
    %p78 = scmp.ne.s32.totalorder %s63, %s77
    %p79 = scmp.eq.s32.totalorder %s18, 0
    %p80 = por %p78, %p79
    %s82 = sadd.s32 %s81, 1
    %p85 = scmp.eq.s32.totalorder %s12, 1
    %p86 = scmp.ne.s32.totalorder %s81, %s83
    %p87 = scmp.eq.s32.totalorder %s12, 0
    %p88 = por %p86, %p87
    %p89 = scmp.ne.s32.totalorder %s81, %s83
    %p90 = scmp.eq.s32.totalorder %s17, 1
    %p91 = por %p89, %p90
    %p92 = scmp.ne.s32.totalorder %s83, %s84
    %p93 = scmp.eq.s32.totalorder %s17, 0
    %p94 = por %p92, %p93
    %p95 = scmp.ne.s32.totalorder %s83, %s84
    %p96 = scmp.eq.s32.totalorder %s18, 1
    %p97 = por %p95, %p96
    %p99 = scmp.ne.s32.totalorder %s84, %s98
    %p100 = scmp.eq.s32.totalorder %s18, 0
    %p101 = por %p99, %p100
    %s102 = ssub.s32 %s19, %s31
    %s103 = ssub.s32 %s20, %s27
    %s104 = sor.u32 %s102, %s103
    %p105 = scmp.eq.s32.totalorder %s104, 0
    %s107 = sadd.s32 %s106, 1
    %s108 = scalar_select %p105, %s106, %s107
    %p111 = pneg %p105
    %p112 = scmp.eq.s32.totalorder %s12, 1
    %p113 = por %p111, %p112
    %p114 = scmp.ne.s32.totalorder %s106, %s109
    %p115 = scmp.eq.s32.totalorder %s12, 0
    %p116 = por %p114, %p115
    %p117 = scmp.ne.s32.totalorder %s106, %s109
    %p118 = scmp.eq.s32.totalorder %s17, 1
    %p119 = por %p117, %p118
    %p120 = scmp.ne.s32.totalorder %s109, %s110
    %p121 = scmp.eq.s32.totalorder %s17, 0
    %p122 = por %p120, %p121
    %p123 = scmp.ne.s32.totalorder %s109, %s110
    %p124 = scmp.eq.s32.totalorder %s18, 1
    %p125 = por %p123, %p124
    %p127 = scmp.ne.s32.totalorder %s110, %s126
    %p128 = scmp.eq.s32.totalorder %s18, 0
    %p129 = por %p127, %p128
    %s130 = sadd.s32 %s19, %s20
    %s131 = sadd.s32 %s31, %s27
    %s132 = ssub.s32 %s130, %s131
    %p133 = scmp.eq.s32.totalorder %s132, 0
    %s135 = sadd.s32 %s134, 1
    %s136 = scalar_select %p133, %s134, %s135
    %p139 = pneg %p133
    %p140 = scmp.eq.s32.totalorder %s12, 1
    %p141 = por %p139, %p140
    %p142 = scmp.ne.s32.totalorder %s134, %s137
    %p143 = scmp.eq.s32.totalorder %s12, 0
    %p144 = por %p142, %p143
    %p145 = scmp.ne.s32.totalorder %s134, %s137
    %p146 = scmp.eq.s32.totalorder %s17, 1
    %p147 = por %p145, %p146
    %p148 = scmp.ne.s32.totalorder %s137, %s138
    %p149 = scmp.eq.s32.totalorder %s17, 0
    %p150 = por %p148, %p149
    %p151 = scmp.ne.s32.totalorder %s137, %s138
    %p152 = scmp.eq.s32.totalorder %s18, 1
    %p153 = por %p151, %p152
    %p155 = scmp.ne.s32.totalorder %s138, %s154
    %p156 = scmp.eq.s32.totalorder %s18, 0
    %p157 = por %p155, %p156
    %s158 = sadd.s32 %s19, %s20
    %s159 = sadd.s32 %s31, %s27
    %s160 = ssub.s32 %s158, %s159
    %p161 = scmp.eq.s32.totalorder %s160, 0
    %s163 = sadd.s32 %s162, 1
    %s164 = scalar_select %p161, %s162, %s163
    %p167 = pneg %p161
    %p168 = scmp.eq.s32.totalorder %s12, 1
    %p169 = por %p167, %p168
    %p170 = scmp.ne.s32.totalorder %s162, %s165
    %p171 = scmp.eq.s32.totalorder %s12, 0
    %p172 = por %p170, %p171
    %p173 = scmp.ne.s32.totalorder %s162, %s165
    %p174 = scmp.eq.s32.totalorder %s17, 1
    %p175 = por %p173, %p174
    %p176 = scmp.ne.s32.totalorder %s165, %s166
    %p177 = scmp.eq.s32.totalorder %s17, 0
    %p178 = por %p176, %p177
    %p179 = scmp.ne.s32.totalorder %s165, %s166
    %p180 = scmp.eq.s32.totalorder %s18, 1
    %p181 = por %p179, %p180
    %p183 = scmp.ne.s32.totalorder %s166, %s182
    %p184 = scmp.eq.s32.totalorder %s18, 0
    %p185 = por %p183, %p184
    %p186 = scmp.le.s32.totalorder 1, %s12
    %p187 = scmp.lt.s32.totalorder %s12, 3
    %p188 = pnand %p186, %p187
    %p189 = pneg %p188
    // Predicated region
    $region9: #{decoder_forward.9} parent=5 // pred_check
      _
    $region10: #{decoder_forward.9} parent=5 // pred_check_branch
      %191 = sbr.rel (%p188) target = $region12
    $region11: #{decoder_forward.9} parent=5 // pred_region
      %s192 = ssub.s32 %s12, 1
      // Predicated region
      $region13: #{decoder_forward.9} parent=11 // pred_check
        %p193 = pneg %p73
      $region14: #{decoder_forward.9} parent=11 // pred_check_branch
        %195 = sbr.rel (%p193) target = $region16
      $region15: #{decoder_forward.9} parent=11 // pred_region
        _
      $region16: #{decoder_forward.9} parent=11 // pred_fallthru
        _
      // Predicated region
      $region17: #{decoder_forward.9} parent=11 // pred_check
        %p196 = pneg %p94
      $region18: #{decoder_forward.9} parent=11 // pred_check_branch
        %198 = sbr.rel (%p196) target = $region20
      $region19: #{decoder_forward.9} parent=11 // pred_region
        _
      $region20: #{decoder_forward.9} parent=11 // pred_fallthru
        _
    $region12: #{decoder_forward.9} parent=5 // pred_fallthru
      _
    %p199 = scmp.lt.s32.totalorder %s12, 2
    // Predicated region
    $region21: #{decoder_forward.9} parent=5 // pred_check
      %p200 = pneg %p199
    $region22: #{decoder_forward.9} parent=5 // pred_check_branch
      %202 = sbr.rel (%p200) target = $region24
    $region23: #{decoder_forward.9} parent=5 // pred_region
      // Predicated region
      $region25: #{decoder_forward.9} parent=23 // pred_check
        %p203 = pneg %p46
      $region26: #{decoder_forward.9} parent=23 // pred_check_branch
        %205 = sbr.rel (%p203) target = $region28
      $region27: #{decoder_forward.9} parent=23 // pred_region
        %s206 = sadd.s32 %s19, %s20
        %p207 = scmp.lt.s32.totalorder %s206, 1
        %s208 = scalar_select %p207, %s206, 1
        %s209 = smul.addr %s208, 54
        %s210 = smul.addr %s209, 8
        %s211 = scalar_lea.vmem %s0, %s210
        %s212 = sadd.s32 %s19, %s20
      $region28: #{decoder_forward.9} parent=23 // pred_fallthru
        _
    $region24: #{decoder_forward.9} parent=5 // pred_fallthru
      _
    %p213 = scmp.le.s32.totalorder 1, %s12
    %p214 = scmp.lt.s32.totalorder %s12, 3
    %p215 = pnand %p213, %p214
    %p216 = pneg %p215
    // Predicated region
    $region29: #{decoder_forward.9} parent=5 // pred_check
      _
    $region30: #{decoder_forward.9} parent=5 // pred_check_branch
      %218 = sbr.rel (%p215) target = $region32
    $region31: #{decoder_forward.9} parent=5 // pred_region
      %s219 = ssub.s32 %s12, 1
      %s220 = sadd.s32 %s21, %s22
      %p221 = scmp.lt.s32.totalorder %s220, 1
      %s222 = scalar_select %p221, %s220, 1
      %s223 = smul.addr %s222, 54
      %s224 = smul.addr %s223, 8
      %s225 = scalar_lea.vmem %s0, %s224
      %p226 = pneg %p52
      %p227 = pneg %p49
      %p228 = pneg %p73
      %p229 = pneg %p70
      %p230 = pneg %p94
      %p231 = pneg %p91
      %p232 = pneg %p122
      %p233 = pneg %p119
      %s234 = smul.u32 16, %s22
      %p235 = scmp.lt.s32.totalorder %s21, 1
      %s236 = scalar_select %p235, %s21, 1
      %p237 = scmp.lt.s32.totalorder %s234, 15
      %s238 = scalar_select %p237, %s234, 15
      %s239 = smul.addr %s238, 2
      %s240 = smul.addr %s236, 32
      %s241 = sadd.s32 %s239, %s240
      %s242 = smul.addr %s241, 8
      %s243 = scalar_lea.vmem %s3, %s242
      %p244 = pneg %p150
      %p245 = pneg %p147
      %s246 = sadd.s32 %s21, %s22
      %p247 = scmp.lt.s32.totalorder %s246, 1
      %s248 = scalar_select %p247, %s246, 1
      %s249 = scalar_lea.vmem %s4, %s248
      %p250 = pneg %p178
      %p251 = pneg %p175
      %s252 = sadd.s32 %s21, %s22
      %p253 = scmp.lt.s32.totalorder %s252, 1
      %s254 = scalar_select %p253, %s252, 1
      %s255 = scalar_lea.vmem %s5, %s254
      %s256 = sadd.s32 %s21, %s22
      %p257 = scmp.lt.s32.totalorder %s256, 1
      %s258 = scalar_select %p257, %s256, 1
      %s259 = smul.addr %s258, 54
      %s260 = smul.addr %s259, 8
      %s261 = scalar_lea.vmem %s0, %s260
      %s262 = sadd.s32 %s21, %s22
      %s263 = smul.u32 16, %s22
      %p264 = scmp.lt.s32.totalorder %s21, 1
      %s265 = scalar_select %p264, %s21, 1
      %p266 = scmp.lt.s32.totalorder %s263, 15
      %s267 = scalar_select %p266, %s263, 15
      %s268 = smul.addr %s267, 2
      %s269 = smul.addr %s265, 32
      %s270 = sadd.s32 %s268, %s269
      %s271 = smul.addr %s270, 8
      %s272 = scalar_lea.vmem %s3, %s271
      %s273 = smul.u32 16, %s22
      %s274 = sadd.s32 %s21, %s22
      %p275 = scmp.lt.s32.totalorder %s274, 1
      %s276 = scalar_select %p275, %s274, 1
      %s277 = scalar_lea.vmem %s4, %s276
      %s278 = sadd.s32 %s21, %s22
      %s279 = sadd.s32 %s21, %s22
      %p280 = scmp.lt.s32.totalorder %s279, 1
      %s281 = scalar_select %p280, %s279, 1
      %s282 = scalar_lea.vmem %s5, %s281
      %s283 = sadd.s32 %s21, %s22
      %v284 = vld [vmem:[%s261] sm:$0xff]
      %v285 = vld [vmem:[%s261 + $0x8] sm:$0xff]
      %v286 = vld [vmem:[%s261 + $0x18] sm:$0xff]
      %v287 = vld [vmem:[%s261 + $0x20] sm:$0xff]
      %v288 = vld [vmem:[%s261 + $0x30] sm:$0xff]
      %v289 = vld [vmem:[%s261 + $0x38] sm:$0xff]
      %v290 = vld [vmem:[%s261 + $0x48] sm:$0xff]
      %v291 = vld [vmem:[%s261 + $0x50] sm:$0xff]
      %v292 = vld [vmem:[%s261 + $0x60] sm:$0xff]
      %v293 = vld [vmem:[%s261 + $0x68] sm:$0xff]
      %v294 = vld [vmem:[%s261 + $0x78] sm:$0xff]
      %v295 = vld [vmem:[%s261 + $0x80] sm:$0xff]
      %v296 = vld [vmem:[%s261 + $0x90] sm:$0xff]
      %v297 = vld [vmem:[%s261 + $0x98] sm:$0xff]
      %v298 = vld [vmem:[%s261 + $0xa8] sm:$0xff]
      %v299 = vld [vmem:[%s261 + $0xb0] sm:$0xff]
      %v300 = vld [vmem:[%s261 + $0xc0] sm:$0xff]
      %v301 = vld [vmem:[%s261 + $0xc8] sm:$0xff]
      %v302 = vld [vmem:[%s261 + $0xd8] sm:$0xff]
      %v303 = vld [vmem:[%s261 + $0xe0] sm:$0xff]
      %v304 = vld [vmem:[%s261 + $0xf0] sm:$0xff]
      %v305 = vld [vmem:[%s261 + $0xf8] sm:$0xff]
      %v306 = vld [vmem:[%s261 + $0x108] sm:$0xff]
      %v307 = vld [vmem:[%s261 + $0x110] sm:$0xff]
      %v308 = vld [vmem:[%s261 + $0x120] sm:$0xff]
      %v309 = vld [vmem:[%s261 + $0x128] sm:$0xff]
      %v310 = vld [vmem:[%s261 + $0x138] sm:$0xff]
      %v311 = vld [vmem:[%s261 + $0x140] sm:$0xff]
      %v312 = vld [vmem:[%s261 + $0x150] sm:$0xff]
      %v313 = vld [vmem:[%s261 + $0x158] sm:$0xff]
      %v314 = vld [vmem:[%s261 + $0x168] sm:$0xff]
      %v315 = vld [vmem:[%s261 + $0x170] sm:$0xff]
      %v316 = vld [vmem:[%s261 + $0x1] sm:$0xff]
      %v317 = vld [vmem:[%s261 + $0x9] sm:$0xff]
      %v318 = vld [vmem:[%s261 + $0x19] sm:$0xff]
      %v319 = vld [vmem:[%s261 + $0x21] sm:$0xff]
      %v320 = vld [vmem:[%s261 + $0x31] sm:$0xff]
      %v321 = vld [vmem:[%s261 + $0x39] sm:$0xff]
      %v322 = vld [vmem:[%s261 + $0x49] sm:$0xff]
      %v323 = vld [vmem:[%s261 + $0x51] sm:$0xff]
      %v324 = vld [vmem:[%s261 + $0x61] sm:$0xff]
      %v325 = vld [vmem:[%s261 + $0x69] sm:$0xff]
      %v326 = vld [vmem:[%s261 + $0x79] sm:$0xff]
      %v327 = vld [vmem:[%s261 + $0x81] sm:$0xff]
      %v328 = vld [vmem:[%s261 + $0x91] sm:$0xff]
      %v329 = vld [vmem:[%s261 + $0x99] sm:$0xff]
      %v330 = vld [vmem:[%s261 + $0xa9] sm:$0xff]
      %v331 = vld [vmem:[%s261 + $0xb1] sm:$0xff]
      %v332 = vld [vmem:[%s261 + $0xc1] sm:$0xff]
      %v333 = vld [vmem:[%s261 + $0xc9] sm:$0xff]
      %v334 = vld [vmem:[%s261 + $0xd9] sm:$0xff]
      %v335 = vld [vmem:[%s261 + $0xe1] sm:$0xff]
      %v336 = vld [vmem:[%s261 + $0xf1] sm:$0xff]
      %v337 = vld [vmem:[%s261 + $0xf9] sm:$0xff]
      %v338 = vld [vmem:[%s261 + $0x109] sm:$0xff]
      %v339 = vld [vmem:[%s261 + $0x111] sm:$0xff]
      %v340 = vld [vmem:[%s261 + $0x121] sm:$0xff]
      %v341 = vld [vmem:[%s261 + $0x129] sm:$0xff]
      %v342 = vld [vmem:[%s261 + $0x139] sm:$0xff]
      %v343 = vld [vmem:[%s261 + $0x141] sm:$0xff]
      %v344 = vld [vmem:[%s261 + $0x151] sm:$0xff]
      %v345 = vld [vmem:[%s261 + $0x159] sm:$0xff]
      %v346 = vld [vmem:[%s261 + $0x169] sm:$0xff]
      %v347 = vld [vmem:[%s261 + $0x171] sm:$0xff]
      %v348 = vld [vmem:[%s261 + $0x2] sm:$0xff]
      %v349 = vld [vmem:[%s261 + $0xa] sm:$0xff]
      %v350 = vld [vmem:[%s261 + $0x1a] sm:$0xff]
      %v351 = vld [vmem:[%s261 + $0x22] sm:$0xff]
      %v352 = vld [vmem:[%s261 + $0x32] sm:$0xff]
      %v353 = vld [vmem:[%s261 + $0x3a] sm:$0xff]
      %v354 = vld [vmem:[%s261 + $0x4a] sm:$0xff]
      %v355 = vld [vmem:[%s261 + $0x52] sm:$0xff]
      %v356 = vld [vmem:[%s261 + $0x62] sm:$0xff]
      %v357 = vld [vmem:[%s261 + $0x6a] sm:$0xff]
      %v358 = vld [vmem:[%s261 + $0x7a] sm:$0xff]
      %v359 = vld [vmem:[%s261 + $0x82] sm:$0xff]
      %v360 = vld [vmem:[%s261 + $0x92] sm:$0xff]
      %v361 = vld [vmem:[%s261 + $0x9a] sm:$0xff]
      %v362 = vld [vmem:[%s261 + $0xaa] sm:$0xff]
      %v363 = vld [vmem:[%s261 + $0xb2] sm:$0xff]
      %v364 = vld [vmem:[%s261 + $0xc2] sm:$0xff]
      %v365 = vld [vmem:[%s261 + $0xca] sm:$0xff]
      %v366 = vld [vmem:[%s261 + $0xda] sm:$0xff]
      %v367 = vld [vmem:[%s261 + $0xe2] sm:$0xff]
      %v368 = vld [vmem:[%s261 + $0xf2] sm:$0xff]
      %v369 = vld [vmem:[%s261 + $0xfa] sm:$0xff]
      %v370 = vld [vmem:[%s261 + $0x10a] sm:$0xff]
      %v371 = vld [vmem:[%s261 + $0x112] sm:$0xff]
      %v372 = vld [vmem:[%s261 + $0x122] sm:$0xff]
      %v373 = vld [vmem:[%s261 + $0x12a] sm:$0xff]
      %v374 = vld [vmem:[%s261 + $0x13a] sm:$0xff]
      %v375 = vld [vmem:[%s261 + $0x142] sm:$0xff]
      %v376 = vld [vmem:[%s261 + $0x152] sm:$0xff]
      %v377 = vld [vmem:[%s261 + $0x15a] sm:$0xff]
      %v378 = vld [vmem:[%s261 + $0x16a] sm:$0xff]
      %v379 = vld [vmem:[%s261 + $0x172] sm:$0xff]
      %s380 = scalar_lea.vmem %s261, 24
      %v381 = vld [vmem:[%s380] sm:$0xff]
      %v382 = vld [vmem:[%s380 + $0x8] sm:$0xff]
      %v383 = vld [vmem:[%s380 + $0x18] sm:$0xff]
      %v384 = vld [vmem:[%s380 + $0x20] sm:$0xff]
      %v385 = vld [vmem:[%s380 + $0x30] sm:$0xff]
      %v386 = vld [vmem:[%s380 + $0x38] sm:$0xff]
      %v387 = vld [vmem:[%s380 + $0x48] sm:$0xff]
      %v388 = vld [vmem:[%s380 + $0x50] sm:$0xff]
      %v389 = vld [vmem:[%s380 + $0x60] sm:$0xff]
      %v390 = vld [vmem:[%s380 + $0x68] sm:$0xff]
      %v391 = vld [vmem:[%s380 + $0x78] sm:$0xff]
      %v392 = vld [vmem:[%s380 + $0x80] sm:$0xff]
      %v393 = vld [vmem:[%s380 + $0x90] sm:$0xff]
      %v394 = vld [vmem:[%s380 + $0x98] sm:$0xff]
      %v395 = vld [vmem:[%s380 + $0xa8] sm:$0xff]
      %v396 = vld [vmem:[%s380 + $0xb0] sm:$0xff]
      %v397 = vld [vmem:[%s380 + $0xc0] sm:$0xff]
      %v398 = vld [vmem:[%s380 + $0xc8] sm:$0xff]
      %v399 = vld [vmem:[%s380 + $0xd8] sm:$0xff]
      %v400 = vld [vmem:[%s380 + $0xe0] sm:$0xff]
      %v401 = vld [vmem:[%s380 + $0xf0] sm:$0xff]
      %v402 = vld [vmem:[%s380 + $0xf8] sm:$0xff]
      %v403 = vld [vmem:[%s380 + $0x108] sm:$0xff]
      %v404 = vld [vmem:[%s380 + $0x110] sm:$0xff]
      %v405 = vld [vmem:[%s380 + $0x120] sm:$0xff]
      %v406 = vld [vmem:[%s380 + $0x128] sm:$0xff]
      %v407 = vld [vmem:[%s380 + $0x138] sm:$0xff]
      %v408 = vld [vmem:[%s380 + $0x140] sm:$0xff]
      %v409 = vld [vmem:[%s380 + $0x150] sm:$0xff]
      %v410 = vld [vmem:[%s380 + $0x158] sm:$0xff]
      %v411 = vld [vmem:[%s380 + $0x168] sm:$0xff]
      %v412 = vld [vmem:[%s380 + $0x170] sm:$0xff]
      %v413 = vld [vmem:[%s380 + $0x1] sm:$0xff]
      %v414 = vld [vmem:[%s380 + $0x9] sm:$0xff]
      %v415 = vld [vmem:[%s380 + $0x19] sm:$0xff]
      %v416 = vld [vmem:[%s380 + $0x21] sm:$0xff]
      %v417 = vld [vmem:[%s380 + $0x31] sm:$0xff]
      %v418 = vld [vmem:[%s380 + $0x39] sm:$0xff]
      %v419 = vld [vmem:[%s380 + $0x49] sm:$0xff]
      %v420 = vld [vmem:[%s380 + $0x51] sm:$0xff]
      %v421 = vld [vmem:[%s380 + $0x61] sm:$0xff]
      %v422 = vld [vmem:[%s380 + $0x69] sm:$0xff]
      %v423 = vld [vmem:[%s380 + $0x79] sm:$0xff]
      %v424 = vld [vmem:[%s380 + $0x81] sm:$0xff]
      %v425 = vld [vmem:[%s380 + $0x91] sm:$0xff]
      %v426 = vld [vmem:[%s380 + $0x99] sm:$0xff]
      %v427 = vld [vmem:[%s380 + $0xa9] sm:$0xff]
      %v428 = vld [vmem:[%s380 + $0xb1] sm:$0xff]
      %v429 = vld [vmem:[%s380 + $0xc1] sm:$0xff]
      %v430 = vld [vmem:[%s380 + $0xc9] sm:$0xff]
      %v431 = vld [vmem:[%s380 + $0xd9] sm:$0xff]
      %v432 = vld [vmem:[%s380 + $0xe1] sm:$0xff]
      %v433 = vld [vmem:[%s380 + $0xf1] sm:$0xff]
      %v434 = vld [vmem:[%s380 + $0xf9] sm:$0xff]
      %v435 = vld [vmem:[%s380 + $0x109] sm:$0xff]
      %v436 = vld [vmem:[%s380 + $0x111] sm:$0xff]
      %v437 = vld [vmem:[%s380 + $0x121] sm:$0xff]
      %v438 = vld [vmem:[%s380 + $0x129] sm:$0xff]
      %v439 = vld [vmem:[%s380 + $0x139] sm:$0xff]
      %v440 = vld [vmem:[%s380 + $0x141] sm:$0xff]
      %v441 = vld [vmem:[%s380 + $0x151] sm:$0xff]
      %v442 = vld [vmem:[%s380 + $0x159] sm:$0xff]
      %v443 = vld [vmem:[%s380 + $0x169] sm:$0xff]
      %v444 = vld [vmem:[%s380 + $0x171] sm:$0xff]
      %v445 = vld [vmem:[%s380 + $0x2] sm:$0xff]
      %v446 = vld [vmem:[%s380 + $0xa] sm:$0xff]
      %v447 = vld [vmem:[%s380 + $0x1a] sm:$0xff]
      %v448 = vld [vmem:[%s380 + $0x22] sm:$0xff]
      %v449 = vld [vmem:[%s380 + $0x32] sm:$0xff]
      %v450 = vld [vmem:[%s380 + $0x3a] sm:$0xff]
      %v451 = vld [vmem:[%s380 + $0x4a] sm:$0xff]
      %v452 = vld [vmem:[%s380 + $0x52] sm:$0xff]
      %v453 = vld [vmem:[%s380 + $0x62] sm:$0xff]
      %v454 = vld [vmem:[%s380 + $0x6a] sm:$0xff]
      %v455 = vld [vmem:[%s380 + $0x7a] sm:$0xff]
      %v456 = vld [vmem:[%s380 + $0x82] sm:$0xff]
      %v457 = vld [vmem:[%s380 + $0x92] sm:$0xff]
      %v458 = vld [vmem:[%s380 + $0x9a] sm:$0xff]
      %v459 = vld [vmem:[%s380 + $0xaa] sm:$0xff]
      %v460 = vld [vmem:[%s380 + $0xb2] sm:$0xff]
      %v461 = vld [vmem:[%s380 + $0xc2] sm:$0xff]
      %v462 = vld [vmem:[%s380 + $0xca] sm:$0xff]
      %v463 = vld [vmem:[%s380 + $0xda] sm:$0xff]
      %v464 = vld [vmem:[%s380 + $0xe2] sm:$0xff]
      %v465 = vld [vmem:[%s380 + $0xf2] sm:$0xff]
      %v466 = vld [vmem:[%s380 + $0xfa] sm:$0xff]
      %v467 = vld [vmem:[%s380 + $0x10a] sm:$0xff]
      %v468 = vld [vmem:[%s380 + $0x112] sm:$0xff]
      %v469 = vld [vmem:[%s380 + $0x122] sm:$0xff]
      %v470 = vld [vmem:[%s380 + $0x12a] sm:$0xff]
      %v471 = vld [vmem:[%s380 + $0x13a] sm:$0xff]
      %v472 = vld [vmem:[%s380 + $0x142] sm:$0xff]
      %v473 = vld [vmem:[%s380 + $0x152] sm:$0xff]
      %v474 = vld [vmem:[%s380 + $0x15a] sm:$0xff]
      %v475 = vld [vmem:[%s380 + $0x16a] sm:$0xff]
      %v476 = vld [vmem:[%s380 + $0x172] sm:$0xff]
      %s477 = scalar_lea.vmem %s261, 48
      %v478 = vld [vmem:[%s477] sm:$0xff]
      %v479 = vld [vmem:[%s477 + $0x8] sm:$0xff]
      %v480 = vld [vmem:[%s477 + $0x18] sm:$0xff]
      %v481 = vld [vmem:[%s477 + $0x20] sm:$0xff]
      %v482 = vld [vmem:[%s477 + $0x30] sm:$0xff]
      %v483 = vld [vmem:[%s477 + $0x38] sm:$0xff]
      %v484 = vld [vmem:[%s477 + $0x48] sm:$0xff]
      %v485 = vld [vmem:[%s477 + $0x50] sm:$0xff]
      %v486 = vld [vmem:[%s477 + $0x60] sm:$0xff]
      %v487 = vld [vmem:[%s477 + $0x68] sm:$0xff]
      %v488 = vld [vmem:[%s477 + $0x78] sm:$0xff]
      %v489 = vld [vmem:[%s477 + $0x80] sm:$0xff]
      %v490 = vld [vmem:[%s477 + $0x90] sm:$0xff]
      %v491 = vld [vmem:[%s477 + $0x98] sm:$0xff]
      %v492 = vld [vmem:[%s477 + $0xa8] sm:$0xff]
      %v493 = vld [vmem:[%s477 + $0xb0] sm:$0xff]
      %v494 = vld [vmem:[%s477 + $0xc0] sm:$0xff]
      %v495 = vld [vmem:[%s477 + $0xc8] sm:$0xff]
      %v496 = vld [vmem:[%s477 + $0xd8] sm:$0xff]
      %v497 = vld [vmem:[%s477 + $0xe0] sm:$0xff]
      %v498 = vld [vmem:[%s477 + $0xf0] sm:$0xff]
      %v499 = vld [vmem:[%s477 + $0xf8] sm:$0xff]
      %v500 = vld [vmem:[%s477 + $0x108] sm:$0xff]
      %v501 = vld [vmem:[%s477 + $0x110] sm:$0xff]
      %v502 = vld [vmem:[%s477 + $0x120] sm:$0xff]
      %v503 = vld [vmem:[%s477 + $0x128] sm:$0xff]
      %v504 = vld [vmem:[%s477 + $0x138] sm:$0xff]
      %v505 = vld [vmem:[%s477 + $0x140] sm:$0xff]
      %v506 = vld [vmem:[%s477 + $0x150] sm:$0xff]
      %v507 = vld [vmem:[%s477 + $0x158] sm:$0xff]
      %v508 = vld [vmem:[%s477 + $0x168] sm:$0xff]
      %v509 = vld [vmem:[%s477 + $0x170] sm:$0xff]
      %v510 = vld [vmem:[%s477 + $0x1] sm:$0xff]
      %v511 = vld [vmem:[%s477 + $0x9] sm:$0xff]
      %v512 = vld [vmem:[%s477 + $0x19] sm:$0xff]
      %v513 = vld [vmem:[%s477 + $0x21] sm:$0xff]
      %v514 = vld [vmem:[%s477 + $0x31] sm:$0xff]
      %v515 = vld [vmem:[%s477 + $0x39] sm:$0xff]
      %v516 = vld [vmem:[%s477 + $0x49] sm:$0xff]
      %v517 = vld [vmem:[%s477 + $0x51] sm:$0xff]
      %v518 = vld [vmem:[%s477 + $0x61] sm:$0xff]
      %v519 = vld [vmem:[%s477 + $0x69] sm:$0xff]
      %v520 = vld [vmem:[%s477 + $0x79] sm:$0xff]
      %v521 = vld [vmem:[%s477 + $0x81] sm:$0xff]
      %v522 = vld [vmem:[%s477 + $0x91] sm:$0xff]
      %v523 = vld [vmem:[%s477 + $0x99] sm:$0xff]
      %v524 = vld [vmem:[%s477 + $0xa9] sm:$0xff]
      %v525 = vld [vmem:[%s477 + $0xb1] sm:$0xff]
      %v526 = vld [vmem:[%s477 + $0xc1] sm:$0xff]
      %v527 = vld [vmem:[%s477 + $0xc9] sm:$0xff]
      %v528 = vld [vmem:[%s477 + $0xd9] sm:$0xff]
      %v529 = vld [vmem:[%s477 + $0xe1] sm:$0xff]
      %v530 = vld [vmem:[%s477 + $0xf1] sm:$0xff]
      %v531 = vld [vmem:[%s477 + $0xf9] sm:$0xff]
      %v532 = vld [vmem:[%s477 + $0x109] sm:$0xff]
      %v533 = vld [vmem:[%s477 + $0x111] sm:$0xff]
      %v534 = vld [vmem:[%s477 + $0x121] sm:$0xff]
      %v535 = vld [vmem:[%s477 + $0x129] sm:$0xff]
      %v536 = vld [vmem:[%s477 + $0x139] sm:$0xff]
      %v537 = vld [vmem:[%s477 + $0x141] sm:$0xff]
      %v538 = vld [vmem:[%s477 + $0x151] sm:$0xff]
      %v539 = vld [vmem:[%s477 + $0x159] sm:$0xff]
      %v540 = vld [vmem:[%s477 + $0x169] sm:$0xff]
      %v541 = vld [vmem:[%s477 + $0x171] sm:$0xff]
      %v542 = vld [vmem:[%s477 + $0x2] sm:$0xff]
      %v543 = vld [vmem:[%s477 + $0xa] sm:$0xff]
      %v544 = vld [vmem:[%s477 + $0x1a] sm:$0xff]
      %v545 = vld [vmem:[%s477 + $0x22] sm:$0xff]
      %v546 = vld [vmem:[%s477 + $0x32] sm:$0xff]
      %v547 = vld [vmem:[%s477 + $0x3a] sm:$0xff]
      %v548 = vld [vmem:[%s477 + $0x4a] sm:$0xff]
      %v549 = vld [vmem:[%s477 + $0x52] sm:$0xff]
      %v550 = vld [vmem:[%s477 + $0x62] sm:$0xff]
      %v551 = vld [vmem:[%s477 + $0x6a] sm:$0xff]
      %v552 = vld [vmem:[%s477 + $0x7a] sm:$0xff]
      %v553 = vld [vmem:[%s477 + $0x82] sm:$0xff]
      %v554 = vld [vmem:[%s477 + $0x92] sm:$0xff]
      %v555 = vld [vmem:[%s477 + $0x9a] sm:$0xff]
      %v556 = vld [vmem:[%s477 + $0xaa] sm:$0xff]
      %v557 = vld [vmem:[%s477 + $0xb2] sm:$0xff]
      %v558 = vld [vmem:[%s477 + $0xc2] sm:$0xff]
      %v559 = vld [vmem:[%s477 + $0xca] sm:$0xff]
      %v560 = vld [vmem:[%s477 + $0xda] sm:$0xff]
      %v561 = vld [vmem:[%s477 + $0xe2] sm:$0xff]
      %v562 = vld [vmem:[%s477 + $0xf2] sm:$0xff]
      %v563 = vld [vmem:[%s477 + $0xfa] sm:$0xff]
      %v564 = vld [vmem:[%s477 + $0x10a] sm:$0xff]
      %v565 = vld [vmem:[%s477 + $0x112] sm:$0xff]
      %v566 = vld [vmem:[%s477 + $0x122] sm:$0xff]
      %v567 = vld [vmem:[%s477 + $0x12a] sm:$0xff]
      %v568 = vld [vmem:[%s477 + $0x13a] sm:$0xff]
      %v569 = vld [vmem:[%s477 + $0x142] sm:$0xff]
      %v570 = vld [vmem:[%s477 + $0x152] sm:$0xff]
      %v571 = vld [vmem:[%s477 + $0x15a] sm:$0xff]
      %v572 = vld [vmem:[%s477 + $0x16a] sm:$0xff]
      %v573 = vld [vmem:[%s477 + $0x172] sm:$0xff]
      %606 = vrot.lane.b32.xlu0 %v316, 4
      %v607 = vpop.permute.xlu0 %606
      %608 = vrot.lane.b32.xlu0 %v317, 4
      %v609 = vpop.permute.xlu0 %608
      %610 = vrot.lane.b32.xlu0 %v318, 4
      %v611 = vpop.permute.xlu0 %610
      %612 = vrot.lane.b32.xlu0 %v319, 4
      %v613 = vpop.permute.xlu0 %612
      %614 = vrot.lane.b32.xlu0 %v320, 4
      %v615 = vpop.permute.xlu0 %614
      %616 = vrot.lane.b32.xlu0 %v321, 4
      %v617 = vpop.permute.xlu0 %616
      %618 = vrot.lane.b32.xlu0 %v322, 4
      %v619 = vpop.permute.xlu0 %618
      %620 = vrot.lane.b32.xlu0 %v323, 4
      %v621 = vpop.permute.xlu0 %620
      %622 = vrot.lane.b32.xlu0 %v324, 4
      %v623 = vpop.permute.xlu0 %622
      %624 = vrot.lane.b32.xlu0 %v325, 4
      %v625 = vpop.permute.xlu0 %624
      %626 = vrot.lane.b32.xlu0 %v326, 4
      %v627 = vpop.permute.xlu0 %626
      %628 = vrot.lane.b32.xlu0 %v327, 4
      %v629 = vpop.permute.xlu0 %628
      %630 = vrot.lane.b32.xlu0 %v328, 4
      %v631 = vpop.permute.xlu0 %630
      %632 = vrot.lane.b32.xlu0 %v329, 4
      %v633 = vpop.permute.xlu0 %632
      %634 = vrot.lane.b32.xlu0 %v330, 4
      %v635 = vpop.permute.xlu0 %634
      %636 = vrot.lane.b32.xlu0 %v331, 4
      %v637 = vpop.permute.xlu0 %636
      %638 = vrot.lane.b32.xlu0 %v332, 4
      %v639 = vpop.permute.xlu0 %638
      %640 = vrot.lane.b32.xlu0 %v333, 4
      %v641 = vpop.permute.xlu0 %640
      %642 = vrot.lane.b32.xlu0 %v334, 4
      %v643 = vpop.permute.xlu0 %642
      %644 = vrot.lane.b32.xlu0 %v335, 4
      %v645 = vpop.permute.xlu0 %644
      %646 = vrot.lane.b32.xlu0 %v336, 4
      %v647 = vpop.permute.xlu0 %646
      %648 = vrot.lane.b32.xlu0 %v337, 4
      %v649 = vpop.permute.xlu0 %648
      %650 = vrot.lane.b32.xlu0 %v338, 4
      %v651 = vpop.permute.xlu0 %650
      %652 = vrot.lane.b32.xlu0 %v339, 4
      %v653 = vpop.permute.xlu0 %652
      %654 = vrot.lane.b32.xlu0 %v340, 4
      %v655 = vpop.permute.xlu0 %654
      %656 = vrot.lane.b32.xlu0 %v341, 4
      %v657 = vpop.permute.xlu0 %656
      %658 = vrot.lane.b32.xlu0 %v342, 4
      %v659 = vpop.permute.xlu0 %658
      %660 = vrot.lane.b32.xlu0 %v343, 4
      %v661 = vpop.permute.xlu0 %660
      %662 = vrot.lane.b32.xlu0 %v344, 4
      %v663 = vpop.permute.xlu0 %662
      %664 = vrot.lane.b32.xlu0 %v345, 4
      %v665 = vpop.permute.xlu0 %664
      %666 = vrot.lane.b32.xlu0 %v346, 4
      %v667 = vpop.permute.xlu0 %666
      %668 = vrot.lane.b32.xlu0 %v347, 4
      %v669 = vpop.permute.xlu0 %668
      %734 = vrot.lane.b32.xlu0 %v348, 8
      %v735 = vpop.permute.xlu0 %734
      %736 = vrot.lane.b32.xlu0 %v349, 8
      %v737 = vpop.permute.xlu0 %736
      %738 = vrot.lane.b32.xlu0 %v350, 8
      %v739 = vpop.permute.xlu0 %738
      %740 = vrot.lane.b32.xlu0 %v351, 8
      %v741 = vpop.permute.xlu0 %740
      %742 = vrot.lane.b32.xlu0 %v352, 8
      %v743 = vpop.permute.xlu0 %742
      %744 = vrot.lane.b32.xlu0 %v353, 8
      %v745 = vpop.permute.xlu0 %744
      %746 = vrot.lane.b32.xlu0 %v354, 8
      %v747 = vpop.permute.xlu0 %746
      %748 = vrot.lane.b32.xlu0 %v355, 8
      %v749 = vpop.permute.xlu0 %748
      %750 = vrot.lane.b32.xlu0 %v356, 8
      %v751 = vpop.permute.xlu0 %750
      %752 = vrot.lane.b32.xlu0 %v357, 8
      %v753 = vpop.permute.xlu0 %752
      %754 = vrot.lane.b32.xlu0 %v358, 8
      %v755 = vpop.permute.xlu0 %754
      %756 = vrot.lane.b32.xlu0 %v359, 8
      %v757 = vpop.permute.xlu0 %756
      %758 = vrot.lane.b32.xlu0 %v360, 8
      %v759 = vpop.permute.xlu0 %758
      %760 = vrot.lane.b32.xlu0 %v361, 8
      %v761 = vpop.permute.xlu0 %760
      %762 = vrot.lane.b32.xlu0 %v362, 8
      %v763 = vpop.permute.xlu0 %762
      %764 = vrot.lane.b32.xlu0 %v363, 8
      %v765 = vpop.permute.xlu0 %764
      %766 = vrot.lane.b32.xlu0 %v364, 8
      %v767 = vpop.permute.xlu0 %766
      %768 = vrot.lane.b32.xlu0 %v365, 8
      %v769 = vpop.permute.xlu0 %768
      %770 = vrot.lane.b32.xlu0 %v366, 8
      %v771 = vpop.permute.xlu0 %770
      %772 = vrot.lane.b32.xlu0 %v367, 8
      %v773 = vpop.permute.xlu0 %772
      %774 = vrot.lane.b32.xlu0 %v368, 8
      %v775 = vpop.permute.xlu0 %774
      %776 = vrot.lane.b32.xlu0 %v369, 8
      %v777 = vpop.permute.xlu0 %776
      %778 = vrot.lane.b32.xlu0 %v370, 8
      %v779 = vpop.permute.xlu0 %778
      %780 = vrot.lane.b32.xlu0 %v371, 8
      %v781 = vpop.permute.xlu0 %780
      %782 = vrot.lane.b32.xlu0 %v372, 8
      %v783 = vpop.permute.xlu0 %782
      %784 = vrot.lane.b32.xlu0 %v373, 8
      %v785 = vpop.permute.xlu0 %784
      %786 = vrot.lane.b32.xlu0 %v374, 8
      %v787 = vpop.permute.xlu0 %786
      %788 = vrot.lane.b32.xlu0 %v375, 8
      %v789 = vpop.permute.xlu0 %788
      %790 = vrot.lane.b32.xlu0 %v376, 8
      %v791 = vpop.permute.xlu0 %790
      %792 = vrot.lane.b32.xlu0 %v377, 8
      %v793 = vpop.permute.xlu0 %792
      %794 = vrot.lane.b32.xlu0 %v378, 8
      %v795 = vpop.permute.xlu0 %794
      %796 = vrot.lane.b32.xlu0 %v379, 8
      %v797 = vpop.permute.xlu0 %796
      %862 = vrot.lane.b32.xlu0 %v381, 12
      %v863 = vpop.permute.xlu0 %862
      %864 = vrot.lane.b32.xlu0 %v382, 12
      %v865 = vpop.permute.xlu0 %864
      %866 = vrot.lane.b32.xlu0 %v383, 12
      %v867 = vpop.permute.xlu0 %866
      %868 = vrot.lane.b32.xlu0 %v384, 12
      %v869 = vpop.permute.xlu0 %868
      %870 = vrot.lane.b32.xlu0 %v385, 12
      %v871 = vpop.permute.xlu0 %870
      %872 = vrot.lane.b32.xlu0 %v386, 12
      %v873 = vpop.permute.xlu0 %872
      %874 = vrot.lane.b32.xlu0 %v387, 12
      %v875 = vpop.permute.xlu0 %874
      %876 = vrot.lane.b32.xlu0 %v388, 12
      %v877 = vpop.permute.xlu0 %876
      %878 = vrot.lane.b32.xlu0 %v389, 12
      %v879 = vpop.permute.xlu0 %878
      %880 = vrot.lane.b32.xlu0 %v390, 12
      %v881 = vpop.permute.xlu0 %880
      %882 = vrot.lane.b32.xlu0 %v391, 12
      %v883 = vpop.permute.xlu0 %882
      %884 = vrot.lane.b32.xlu0 %v392, 12
      %v885 = vpop.permute.xlu0 %884
      %886 = vrot.lane.b32.xlu0 %v393, 12
      %v887 = vpop.permute.xlu0 %886
      %888 = vrot.lane.b32.xlu0 %v394, 12
      %v889 = vpop.permute.xlu0 %888
      %890 = vrot.lane.b32.xlu0 %v395, 12
      %v891 = vpop.permute.xlu0 %890
      %892 = vrot.lane.b32.xlu0 %v396, 12
      %v893 = vpop.permute.xlu0 %892
      %894 = vrot.lane.b32.xlu0 %v397, 12
      %v895 = vpop.permute.xlu0 %894
      %896 = vrot.lane.b32.xlu0 %v398, 12
      %v897 = vpop.permute.xlu0 %896
      %898 = vrot.lane.b32.xlu0 %v399, 12
      %v899 = vpop.permute.xlu0 %898
      %900 = vrot.lane.b32.xlu0 %v400, 12
      %v901 = vpop.permute.xlu0 %900
      %902 = vrot.lane.b32.xlu0 %v401, 12
      %v903 = vpop.permute.xlu0 %902
      %904 = vrot.lane.b32.xlu0 %v402, 12
      %v905 = vpop.permute.xlu0 %904
      %906 = vrot.lane.b32.xlu0 %v403, 12
      %v907 = vpop.permute.xlu0 %906
      %908 = vrot.lane.b32.xlu0 %v404, 12
      %v909 = vpop.permute.xlu0 %908
      %910 = vrot.lane.b32.xlu0 %v405, 12
      %v911 = vpop.permute.xlu0 %910
      %912 = vrot.lane.b32.xlu0 %v406, 12
      %v913 = vpop.permute.xlu0 %912
      %914 = vrot.lane.b32.xlu0 %v407, 12
      %v915 = vpop.permute.xlu0 %914
      %916 = vrot.lane.b32.xlu0 %v408, 12
      %v917 = vpop.permute.xlu0 %916
      %918 = vrot.lane.b32.xlu0 %v409, 12
      %v919 = vpop.permute.xlu0 %918
      %920 = vrot.lane.b32.xlu0 %v410, 12
      %v921 = vpop.permute.xlu0 %920
      %922 = vrot.lane.b32.xlu0 %v411, 12
      %v923 = vpop.permute.xlu0 %922
      %924 = vrot.lane.b32.xlu0 %v412, 12
      %v925 = vpop.permute.xlu0 %924
      %990 = vrot.lane.b32.xlu0 %v413, 16
      %v991 = vpop.permute.xlu0 %990
      %992 = vrot.lane.b32.xlu0 %v414, 16
      %v993 = vpop.permute.xlu0 %992
      %994 = vrot.lane.b32.xlu0 %v415, 16
      %v995 = vpop.permute.xlu0 %994
      %996 = vrot.lane.b32.xlu0 %v416, 16
      %v997 = vpop.permute.xlu0 %996
      %998 = vrot.lane.b32.xlu0 %v417, 16
      %v999 = vpop.permute.xlu0 %998
      %1000 = vrot.lane.b32.xlu0 %v418, 16
      %v1001 = vpop.permute.xlu0 %1000
      %1002 = vrot.lane.b32.xlu0 %v419, 16
      %v1003 = vpop.permute.xlu0 %1002
      %1004 = vrot.lane.b32.xlu0 %v420, 16
      %v1005 = vpop.permute.xlu0 %1004
      %1006 = vrot.lane.b32.xlu0 %v421, 16
      %v1007 = vpop.permute.xlu0 %1006
      %1008 = vrot.lane.b32.xlu0 %v422, 16
      %v1009 = vpop.permute.xlu0 %1008
      %1010 = vrot.lane.b32.xlu0 %v423, 16
      %v1011 = vpop.permute.xlu0 %1010
      %1012 = vrot.lane.b32.xlu0 %v424, 16
      %v1013 = vpop.permute.xlu0 %1012
      %1014 = vrot.lane.b32.xlu0 %v425, 16
      %v1015 = vpop.permute.xlu0 %1014
      %1016 = vrot.lane.b32.xlu0 %v426, 16
      %v1017 = vpop.permute.xlu0 %1016
      %1018 = vrot.lane.b32.xlu0 %v427, 16
      %v1019 = vpop.permute.xlu0 %1018
      %1020 = vrot.lane.b32.xlu0 %v428, 16
      %v1021 = vpop.permute.xlu0 %1020
      %1022 = vrot.lane.b32.xlu0 %v429, 16
      %v1023 = vpop.permute.xlu0 %1022
      %1024 = vrot.lane.b32.xlu0 %v430, 16
      %v1025 = vpop.permute.xlu0 %1024
      %1026 = vrot.lane.b32.xlu0 %v431, 16
      %v1027 = vpop.permute.xlu0 %1026
      %1028 = vrot.lane.b32.xlu0 %v432, 16
      %v1029 = vpop.permute.xlu0 %1028
      %1030 = vrot.lane.b32.xlu0 %v433, 16
      %v1031 = vpop.permute.xlu0 %1030
      %1032 = vrot.lane.b32.xlu0 %v434, 16
      %v1033 = vpop.permute.xlu0 %1032
      %1034 = vrot.lane.b32.xlu0 %v435, 16
      %v1035 = vpop.permute.xlu0 %1034
      %1036 = vrot.lane.b32.xlu0 %v436, 16
      %v1037 = vpop.permute.xlu0 %1036
      %1038 = vrot.lane.b32.xlu0 %v437, 16
      %v1039 = vpop.permute.xlu0 %1038
      %1040 = vrot.lane.b32.xlu0 %v438, 16
      %v1041 = vpop.permute.xlu0 %1040
      %1042 = vrot.lane.b32.xlu0 %v439, 16
      %v1043 = vpop.permute.xlu0 %1042
      %1044 = vrot.lane.b32.xlu0 %v440, 16
      %v1045 = vpop.permute.xlu0 %1044
      %1046 = vrot.lane.b32.xlu0 %v441, 16
      %v1047 = vpop.permute.xlu0 %1046
      %1048 = vrot.lane.b32.xlu0 %v442, 16
      %v1049 = vpop.permute.xlu0 %1048
      %1050 = vrot.lane.b32.xlu0 %v443, 16
      %v1051 = vpop.permute.xlu0 %1050
      %1052 = vrot.lane.b32.xlu0 %v444, 16
      %v1053 = vpop.permute.xlu0 %1052
      %1118 = vrot.lane.b32.xlu0 %v445, 20
      %v1119 = vpop.permute.xlu0 %1118
      %1120 = vrot.lane.b32.xlu0 %v446, 20
      %v1121 = vpop.permute.xlu0 %1120
      %1122 = vrot.lane.b32.xlu0 %v447, 20
      %v1123 = vpop.permute.xlu0 %1122
      %1124 = vrot.lane.b32.xlu0 %v448, 20
      %v1125 = vpop.permute.xlu0 %1124
      %1126 = vrot.lane.b32.xlu0 %v449, 20
      %v1127 = vpop.permute.xlu0 %1126
      %1128 = vrot.lane.b32.xlu0 %v450, 20
      %v1129 = vpop.permute.xlu0 %1128
      %1130 = vrot.lane.b32.xlu0 %v451, 20
      %v1131 = vpop.permute.xlu0 %1130
      %1132 = vrot.lane.b32.xlu0 %v452, 20
      %v1133 = vpop.permute.xlu0 %1132
      %1134 = vrot.lane.b32.xlu0 %v453, 20
      %v1135 = vpop.permute.xlu0 %1134
      %1136 = vrot.lane.b32.xlu0 %v454, 20
      %v1137 = vpop.permute.xlu0 %1136
      %1138 = vrot.lane.b32.xlu0 %v455, 20
      %v1139 = vpop.permute.xlu0 %1138
      %1140 = vrot.lane.b32.xlu0 %v456, 20
      %v1141 = vpop.permute.xlu0 %1140
      %1142 = vrot.lane.b32.xlu0 %v457, 20
      %v1143 = vpop.permute.xlu0 %1142
      %1144 = vrot.lane.b32.xlu0 %v458, 20
      %v1145 = vpop.permute.xlu0 %1144
      %1146 = vrot.lane.b32.xlu0 %v459, 20
      %v1147 = vpop.permute.xlu0 %1146
      %1148 = vrot.lane.b32.xlu0 %v460, 20
      %v1149 = vpop.permute.xlu0 %1148
      %1150 = vrot.lane.b32.xlu0 %v461, 20
      %v1151 = vpop.permute.xlu0 %1150
      %1152 = vrot.lane.b32.xlu0 %v462, 20
      %v1153 = vpop.permute.xlu0 %1152
      %1154 = vrot.lane.b32.xlu0 %v463, 20
      %v1155 = vpop.permute.xlu0 %1154
      %1156 = vrot.lane.b32.xlu0 %v464, 20
      %v1157 = vpop.permute.xlu0 %1156
      %1158 = vrot.lane.b32.xlu0 %v465, 20
      %v1159 = vpop.permute.xlu0 %1158
      %1160 = vrot.lane.b32.xlu0 %v466, 20
      %v1161 = vpop.permute.xlu0 %1160
      %1162 = vrot.lane.b32.xlu0 %v467, 20
      %v1163 = vpop.permute.xlu0 %1162
      %1164 = vrot.lane.b32.xlu0 %v468, 20
      %v1165 = vpop.permute.xlu0 %1164
      %1166 = vrot.lane.b32.xlu0 %v469, 20
      %v1167 = vpop.permute.xlu0 %1166
      %1168 = vrot.lane.b32.xlu0 %v470, 20
      %v1169 = vpop.permute.xlu0 %1168
      %1170 = vrot.lane.b32.xlu0 %v471, 20
      %v1171 = vpop.permute.xlu0 %1170
      %1172 = vrot.lane.b32.xlu0 %v472, 20
      %v1173 = vpop.permute.xlu0 %1172
      %1174 = vrot.lane.b32.xlu0 %v473, 20
      %v1175 = vpop.permute.xlu0 %1174
      %1176 = vrot.lane.b32.xlu0 %v474, 20
      %v1177 = vpop.permute.xlu0 %1176
      %1178 = vrot.lane.b32.xlu0 %v475, 20
      %v1179 = vpop.permute.xlu0 %1178
      %1180 = vrot.lane.b32.xlu0 %v476, 20
      %v1181 = vpop.permute.xlu0 %1180
      %1246 = vrot.lane.b32.xlu0 %v478, 24
      %v1247 = vpop.permute.xlu0 %1246
      %1248 = vrot.lane.b32.xlu0 %v479, 24
      %v1249 = vpop.permute.xlu0 %1248
      %1250 = vrot.lane.b32.xlu0 %v480, 24
      %v1251 = vpop.permute.xlu0 %1250
      %1252 = vrot.lane.b32.xlu0 %v481, 24
      %v1253 = vpop.permute.xlu0 %1252
      %1254 = vrot.lane.b32.xlu0 %v482, 24
      %v1255 = vpop.permute.xlu0 %1254
      %1256 = vrot.lane.b32.xlu0 %v483, 24
      %v1257 = vpop.permute.xlu0 %1256
      %1258 = vrot.lane.b32.xlu0 %v484, 24
      %v1259 = vpop.permute.xlu0 %1258
      %1260 = vrot.lane.b32.xlu0 %v485, 24
      %v1261 = vpop.permute.xlu0 %1260
      %1262 = vrot.lane.b32.xlu0 %v486, 24
      %v1263 = vpop.permute.xlu0 %1262
      %1264 = vrot.lane.b32.xlu0 %v487, 24
      %v1265 = vpop.permute.xlu0 %1264
      %1266 = vrot.lane.b32.xlu0 %v488, 24
      %v1267 = vpop.permute.xlu0 %1266
      %1268 = vrot.lane.b32.xlu0 %v489, 24
      %v1269 = vpop.permute.xlu0 %1268
      %1270 = vrot.lane.b32.xlu0 %v490, 24
      %v1271 = vpop.permute.xlu0 %1270
      %1272 = vrot.lane.b32.xlu0 %v491, 24
      %v1273 = vpop.permute.xlu0 %1272
      %1274 = vrot.lane.b32.xlu0 %v492, 24
      %v1275 = vpop.permute.xlu0 %1274
      %1276 = vrot.lane.b32.xlu0 %v493, 24
      %v1277 = vpop.permute.xlu0 %1276
      %1278 = vrot.lane.b32.xlu0 %v494, 24
      %v1279 = vpop.permute.xlu0 %1278
      %1280 = vrot.lane.b32.xlu0 %v495, 24
      %v1281 = vpop.permute.xlu0 %1280
      %1282 = vrot.lane.b32.xlu0 %v496, 24
      %v1283 = vpop.permute.xlu0 %1282
      %1284 = vrot.lane.b32.xlu0 %v497, 24
      %v1285 = vpop.permute.xlu0 %1284
      %1286 = vrot.lane.b32.xlu0 %v498, 24
      %v1287 = vpop.permute.xlu0 %1286
      %1288 = vrot.lane.b32.xlu0 %v499, 24
      %v1289 = vpop.permute.xlu0 %1288
      %1290 = vrot.lane.b32.xlu0 %v500, 24
      %v1291 = vpop.permute.xlu0 %1290
      %1292 = vrot.lane.b32.xlu0 %v501, 24
      %v1293 = vpop.permute.xlu0 %1292
      %1294 = vrot.lane.b32.xlu0 %v502, 24
      %v1295 = vpop.permute.xlu0 %1294
      %1296 = vrot.lane.b32.xlu0 %v503, 24
      %v1297 = vpop.permute.xlu0 %1296
      %1298 = vrot.lane.b32.xlu0 %v504, 24
      %v1299 = vpop.permute.xlu0 %1298
      %1300 = vrot.lane.b32.xlu0 %v505, 24
      %v1301 = vpop.permute.xlu0 %1300
      %1302 = vrot.lane.b32.xlu0 %v506, 24
      %v1303 = vpop.permute.xlu0 %1302
      %1304 = vrot.lane.b32.xlu0 %v507, 24
      %v1305 = vpop.permute.xlu0 %1304
      %1306 = vrot.lane.b32.xlu0 %v508, 24
      %v1307 = vpop.permute.xlu0 %1306
      %1308 = vrot.lane.b32.xlu0 %v509, 24
      %v1309 = vpop.permute.xlu0 %1308
      %1374 = vrot.lane.b32.xlu0 %v510, 28
      %v1375 = vpop.permute.xlu0 %1374
      %1376 = vrot.lane.b32.xlu0 %v511, 28
      %v1377 = vpop.permute.xlu0 %1376
      %1378 = vrot.lane.b32.xlu0 %v512, 28
      %v1379 = vpop.permute.xlu0 %1378
      %1380 = vrot.lane.b32.xlu0 %v513, 28
      %v1381 = vpop.permute.xlu0 %1380
      %1382 = vrot.lane.b32.xlu0 %v514, 28
      %v1383 = vpop.permute.xlu0 %1382
      %1384 = vrot.lane.b32.xlu0 %v515, 28
      %v1385 = vpop.permute.xlu0 %1384
      %1386 = vrot.lane.b32.xlu0 %v516, 28
      %v1387 = vpop.permute.xlu0 %1386
      %1388 = vrot.lane.b32.xlu0 %v517, 28
      %v1389 = vpop.permute.xlu0 %1388
      %1390 = vrot.lane.b32.xlu0 %v518, 28
      %v1391 = vpop.permute.xlu0 %1390
      %1392 = vrot.lane.b32.xlu0 %v519, 28
      %v1393 = vpop.permute.xlu0 %1392
      %1394 = vrot.lane.b32.xlu0 %v520, 28
      %v1395 = vpop.permute.xlu0 %1394
      %1396 = vrot.lane.b32.xlu0 %v521, 28
      %v1397 = vpop.permute.xlu0 %1396
      %1398 = vrot.lane.b32.xlu0 %v522, 28
      %v1399 = vpop.permute.xlu0 %1398
      %1400 = vrot.lane.b32.xlu0 %v523, 28
      %v1401 = vpop.permute.xlu0 %1400
      %1402 = vrot.lane.b32.xlu0 %v524, 28
      %v1403 = vpop.permute.xlu0 %1402
      %1404 = vrot.lane.b32.xlu0 %v525, 28
      %v1405 = vpop.permute.xlu0 %1404
      %1406 = vrot.lane.b32.xlu0 %v526, 28
      %v1407 = vpop.permute.xlu0 %1406
      %1408 = vrot.lane.b32.xlu0 %v527, 28
      %v1409 = vpop.permute.xlu0 %1408
      %1410 = vrot.lane.b32.xlu0 %v528, 28
      %v1411 = vpop.permute.xlu0 %1410
      %1412 = vrot.lane.b32.xlu0 %v529, 28
      %v1413 = vpop.permute.xlu0 %1412
      %1414 = vrot.lane.b32.xlu0 %v530, 28
      %v1415 = vpop.permute.xlu0 %1414
      %1416 = vrot.lane.b32.xlu0 %v531, 28
      %v1417 = vpop.permute.xlu0 %1416
      %1418 = vrot.lane.b32.xlu0 %v532, 28
      %v1419 = vpop.permute.xlu0 %1418
      %1420 = vrot.lane.b32.xlu0 %v533, 28
      %v1421 = vpop.permute.xlu0 %1420
      %1422 = vrot.lane.b32.xlu0 %v534, 28
      %v1423 = vpop.permute.xlu0 %1422
      %1424 = vrot.lane.b32.xlu0 %v535, 28
      %v1425 = vpop.permute.xlu0 %1424
      %1426 = vrot.lane.b32.xlu0 %v536, 28
      %v1427 = vpop.permute.xlu0 %1426
      %1428 = vrot.lane.b32.xlu0 %v537, 28
      %v1429 = vpop.permute.xlu0 %1428
      %1430 = vrot.lane.b32.xlu0 %v538, 28
      %v1431 = vpop.permute.xlu0 %1430
      %1432 = vrot.lane.b32.xlu0 %v539, 28
      %v1433 = vpop.permute.xlu0 %1432
      %1434 = vrot.lane.b32.xlu0 %v540, 28
      %v1435 = vpop.permute.xlu0 %1434
      %1436 = vrot.lane.b32.xlu0 %v541, 28
      %v1437 = vpop.permute.xlu0 %1436
      %1502 = vrot.lane.b32.xlu0 %v542, 32
      %v1503 = vpop.permute.xlu0 %1502
      %1504 = vrot.lane.b32.xlu0 %v543, 32
      %v1505 = vpop.permute.xlu0 %1504
      %1506 = vrot.lane.b32.xlu0 %v544, 32
      %v1507 = vpop.permute.xlu0 %1506
      %1508 = vrot.lane.b32.xlu0 %v545, 32
      %v1509 = vpop.permute.xlu0 %1508
      %1510 = vrot.lane.b32.xlu0 %v546, 32
      %v1511 = vpop.permute.xlu0 %1510
      %1512 = vrot.lane.b32.xlu0 %v547, 32
      %v1513 = vpop.permute.xlu0 %1512
      %1514 = vrot.lane.b32.xlu0 %v548, 32
      %v1515 = vpop.permute.xlu0 %1514
      %1516 = vrot.lane.b32.xlu0 %v549, 32
      %v1517 = vpop.permute.xlu0 %1516
      %1518 = vrot.lane.b32.xlu0 %v550, 32
      %v1519 = vpop.permute.xlu0 %1518
      %1520 = vrot.lane.b32.xlu0 %v551, 32
      %v1521 = vpop.permute.xlu0 %1520
      %1522 = vrot.lane.b32.xlu0 %v552, 32
      %v1523 = vpop.permute.xlu0 %1522
      %1524 = vrot.lane.b32.xlu0 %v553, 32
      %v1525 = vpop.permute.xlu0 %1524
      %1526 = vrot.lane.b32.xlu0 %v554, 32
      %v1527 = vpop.permute.xlu0 %1526
      %1528 = vrot.lane.b32.xlu0 %v555, 32
      %v1529 = vpop.permute.xlu0 %1528
      %1530 = vrot.lane.b32.xlu0 %v556, 32
      %v1531 = vpop.permute.xlu0 %1530
      %1532 = vrot.lane.b32.xlu0 %v557, 32
      %v1533 = vpop.permute.xlu0 %1532
      %1534 = vrot.lane.b32.xlu0 %v558, 32
      %v1535 = vpop.permute.xlu0 %1534
      %1536 = vrot.lane.b32.xlu0 %v559, 32
      %v1537 = vpop.permute.xlu0 %1536
      %1538 = vrot.lane.b32.xlu0 %v560, 32
      %v1539 = vpop.permute.xlu0 %1538
      %1540 = vrot.lane.b32.xlu0 %v561, 32
      %v1541 = vpop.permute.xlu0 %1540
      %1542 = vrot.lane.b32.xlu0 %v562, 32
      %v1543 = vpop.permute.xlu0 %1542
      %1544 = vrot.lane.b32.xlu0 %v563, 32
      %v1545 = vpop.permute.xlu0 %1544
      %1546 = vrot.lane.b32.xlu0 %v564, 32
      %v1547 = vpop.permute.xlu0 %1546
      %1548 = vrot.lane.b32.xlu0 %v565, 32
      %v1549 = vpop.permute.xlu0 %1548
      %1550 = vrot.lane.b32.xlu0 %v566, 32
      %v1551 = vpop.permute.xlu0 %1550
      %1552 = vrot.lane.b32.xlu0 %v567, 32
      %v1553 = vpop.permute.xlu0 %1552
      %1554 = vrot.lane.b32.xlu0 %v568, 32
      %v1555 = vpop.permute.xlu0 %1554
      %1556 = vrot.lane.b32.xlu0 %v569, 32
      %v1557 = vpop.permute.xlu0 %1556
      %1558 = vrot.lane.b32.xlu0 %v570, 32
      %v1559 = vpop.permute.xlu0 %1558
      %1560 = vrot.lane.b32.xlu0 %v571, 32
      %v1561 = vpop.permute.xlu0 %1560
      %1562 = vrot.lane.b32.xlu0 %v572, 32
      %v1563 = vpop.permute.xlu0 %1562
      %1564 = vrot.lane.b32.xlu0 %v573, 32
      %v1565 = vpop.permute.xlu0 %1564
      %vm1598 = vcmask 31744
      %v1599 = vsel %vm1598, %v284, %v607
      %v1600 = vsel %vm1598, %v285, %v609
      %v1601 = vsel %vm1598, %v286, %v611
      %v1602 = vsel %vm1598, %v287, %v613
      %v1603 = vsel %vm1598, %v288, %v615
      %v1604 = vsel %vm1598, %v289, %v617
      %v1605 = vsel %vm1598, %v290, %v619
      %v1606 = vsel %vm1598, %v291, %v621
      %v1607 = vsel %vm1598, %v292, %v623
      %v1608 = vsel %vm1598, %v293, %v625
      %v1609 = vsel %vm1598, %v294, %v627
      %v1610 = vsel %vm1598, %v295, %v629
      %v1611 = vsel %vm1598, %v296, %v631
      %v1612 = vsel %vm1598, %v297, %v633
      %v1613 = vsel %vm1598, %v298, %v635
      %v1614 = vsel %vm1598, %v299, %v637
      %v1615 = vsel %vm1598, %v300, %v639
      %v1616 = vsel %vm1598, %v301, %v641
      %v1617 = vsel %vm1598, %v302, %v643
      %v1618 = vsel %vm1598, %v303, %v645
      %v1619 = vsel %vm1598, %v304, %v647
      %v1620 = vsel %vm1598, %v305, %v649
      %v1621 = vsel %vm1598, %v306, %v651
      %v1622 = vsel %vm1598, %v307, %v653
      %v1623 = vsel %vm1598, %v308, %v655
      %v1624 = vsel %vm1598, %v309, %v657
      %v1625 = vsel %vm1598, %v310, %v659
      %v1626 = vsel %vm1598, %v311, %v661
      %v1627 = vsel %vm1598, %v312, %v663
      %v1628 = vsel %vm1598, %v313, %v665
      %v1629 = vsel %vm1598, %v314, %v667
      %v1630 = vsel %vm1598, %v315, %v669
      %vm1631 = vcmask 64512
      %v1632 = vsel %vm1631, %v1599, %v735
      %v1633 = vsel %vm1631, %v1600, %v737
      %v1634 = vsel %vm1631, %v1601, %v739
      %v1635 = vsel %vm1631, %v1602, %v741
      %v1636 = vsel %vm1631, %v1603, %v743
      %v1637 = vsel %vm1631, %v1604, %v745
      %v1638 = vsel %vm1631, %v1605, %v747
      %v1639 = vsel %vm1631, %v1606, %v749
      %v1640 = vsel %vm1631, %v1607, %v751
      %v1641 = vsel %vm1631, %v1608, %v753
      %v1642 = vsel %vm1631, %v1609, %v755
      %v1643 = vsel %vm1631, %v1610, %v757
      %v1644 = vsel %vm1631, %v1611, %v759
      %v1645 = vsel %vm1631, %v1612, %v761
      %v1646 = vsel %vm1631, %v1613, %v763
      %v1647 = vsel %vm1631, %v1614, %v765
      %v1648 = vsel %vm1631, %v1615, %v767
      %v1649 = vsel %vm1631, %v1616, %v769
      %v1650 = vsel %vm1631, %v1617, %v771
      %v1651 = vsel %vm1631, %v1618, %v773
      %v1652 = vsel %vm1631, %v1619, %v775
      %v1653 = vsel %vm1631, %v1620, %v777
      %v1654 = vsel %vm1631, %v1621, %v779
      %v1655 = vsel %vm1631, %v1622, %v781
      %v1656 = vsel %vm1631, %v1623, %v783
      %v1657 = vsel %vm1631, %v1624, %v785
      %v1658 = vsel %vm1631, %v1625, %v787
      %v1659 = vsel %vm1631, %v1626, %v789
      %v1660 = vsel %vm1631, %v1627, %v791
      %v1661 = vsel %vm1631, %v1628, %v793
      %v1662 = vsel %vm1631, %v1629, %v795
      %v1663 = vsel %vm1631, %v1630, %v797
      %vm1664 = vcmask 97280
      %v1665 = vsel %vm1664, %v1632, %v863
      %v1666 = vsel %vm1664, %v1633, %v865
      %v1667 = vsel %vm1664, %v1634, %v867
      %v1668 = vsel %vm1664, %v1635, %v869
      %v1669 = vsel %vm1664, %v1636, %v871
      %v1670 = vsel %vm1664, %v1637, %v873
      %v1671 = vsel %vm1664, %v1638, %v875
      %v1672 = vsel %vm1664, %v1639, %v877
      %v1673 = vsel %vm1664, %v1640, %v879
      %v1674 = vsel %vm1664, %v1641, %v881
      %v1675 = vsel %vm1664, %v1642, %v883
      %v1676 = vsel %vm1664, %v1643, %v885
      %v1677 = vsel %vm1664, %v1644, %v887
      %v1678 = vsel %vm1664, %v1645, %v889
      %v1679 = vsel %vm1664, %v1646, %v891
      %v1680 = vsel %vm1664, %v1647, %v893
      %v1681 = vsel %vm1664, %v1648, %v895
      %v1682 = vsel %vm1664, %v1649, %v897
      %v1683 = vsel %vm1664, %v1650, %v899
      %v1684 = vsel %vm1664, %v1651, %v901
      %v1685 = vsel %vm1664, %v1652, %v903
      %v1686 = vsel %vm1664, %v1653, %v905
      %v1687 = vsel %vm1664, %v1654, %v907
      %v1688 = vsel %vm1664, %v1655, %v909
      %v1689 = vsel %vm1664, %v1656, %v911
      %v1690 = vsel %vm1664, %v1657, %v913
      %v1691 = vsel %vm1664, %v1658, %v915
      %v1692 = vsel %vm1664, %v1659, %v917
      %v1693 = vsel %vm1664, %v1660, %v919
      %v1694 = vsel %vm1664, %v1661, %v921
      %v1695 = vsel %vm1664, %v1662, %v923
      %v1696 = vsel %vm1664, %v1663, %v925
      %vm1697 = vcmask 130048
      %v1698 = vsel %vm1697, %v1665, %v991
      %v1699 = vsel %vm1697, %v1666, %v993
      %v1700 = vsel %vm1697, %v1667, %v995
      %v1701 = vsel %vm1697, %v1668, %v997
      %v1702 = vsel %vm1697, %v1669, %v999
      %v1703 = vsel %vm1697, %v1670, %v1001
      %v1704 = vsel %vm1697, %v1671, %v1003
      %v1705 = vsel %vm1697, %v1672, %v1005
      %v1706 = vsel %vm1697, %v1673, %v1007
      %v1707 = vsel %vm1697, %v1674, %v1009
      %v1708 = vsel %vm1697, %v1675, %v1011
      %v1709 = vsel %vm1697, %v1676, %v1013
      %v1710 = vsel %vm1697, %v1677, %v1015
      %v1711 = vsel %vm1697, %v1678, %v1017
      %v1712 = vsel %vm1697, %v1679, %v1019
      %v1713 = vsel %vm1697, %v1680, %v1021
      %v1714 = vsel %vm1697, %v1681, %v1023
      %v1715 = vsel %vm1697, %v1682, %v1025
      %v1716 = vsel %vm1697, %v1683, %v1027
      %v1717 = vsel %vm1697, %v1684, %v1029
      %v1718 = vsel %vm1697, %v1685, %v1031
      %v1719 = vsel %vm1697, %v1686, %v1033
      %v1720 = vsel %vm1697, %v1687, %v1035
      %v1721 = vsel %vm1697, %v1688, %v1037
      %v1722 = vsel %vm1697, %v1689, %v1039
      %v1723 = vsel %vm1697, %v1690, %v1041
      %v1724 = vsel %vm1697, %v1691, %v1043
      %v1725 = vsel %vm1697, %v1692, %v1045
      %v1726 = vsel %vm1697, %v1693, %v1047
      %v1727 = vsel %vm1697, %v1694, %v1049
      %v1728 = vsel %vm1697, %v1695, %v1051
      %v1729 = vsel %vm1697, %v1696, %v1053
      %vm1730 = vcmask 162816
      %v1731 = vsel %vm1730, %v1698, %v1119
      %v1732 = vsel %vm1730, %v1699, %v1121
      %v1733 = vsel %vm1730, %v1700, %v1123
      %v1734 = vsel %vm1730, %v1701, %v1125
      %v1735 = vsel %vm1730, %v1702, %v1127
      %v1736 = vsel %vm1730, %v1703, %v1129
      %v1737 = vsel %vm1730, %v1704, %v1131
      %v1738 = vsel %vm1730, %v1705, %v1133
      %v1739 = vsel %vm1730, %v1706, %v1135
      %v1740 = vsel %vm1730, %v1707, %v1137
      %v1741 = vsel %vm1730, %v1708, %v1139
      %v1742 = vsel %vm1730, %v1709, %v1141
      %v1743 = vsel %vm1730, %v1710, %v1143
      %v1744 = vsel %vm1730, %v1711, %v1145
      %v1745 = vsel %vm1730, %v1712, %v1147
      %v1746 = vsel %vm1730, %v1713, %v1149
      %v1747 = vsel %vm1730, %v1714, %v1151
      %v1748 = vsel %vm1730, %v1715, %v1153
      %v1749 = vsel %vm1730, %v1716, %v1155
      %v1750 = vsel %vm1730, %v1717, %v1157
      %v1751 = vsel %vm1730, %v1718, %v1159
      %v1752 = vsel %vm1730, %v1719, %v1161
      %v1753 = vsel %vm1730, %v1720, %v1163
      %v1754 = vsel %vm1730, %v1721, %v1165
      %v1755 = vsel %vm1730, %v1722, %v1167
      %v1756 = vsel %vm1730, %v1723, %v1169
      %v1757 = vsel %vm1730, %v1724, %v1171
      %v1758 = vsel %vm1730, %v1725, %v1173
      %v1759 = vsel %vm1730, %v1726, %v1175
      %v1760 = vsel %vm1730, %v1727, %v1177
      %v1761 = vsel %vm1730, %v1728, %v1179
      %v1762 = vsel %vm1730, %v1729, %v1181
      %vm1763 = vcmask 195584
      %v1764 = vsel %vm1763, %v1731, %v1247
      %v1765 = vsel %vm1763, %v1732, %v1249
      %v1766 = vsel %vm1763, %v1733, %v1251
      %v1767 = vsel %vm1763, %v1734, %v1253
      %v1768 = vsel %vm1763, %v1735, %v1255
      %v1769 = vsel %vm1763, %v1736, %v1257
      %v1770 = vsel %vm1763, %v1737, %v1259
      %v1771 = vsel %vm1763, %v1738, %v1261
      %v1772 = vsel %vm1763, %v1739, %v1263
      %v1773 = vsel %vm1763, %v1740, %v1265
      %v1774 = vsel %vm1763, %v1741, %v1267
      %v1775 = vsel %vm1763, %v1742, %v1269
      %v1776 = vsel %vm1763, %v1743, %v1271
      %v1777 = vsel %vm1763, %v1744, %v1273
      %v1778 = vsel %vm1763, %v1745, %v1275
      %v1779 = vsel %vm1763, %v1746, %v1277
      %v1780 = vsel %vm1763, %v1747, %v1279
      %v1781 = vsel %vm1763, %v1748, %v1281
      %v1782 = vsel %vm1763, %v1749, %v1283
      %v1783 = vsel %vm1763, %v1750, %v1285
      %v1784 = vsel %vm1763, %v1751, %v1287
      %v1785 = vsel %vm1763, %v1752, %v1289
      %v1786 = vsel %vm1763, %v1753, %v1291
      %v1787 = vsel %vm1763, %v1754, %v1293
      %v1788 = vsel %vm1763, %v1755, %v1295
      %v1789 = vsel %vm1763, %v1756, %v1297
      %v1790 = vsel %vm1763, %v1757, %v1299
      %v1791 = vsel %vm1763, %v1758, %v1301
      %v1792 = vsel %vm1763, %v1759, %v1303
      %v1793 = vsel %vm1763, %v1760, %v1305
      %v1794 = vsel %vm1763, %v1761, %v1307
      %v1795 = vsel %vm1763, %v1762, %v1309
      %vm1796 = vcmask 228352
      %v1797 = vsel %vm1796, %v1764, %v1375
      %v1798 = vsel %vm1796, %v1765, %v1377
      %v1799 = vsel %vm1796, %v1766, %v1379
      %v1800 = vsel %vm1796, %v1767, %v1381
      %v1801 = vsel %vm1796, %v1768, %v1383
      %v1802 = vsel %vm1796, %v1769, %v1385
      %v1803 = vsel %vm1796, %v1770, %v1387
      %v1804 = vsel %vm1796, %v1771, %v1389
      %v1805 = vsel %vm1796, %v1772, %v1391
      %v1806 = vsel %vm1796, %v1773, %v1393
      %v1807 = vsel %vm1796, %v1774, %v1395
      %v1808 = vsel %vm1796, %v1775, %v1397
      %v1809 = vsel %vm1796, %v1776, %v1399
      %v1810 = vsel %vm1796, %v1777, %v1401
      %v1811 = vsel %vm1796, %v1778, %v1403
      %v1812 = vsel %vm1796, %v1779, %v1405
      %v1813 = vsel %vm1796, %v1780, %v1407
      %v1814 = vsel %vm1796, %v1781, %v1409
      %v1815 = vsel %vm1796, %v1782, %v1411
      %v1816 = vsel %vm1796, %v1783, %v1413
      %v1817 = vsel %vm1796, %v1784, %v1415
      %v1818 = vsel %vm1796, %v1785, %v1417
      %v1819 = vsel %vm1796, %v1786, %v1419
      %v1820 = vsel %vm1796, %v1787, %v1421
      %v1821 = vsel %vm1796, %v1788, %v1423
      %v1822 = vsel %vm1796, %v1789, %v1425
      %v1823 = vsel %vm1796, %v1790, %v1427
      %v1824 = vsel %vm1796, %v1791, %v1429
      %v1825 = vsel %vm1796, %v1792, %v1431
      %v1826 = vsel %vm1796, %v1793, %v1433
      %v1827 = vsel %vm1796, %v1794, %v1435
      %v1828 = vsel %vm1796, %v1795, %v1437
      %vm1829 = vcmask 261120
      %v1830 = vsel %vm1829, %v1797, %v1503
      %v1831 = vsel %vm1829, %v1798, %v1505
      %v1832 = vsel %vm1829, %v1799, %v1507
      %v1833 = vsel %vm1829, %v1800, %v1509
      %v1834 = vsel %vm1829, %v1801, %v1511
      %v1835 = vsel %vm1829, %v1802, %v1513
      %v1836 = vsel %vm1829, %v1803, %v1515
      %v1837 = vsel %vm1829, %v1804, %v1517
      %v1838 = vsel %vm1829, %v1805, %v1519
      %v1839 = vsel %vm1829, %v1806, %v1521
      %v1840 = vsel %vm1829, %v1807, %v1523
      %v1841 = vsel %vm1829, %v1808, %v1525
      %v1842 = vsel %vm1829, %v1809, %v1527
      %v1843 = vsel %vm1829, %v1810, %v1529
      %v1844 = vsel %vm1829, %v1811, %v1531
      %v1845 = vsel %vm1829, %v1812, %v1533
      %v1846 = vsel %vm1829, %v1813, %v1535
      %v1847 = vsel %vm1829, %v1814, %v1537
      %v1848 = vsel %vm1829, %v1815, %v1539
      %v1849 = vsel %vm1829, %v1816, %v1541
      %v1850 = vsel %vm1829, %v1817, %v1543
      %v1851 = vsel %vm1829, %v1818, %v1545
      %v1852 = vsel %vm1829, %v1819, %v1547
      %v1853 = vsel %vm1829, %v1820, %v1549
      %v1854 = vsel %vm1829, %v1821, %v1551
      %v1855 = vsel %vm1829, %v1822, %v1553
      %v1856 = vsel %vm1829, %v1823, %v1555
      %v1857 = vsel %vm1829, %v1824, %v1557
      %v1858 = vsel %vm1829, %v1825, %v1559
      %v1859 = vsel %vm1829, %v1826, %v1561
      %v1860 = vsel %vm1829, %v1827, %v1563
      %v1861 = vsel %vm1829, %v1828, %v1565
      %v1862 = vld [vmem:[%s1] sm:$0xff]
      %v1863 = vld [vmem:[%s1 + $0x8] sm:$0xff]
      %v1864 = vld [vmem:[%s1 + $0x10] sm:$0xff]
      %v1865 = vld [vmem:[%s1 + $0x18] sm:$0xff]
      %v1866 = vld [vmem:[%s1 + $0x20] sm:$0xf]
      %v1867 = vld [vmem:[%s2] sm:$0x1]
      %v1869 = vlaneseq
      %v1870 = vshrl.u32 %v1869, 7
      %v1871 = vsub.s32 0, %v1870
      %v1872 = vrot.slane %v1867, %v1871
      %vm1874 = vcmask 293888
      %v1876 = vsel %vm1874, %v1830, 0
      %v1879 = vsel %vm1874, %v1831, 0
      %v1882 = vsel %vm1874, %v1832, 0
      %v1885 = vsel %vm1874, %v1833, 0
      %v1888 = vsel %vm1874, %v1834, 0
      %v1891 = vsel %vm1874, %v1835, 0
      %v1894 = vsel %vm1874, %v1836, 0
      %v1897 = vsel %vm1874, %v1837, 0
      %v1900 = vsel %vm1874, %v1838, 0
      %v1903 = vsel %vm1874, %v1839, 0
      %v1906 = vsel %vm1874, %v1840, 0
      %v1909 = vsel %vm1874, %v1841, 0
      %v1912 = vsel %vm1874, %v1842, 0
      %v1915 = vsel %vm1874, %v1843, 0
      %v1918 = vsel %vm1874, %v1844, 0
      %v1921 = vsel %vm1874, %v1845, 0
      %v1924 = vsel %vm1874, %v1846, 0
      %v1927 = vsel %vm1874, %v1847, 0
      %v1930 = vsel %vm1874, %v1848, 0
      %v1933 = vsel %vm1874, %v1849, 0
      %v1936 = vsel %vm1874, %v1850, 0
      %v1939 = vsel %vm1874, %v1851, 0
      %v1942 = vsel %vm1874, %v1852, 0
      %v1945 = vsel %vm1874, %v1853, 0
      %v1948 = vsel %vm1874, %v1854, 0
      %v1951 = vsel %vm1874, %v1855, 0
      %v1954 = vsel %vm1874, %v1856, 0
      %v1957 = vsel %vm1874, %v1857, 0
      %v1960 = vsel %vm1874, %v1858, 0
      %v1963 = vsel %vm1874, %v1859, 0
      %v1966 = vsel %vm1874, %v1860, 0
      %v1969 = vsel %vm1874, %v1861, 0
      %vm1971 = vcmask 1043456
      %v1973 = vsel %vm1971, %v1866, 0
      %1975 = vmatprep.subr.mxu0 0.0
      %1976 = vmatpush1.msra.mxu0 0.0
      %1977 = vmatprep.subr.mxu0 0.0
      %1978 = vmatpush1.msra.mxu0 0.0
      %1979 = vmatprep.subr.mxu0 0.0
      %1980 = vmatpush1.msra.mxu0 0.0
      %1981 = vmatprep.subr.mxu0 0.0
      %1982 = vmatpush1.msra.mxu0 0.0
      %1983 = vmatprep.subr.mxu0 0.0
      %1984 = vmatpush1.msra.mxu0 0.0
      %1985 = vmatprep.subr.mxu0 0.0
      %1986 = vmatpush1.msra.mxu0 0.0
      %1987 = vmatprep.subr.mxu0 0.0
      %1988 = vmatpush1.msra.mxu0 0.0
      %1989 = vmatprep.subr.mxu0 0.0
      %1990 = vmatpush1.msra.mxu0 0.0
      %1991 = vmatprep.subr.mxu0 0.0
      %1992 = vmatpush1.msra.mxu0 0.0
      %1993 = vmatprep.subr.mxu0 0.0
      %1994 = vmatpush1.msra.mxu0 0.0
      %1995 = vmatprep.subr.mxu0 0.0
      %1996 = vmatpush1.msra.mxu0 0.0
      %1997 = vmatprep.subr.mxu0 0.0
      %1998 = vmatpush1.msra.mxu0 %v1973
      %1999 = vmatprep.subr.mxu0 0.0
      %2000 = vmatpush1.msra.mxu0 %v1865
      %2001 = vmatprep.subr.mxu0 0.0
      %2002 = vmatpush1.msra.mxu0 %v1864
      %2003 = vmatprep.subr.mxu0 0.0
      %2004 = vmatpush1.msra.mxu0 %v1863
      %2005 = vmatprep.subr.mxu0 0.0
      %2006 = vmatpush1.msra.mxu0 %v1862
      %2007 = vmatprep.subr.mxu0 0.0
      %2008 = vmatpush2.msra.mxu0 0.0
      %2009 = vmatprep.subr.mxu0 0.0
      %2010 = vmatpush2.msra.mxu0 0.0
      %2011 = vmatprep.subr.mxu0 0.0
      %2012 = vmatpush2.msra.mxu0 0.0
      %2013 = vmatprep.subr.mxu0 0.0
      %2014 = vmatpush2.msra.mxu0 0.0
      %2015 = vmatprep.subr.mxu0 0.0
      %2016 = vmatpush2.msra.mxu0 0.0
      %2017 = vmatprep.subr.mxu0 0.0
      %2018 = vmatpush2.msra.mxu0 0.0
      %2019 = vmatprep.subr.mxu0 0.0
      %2020 = vmatpush2.msra.mxu0 0.0
      %2021 = vmatprep.subr.mxu0 0.0
      %2022 = vmatpush2.msra.mxu0 0.0
      %2023 = vmatprep.subr.mxu0 0.0
      %2024 = vmatpush2.msra.mxu0 0.0
      %2025 = vmatprep.subr.mxu0 0.0
      %2026 = vmatpush2.msra.mxu0 0.0
      %2027 = vmatprep.subr.mxu0 0.0
      %2028 = vmatpush2.msra.mxu0 0.0
      %2029 = vmatprep.subr.mxu0 0.0
      %2030 = vmatpush2.msra.mxu0 0.0
      %2031 = vmatprep.subr.mxu0 0.0
      %2032 = vmatpush2.msra.mxu0 0.0
      %2033 = vmatprep.subr.mxu0 0.0
      %2034 = vmatpush2.msra.mxu0 0.0
      %2035 = vmatprep.subr.mxu0 0.0
      %2036 = vmatpush2.msra.mxu0 0.0
      %2037 = vmatprep.subr.mxu0 0.0
      %2038 = vmatpush2.msra.mxu0 0.0
      %2039 = vmatprep.mubr.f32.mxu0 0.0
      %2040 = vmatmul.mubr.f32.gmra.mxu0 %v1876
      %v2041 = vpop.f32.mrf.mxu0
      %v2042 = vadd.f32 %v1872, %v2041
      %v2043 = vpop.f32.mrf.mxu0
      %2044 = vmatprep.mubr.f32.mxu0 0.0
      %2045 = vmatmul.mubr.f32.gmra.mxu0 %v1879
      %v2046 = vpop.f32.mrf.mxu0
      %v2047 = vadd.f32 %v1872, %v2046
      %v2048 = vpop.f32.mrf.mxu0
      %2049 = vmatprep.mubr.f32.mxu0 0.0
      %2050 = vmatmul.mubr.f32.gmra.mxu0 %v1882
      %v2051 = vpop.f32.mrf.mxu0
      %v2052 = vadd.f32 %v1872, %v2051
      %v2053 = vpop.f32.mrf.mxu0
      %2054 = vmatprep.mubr.f32.mxu0 0.0
      %2055 = vmatmul.mubr.f32.gmra.mxu0 %v1885
      %v2056 = vpop.f32.mrf.mxu0
      %v2057 = vadd.f32 %v1872, %v2056
      %v2058 = vpop.f32.mrf.mxu0
      %2059 = vmatprep.mubr.f32.mxu0 0.0
      %2060 = vmatmul.mubr.f32.gmra.mxu0 %v1888
      %v2061 = vpop.f32.mrf.mxu0
      %v2062 = vadd.f32 %v1872, %v2061
      %v2063 = vpop.f32.mrf.mxu0
      %2064 = vmatprep.mubr.f32.mxu0 0.0
      %2065 = vmatmul.mubr.f32.gmra.mxu0 %v1891
      %v2066 = vpop.f32.mrf.mxu0
      %v2067 = vadd.f32 %v1872, %v2066
      %v2068 = vpop.f32.mrf.mxu0
      %2069 = vmatprep.mubr.f32.mxu0 0.0
      %2070 = vmatmul.mubr.f32.gmra.mxu0 %v1894
      %v2071 = vpop.f32.mrf.mxu0
      %v2072 = vadd.f32 %v1872, %v2071
      %v2073 = vpop.f32.mrf.mxu0
      %2074 = vmatprep.mubr.f32.mxu0 0.0
      %2075 = vmatmul.mubr.f32.gmra.mxu0 %v1897
      %v2076 = vpop.f32.mrf.mxu0
      %v2077 = vadd.f32 %v1872, %v2076
      %v2078 = vpop.f32.mrf.mxu0
      %2079 = vmatprep.mubr.f32.mxu0 0.0
      %2080 = vmatmul.mubr.f32.gmra.mxu0 %v1900
      %v2081 = vpop.f32.mrf.mxu0
      %v2082 = vadd.f32 %v1872, %v2081
      %v2083 = vpop.f32.mrf.mxu0
      %2084 = vmatprep.mubr.f32.mxu0 0.0
      %2085 = vmatmul.mubr.f32.gmra.mxu0 %v1903
      %v2086 = vpop.f32.mrf.mxu0
      %v2087 = vadd.f32 %v1872, %v2086
      %v2088 = vpop.f32.mrf.mxu0
      %2089 = vmatprep.mubr.f32.mxu0 0.0
      %2090 = vmatmul.mubr.f32.gmra.mxu0 %v1906
      %v2091 = vpop.f32.mrf.mxu0
      %v2092 = vadd.f32 %v1872, %v2091
      %v2093 = vpop.f32.mrf.mxu0
      %2094 = vmatprep.mubr.f32.mxu0 0.0
      %2095 = vmatmul.mubr.f32.gmra.mxu0 %v1909
      %v2096 = vpop.f32.mrf.mxu0
      %v2097 = vadd.f32 %v1872, %v2096
      %v2098 = vpop.f32.mrf.mxu0
      %2099 = vmatprep.mubr.f32.mxu0 0.0
      %2100 = vmatmul.mubr.f32.gmra.mxu0 %v1912
      %v2101 = vpop.f32.mrf.mxu0
      %v2102 = vadd.f32 %v1872, %v2101
      %v2103 = vpop.f32.mrf.mxu0
      %2104 = vmatprep.mubr.f32.mxu0 0.0
      %2105 = vmatmul.mubr.f32.gmra.mxu0 %v1915
      %v2106 = vpop.f32.mrf.mxu0
      %v2107 = vadd.f32 %v1872, %v2106
      %v2108 = vpop.f32.mrf.mxu0
      %2109 = vmatprep.mubr.f32.mxu0 0.0
      %2110 = vmatmul.mubr.f32.gmra.mxu0 %v1918
      %v2111 = vpop.f32.mrf.mxu0
      %v2112 = vadd.f32 %v1872, %v2111
      %v2113 = vpop.f32.mrf.mxu0
      %2114 = vmatprep.mubr.f32.mxu0 0.0
      %2115 = vmatmul.mubr.f32.gmra.mxu0 %v1921
      %v2116 = vpop.f32.mrf.mxu0
      %v2117 = vadd.f32 %v1872, %v2116
      %v2118 = vpop.f32.mrf.mxu0
      %2119 = vmatprep.mubr.f32.mxu0 0.0
      %2120 = vmatmul.mubr.f32.gmra.mxu0 %v1924
      %v2121 = vpop.f32.mrf.mxu0
      %v2122 = vadd.f32 %v1872, %v2121
      %v2123 = vpop.f32.mrf.mxu0
      %2124 = vmatprep.mubr.f32.mxu0 0.0
      %2125 = vmatmul.mubr.f32.gmra.mxu0 %v1927
      %v2126 = vpop.f32.mrf.mxu0
      %v2127 = vadd.f32 %v1872, %v2126
      %v2128 = vpop.f32.mrf.mxu0
      %2129 = vmatprep.mubr.f32.mxu0 0.0
      %2130 = vmatmul.mubr.f32.gmra.mxu0 %v1930
      %v2131 = vpop.f32.mrf.mxu0
      %v2132 = vadd.f32 %v1872, %v2131
      %v2133 = vpop.f32.mrf.mxu0
      %2134 = vmatprep.mubr.f32.mxu0 0.0
      %2135 = vmatmul.mubr.f32.gmra.mxu0 %v1933
      %v2136 = vpop.f32.mrf.mxu0
      %v2137 = vadd.f32 %v1872, %v2136
      %v2138 = vpop.f32.mrf.mxu0
      %2139 = vmatprep.mubr.f32.mxu0 0.0
      %2140 = vmatmul.mubr.f32.gmra.mxu0 %v1936
      %v2141 = vpop.f32.mrf.mxu0
      %v2142 = vadd.f32 %v1872, %v2141
      %v2143 = vpop.f32.mrf.mxu0
      %2144 = vmatprep.mubr.f32.mxu0 0.0
      %2145 = vmatmul.mubr.f32.gmra.mxu0 %v1939
      %v2146 = vpop.f32.mrf.mxu0
      %v2147 = vadd.f32 %v1872, %v2146
      %v2148 = vpop.f32.mrf.mxu0
      %2149 = vmatprep.mubr.f32.mxu0 0.0
      %2150 = vmatmul.mubr.f32.gmra.mxu0 %v1942
      %v2151 = vpop.f32.mrf.mxu0
      %v2152 = vadd.f32 %v1872, %v2151
      %v2153 = vpop.f32.mrf.mxu0
      %2154 = vmatprep.mubr.f32.mxu0 0.0
      %2155 = vmatmul.mubr.f32.gmra.mxu0 %v1945
      %v2156 = vpop.f32.mrf.mxu0
      %v2157 = vadd.f32 %v1872, %v2156
      %v2158 = vpop.f32.mrf.mxu0
      %2159 = vmatprep.mubr.f32.mxu0 0.0
      %2160 = vmatmul.mubr.f32.gmra.mxu0 %v1948
      %v2161 = vpop.f32.mrf.mxu0
      %v2162 = vadd.f32 %v1872, %v2161
      %v2163 = vpop.f32.mrf.mxu0
      %2164 = vmatprep.mubr.f32.mxu0 0.0
      %2165 = vmatmul.mubr.f32.gmra.mxu0 %v1951
      %v2166 = vpop.f32.mrf.mxu0
      %v2167 = vadd.f32 %v1872, %v2166
      %v2168 = vpop.f32.mrf.mxu0
      %2169 = vmatprep.mubr.f32.mxu0 0.0
      %2170 = vmatmul.mubr.f32.gmra.mxu0 %v1954
      %v2171 = vpop.f32.mrf.mxu0
      %v2172 = vadd.f32 %v1872, %v2171
      %v2173 = vpop.f32.mrf.mxu0
      %2174 = vmatprep.mubr.f32.mxu0 0.0
      %2175 = vmatmul.mubr.f32.gmra.mxu0 %v1957
      %v2176 = vpop.f32.mrf.mxu0
      %v2177 = vadd.f32 %v1872, %v2176
      %v2178 = vpop.f32.mrf.mxu0
      %2179 = vmatprep.mubr.f32.mxu0 0.0
      %2180 = vmatmul.mubr.f32.gmra.mxu0 %v1960
      %v2181 = vpop.f32.mrf.mxu0
      %v2182 = vadd.f32 %v1872, %v2181
      %v2183 = vpop.f32.mrf.mxu0
      %2184 = vmatprep.mubr.f32.mxu0 0.0
      %2185 = vmatmul.mubr.f32.gmra.mxu0 %v1963
      %v2186 = vpop.f32.mrf.mxu0
      %v2187 = vadd.f32 %v1872, %v2186
      %v2188 = vpop.f32.mrf.mxu0
      %2189 = vmatprep.mubr.f32.mxu0 0.0
      %2190 = vmatmul.mubr.f32.gmra.mxu0 %v1966
      %v2191 = vpop.f32.mrf.mxu0
      %v2192 = vadd.f32 %v1872, %v2191
      %v2193 = vpop.f32.mrf.mxu0
      %2194 = vmatprep.mubr.f32.mxu0 0.0
      %2195 = vmatmul.mubr.f32.gmra.mxu0 %v1969
      %v2196 = vpop.f32.mrf.mxu0
      %v2197 = vadd.f32 %v1872, %v2196
      %v2198 = vpop.f32.mrf.mxu0
      %2199 = vdwg.mxu0
      %2200 = vst.msk [vmem:[%s272] sm:$0xff] %vm1598, %v2042
      %2201 = vst.msk [vmem:[%s272 + $0x8] sm:$0xff] %vm1598, %v2047
      %2202 = vst.msk [vmem:[%s272 + $0x10] sm:$0xff] %vm1598, %v2052
      %2203 = vst.msk [vmem:[%s272 + $0x18] sm:$0xff] %vm1598, %v2057
      %2204 = vst.msk [vmem:[%s272 + $0x20] sm:$0xff] %vm1598, %v2062
      %2205 = vst.msk [vmem:[%s272 + $0x28] sm:$0xff] %vm1598, %v2067
      %2206 = vst.msk [vmem:[%s272 + $0x30] sm:$0xff] %vm1598, %v2072
      %2207 = vst.msk [vmem:[%s272 + $0x38] sm:$0xff] %vm1598, %v2077
      %2208 = vst.msk [vmem:[%s272 + $0x40] sm:$0xff] %vm1598, %v2082
      %2209 = vst.msk [vmem:[%s272 + $0x48] sm:$0xff] %vm1598, %v2087
      %2210 = vst.msk [vmem:[%s272 + $0x50] sm:$0xff] %vm1598, %v2092
      %2211 = vst.msk [vmem:[%s272 + $0x58] sm:$0xff] %vm1598, %v2097
      %2212 = vst.msk [vmem:[%s272 + $0x60] sm:$0xff] %vm1598, %v2102
      %2213 = vst.msk [vmem:[%s272 + $0x68] sm:$0xff] %vm1598, %v2107
      %2214 = vst.msk [vmem:[%s272 + $0x70] sm:$0xff] %vm1598, %v2112
      %2215 = vst.msk [vmem:[%s272 + $0x78] sm:$0xff] %vm1598, %v2117
      %2216 = vst.msk [vmem:[%s272 + $0x80] sm:$0xff] %vm1598, %v2122
      %2217 = vst.msk [vmem:[%s272 + $0x88] sm:$0xff] %vm1598, %v2127
      %2218 = vst.msk [vmem:[%s272 + $0x90] sm:$0xff] %vm1598, %v2132
      %2219 = vst.msk [vmem:[%s272 + $0x98] sm:$0xff] %vm1598, %v2137
      %2220 = vst.msk [vmem:[%s272 + $0xa0] sm:$0xff] %vm1598, %v2142
      %2221 = vst.msk [vmem:[%s272 + $0xa8] sm:$0xff] %vm1598, %v2147
      %2222 = vst.msk [vmem:[%s272 + $0xb0] sm:$0xff] %vm1598, %v2152
      %2223 = vst.msk [vmem:[%s272 + $0xb8] sm:$0xff] %vm1598, %v2157
      %2224 = vst.msk [vmem:[%s272 + $0xc0] sm:$0xff] %vm1598, %v2162
      %2225 = vst.msk [vmem:[%s272 + $0xc8] sm:$0xff] %vm1598, %v2167
      %2226 = vst.msk [vmem:[%s272 + $0xd0] sm:$0xff] %vm1598, %v2172
      %2227 = vst.msk [vmem:[%s272 + $0xd8] sm:$0xff] %vm1598, %v2177
      %2228 = vst.msk [vmem:[%s272 + $0xe0] sm:$0xff] %vm1598, %v2182
      %2229 = vst.msk [vmem:[%s272 + $0xe8] sm:$0xff] %vm1598, %v2187
      %2230 = vst.msk [vmem:[%s272 + $0xf0] sm:$0xff] %vm1598, %v2192
      %2231 = vst.msk [vmem:[%s272 + $0xf8] sm:$0xff] %vm1598, %v2197
      %v2232 = vsel %vm1598, %v2042, 0.0
      %v2233 = vsel %vm1598, %v2047, 0.0
      %v2234 = vadd.f32 %v2232, %v2233
      %v2235 = vsel %vm1598, %v2052, 0.0
      %v2236 = vadd.f32 %v2234, %v2235
      %v2237 = vsel %vm1598, %v2057, 0.0
      %v2238 = vadd.f32 %v2236, %v2237
      %v2239 = vsel %vm1598, %v2062, 0.0
      %v2240 = vadd.f32 %v2238, %v2239
      %v2241 = vsel %vm1598, %v2067, 0.0
      %v2242 = vadd.f32 %v2240, %v2241
      %v2243 = vsel %vm1598, %v2072, 0.0
      %v2244 = vadd.f32 %v2242, %v2243
      %v2245 = vsel %vm1598, %v2077, 0.0
      %v2246 = vadd.f32 %v2244, %v2245
      %v2247 = vsel %vm1598, %v2082, 0.0
      %v2248 = vadd.f32 %v2246, %v2247
      %v2249 = vsel %vm1598, %v2087, 0.0
      %v2250 = vadd.f32 %v2248, %v2249
      %v2251 = vsel %vm1598, %v2092, 0.0
      %v2252 = vadd.f32 %v2250, %v2251
      %v2253 = vsel %vm1598, %v2097, 0.0
      %v2254 = vadd.f32 %v2252, %v2253
      %v2255 = vsel %vm1598, %v2102, 0.0
      %v2256 = vadd.f32 %v2254, %v2255
      %v2257 = vsel %vm1598, %v2107, 0.0
      %v2258 = vadd.f32 %v2256, %v2257
      %v2259 = vsel %vm1598, %v2112, 0.0
      %v2260 = vadd.f32 %v2258, %v2259
      %v2261 = vsel %vm1598, %v2117, 0.0
      %v2262 = vadd.f32 %v2260, %v2261
      %v2263 = vsel %vm1598, %v2122, 0.0
      %v2264 = vadd.f32 %v2262, %v2263
      %v2265 = vsel %vm1598, %v2127, 0.0
      %v2266 = vadd.f32 %v2264, %v2265
      %v2267 = vsel %vm1598, %v2132, 0.0
      %v2268 = vadd.f32 %v2266, %v2267
      %v2269 = vsel %vm1598, %v2137, 0.0
      %v2270 = vadd.f32 %v2268, %v2269
      %v2271 = vsel %vm1598, %v2142, 0.0
      %v2272 = vadd.f32 %v2270, %v2271
      %v2273 = vsel %vm1598, %v2147, 0.0
      %v2274 = vadd.f32 %v2272, %v2273
      %v2275 = vsel %vm1598, %v2152, 0.0
      %v2276 = vadd.f32 %v2274, %v2275
      %v2277 = vsel %vm1598, %v2157, 0.0
      %v2278 = vadd.f32 %v2276, %v2277
      %v2279 = vsel %vm1598, %v2162, 0.0
      %v2280 = vadd.f32 %v2278, %v2279
      %v2281 = vsel %vm1598, %v2167, 0.0
      %v2282 = vadd.f32 %v2280, %v2281
      %v2283 = vsel %vm1598, %v2172, 0.0
      %v2284 = vadd.f32 %v2282, %v2283
      %v2285 = vsel %vm1598, %v2177, 0.0
      %v2286 = vadd.f32 %v2284, %v2285
      %v2287 = vsel %vm1598, %v2182, 0.0
      %v2288 = vadd.f32 %v2286, %v2287
      %v2289 = vsel %vm1598, %v2187, 0.0
      %v2290 = vadd.f32 %v2288, %v2289
      %v2291 = vsel %vm1598, %v2192, 0.0
      %v2292 = vadd.f32 %v2290, %v2291
      %v2293 = vsel %vm1598, %v2197, 0.0
      %v2294 = vadd.f32 %v2292, %v2293
      %v2295 = vrot.slane %v2294, 4
      %v2296 = vadd.f32 %v2294, %v2295
      %v2297 = vrot.slane %v2296, 2
      %v2298 = vadd.f32 %v2296, %v2297
      %v2299 = vrot.slane %v2298, 1
      %v2300 = vadd.f32 %v2298, %v2299
      %vm2301 = vcmask 24576
      %2302 = vst.msk [vmem:[%s277] sm:$0x1] %vm2301, %v2300
      %v2303 = vmul.f32 %v2042, %v2042
      %v2304 = vmul.f32 %v2047, %v2047
      %v2305 = vmul.f32 %v2052, %v2052
      %v2306 = vmul.f32 %v2057, %v2057
      %v2307 = vmul.f32 %v2062, %v2062
      %v2308 = vmul.f32 %v2067, %v2067
      %v2309 = vmul.f32 %v2072, %v2072
      %v2310 = vmul.f32 %v2077, %v2077
      %v2311 = vmul.f32 %v2082, %v2082
      %v2312 = vmul.f32 %v2087, %v2087
      %v2313 = vmul.f32 %v2092, %v2092
      %v2314 = vmul.f32 %v2097, %v2097
      %v2315 = vmul.f32 %v2102, %v2102
      %v2316 = vmul.f32 %v2107, %v2107
      %v2317 = vmul.f32 %v2112, %v2112
      %v2318 = vmul.f32 %v2117, %v2117
      %v2319 = vmul.f32 %v2122, %v2122
      %v2320 = vmul.f32 %v2127, %v2127
      %v2321 = vmul.f32 %v2132, %v2132
      %v2322 = vmul.f32 %v2137, %v2137
      %v2323 = vmul.f32 %v2142, %v2142
      %v2324 = vmul.f32 %v2147, %v2147
      %v2325 = vmul.f32 %v2152, %v2152
      %v2326 = vmul.f32 %v2157, %v2157
      %v2327 = vmul.f32 %v2162, %v2162
      %v2328 = vmul.f32 %v2167, %v2167
      %v2329 = vmul.f32 %v2172, %v2172
      %v2330 = vmul.f32 %v2177, %v2177
      %v2331 = vmul.f32 %v2182, %v2182
      %v2332 = vmul.f32 %v2187, %v2187
      %v2333 = vmul.f32 %v2192, %v2192
      %v2334 = vmul.f32 %v2197, %v2197
      %v2335 = vsel %vm1598, %v2303, 0.0
      %v2336 = vsel %vm1598, %v2304, 0.0
      %v2337 = vadd.f32 %v2335, %v2336
      %v2338 = vsel %vm1598, %v2305, 0.0
      %v2339 = vadd.f32 %v2337, %v2338
      %v2340 = vsel %vm1598, %v2306, 0.0
      %v2341 = vadd.f32 %v2339, %v2340
      %v2342 = vsel %vm1598, %v2307, 0.0
      %v2343 = vadd.f32 %v2341, %v2342
      %v2344 = vsel %vm1598, %v2308, 0.0
      %v2345 = vadd.f32 %v2343, %v2344
      %v2346 = vsel %vm1598, %v2309, 0.0
      %v2347 = vadd.f32 %v2345, %v2346
      %v2348 = vsel %vm1598, %v2310, 0.0
      %v2349 = vadd.f32 %v2347, %v2348
      %v2350 = vsel %vm1598, %v2311, 0.0
      %v2351 = vadd.f32 %v2349, %v2350
      %v2352 = vsel %vm1598, %v2312, 0.0
      %v2353 = vadd.f32 %v2351, %v2352
      %v2354 = vsel %vm1598, %v2313, 0.0
      %v2355 = vadd.f32 %v2353, %v2354
      %v2356 = vsel %vm1598, %v2314, 0.0
      %v2357 = vadd.f32 %v2355, %v2356
      %v2358 = vsel %vm1598, %v2315, 0.0
      %v2359 = vadd.f32 %v2357, %v2358
      %v2360 = vsel %vm1598, %v2316, 0.0
      %v2361 = vadd.f32 %v2359, %v2360
      %v2362 = vsel %vm1598, %v2317, 0.0
      %v2363 = vadd.f32 %v2361, %v2362
      %v2364 = vsel %vm1598, %v2318, 0.0
      %v2365 = vadd.f32 %v2363, %v2364
      %v2366 = vsel %vm1598, %v2319, 0.0
      %v2367 = vadd.f32 %v2365, %v2366
      %v2368 = vsel %vm1598, %v2320, 0.0
      %v2369 = vadd.f32 %v2367, %v2368
      %v2370 = vsel %vm1598, %v2321, 0.0
      %v2371 = vadd.f32 %v2369, %v2370
      %v2372 = vsel %vm1598, %v2322, 0.0
      %v2373 = vadd.f32 %v2371, %v2372
      %v2374 = vsel %vm1598, %v2323, 0.0
      %v2375 = vadd.f32 %v2373, %v2374
      %v2376 = vsel %vm1598, %v2324, 0.0
      %v2377 = vadd.f32 %v2375, %v2376
      %v2378 = vsel %vm1598, %v2325, 0.0
      %v2379 = vadd.f32 %v2377, %v2378
      %v2380 = vsel %vm1598, %v2326, 0.0
      %v2381 = vadd.f32 %v2379, %v2380
      %v2382 = vsel %vm1598, %v2327, 0.0
      %v2383 = vadd.f32 %v2381, %v2382
      %v2384 = vsel %vm1598, %v2328, 0.0
      %v2385 = vadd.f32 %v2383, %v2384
      %v2386 = vsel %vm1598, %v2329, 0.0
      %v2387 = vadd.f32 %v2385, %v2386
      %v2388 = vsel %vm1598, %v2330, 0.0
      %v2389 = vadd.f32 %v2387, %v2388
      %v2390 = vsel %vm1598, %v2331, 0.0
      %v2391 = vadd.f32 %v2389, %v2390
      %v2392 = vsel %vm1598, %v2332, 0.0
      %v2393 = vadd.f32 %v2391, %v2392
      %v2394 = vsel %vm1598, %v2333, 0.0
      %v2395 = vadd.f32 %v2393, %v2394
      %v2396 = vsel %vm1598, %v2334, 0.0
      %v2397 = vadd.f32 %v2395, %v2396
      %v2398 = vrot.slane %v2397, 4
      %v2399 = vadd.f32 %v2397, %v2398
      %v2400 = vrot.slane %v2399, 2
      %v2401 = vadd.f32 %v2399, %v2400
      %v2402 = vrot.slane %v2401, 1
      %v2403 = vadd.f32 %v2401, %v2402
      %2404 = vst.msk [vmem:[%s282] sm:$0x1] %vm2301, %v2403
      %s2405 = smul.u32 16, %s22
      %p2406 = scmp.lt.s32.totalorder %s21, 1
      %s2407 = scalar_select %p2406, %s21, 1
      %p2408 = scmp.lt.s32.totalorder %s2405, 15
      %s2409 = scalar_select %p2408, %s2405, 15
      %s2410 = smul.addr %s2409, 2
      %s2411 = smul.addr %s2407, 32
      %s2412 = sadd.s32 %s2410, %s2411
      %s2413 = smul.addr %s2412, 8
      %s2414 = scalar_lea.vmem %s3, %s2413
      %s2415 = sadd.s32 %s21, %s22
      %p2416 = scmp.lt.s32.totalorder %s2415, 1
      %s2417 = scalar_select %p2416, %s2415, 1
      %s2418 = scalar_lea.vmem %s4, %s2417
      %s2419 = sadd.s32 %s21, %s22
      %p2420 = scmp.lt.s32.totalorder %s2419, 1
      %s2421 = scalar_select %p2420, %s2419, 1
      %s2422 = scalar_lea.vmem %s5, %s2421
      // Predicated region
      $region33: #{decoder_forward.9} parent=31 // pred_check
        %p2423 = pneg %p119
      $region34: #{decoder_forward.9} parent=31 // pred_check_branch
        %2425 = sbr.rel (%p2423) target = $region36
      $region35: #{decoder_forward.9} parent=31 // pred_region
        %s2426 = smul.u32 16, %s22
      $region36: #{decoder_forward.9} parent=31 // pred_fallthru
        _
      // Predicated region
      $region37: #{decoder_forward.9} parent=31 // pred_check
        %p2427 = pneg %p147
      $region38: #{decoder_forward.9} parent=31 // pred_check_branch
        %2429 = sbr.rel (%p2427) target = $region40
      $region39: #{decoder_forward.9} parent=31 // pred_region
        %s2430 = sadd.s32 %s21, %s22
      $region40: #{decoder_forward.9} parent=31 // pred_fallthru
        _
      // Predicated region
      $region41: #{decoder_forward.9} parent=31 // pred_check
        %p2431 = pneg %p175
      $region42: #{decoder_forward.9} parent=31 // pred_check_branch
        %2433 = sbr.rel (%p2431) target = $region44
      $region43: #{decoder_forward.9} parent=31 // pred_region
        %s2434 = sadd.s32 %s21, %s22
      $region44: #{decoder_forward.9} parent=31 // pred_fallthru
        _
    $region32: #{decoder_forward.9} parent=5 // pred_fallthru
      _
    %p2435 = scmp.le.s32.totalorder 2, %s12
    // Predicated region
    $region45: #{decoder_forward.9} parent=5 // pred_check
      %p2436 = pneg %p2435
    $region46: #{decoder_forward.9} parent=5 // pred_check_branch
      %2438 = sbr.rel (%p2436) target = $region48
    $region47: #{decoder_forward.9} parent=5 // pred_region
      %s2439 = ssub.s32 %s12, 2
      // Predicated region
      $region49: #{decoder_forward.9} parent=47 // pred_check
        %p2440 = pneg %p125
      $region50: #{decoder_forward.9} parent=47 // pred_check_branch
        %2442 = sbr.rel (%p2440) target = $region52
      $region51: #{decoder_forward.9} parent=47 // pred_region
        %s2443 = smul.u32 16, %s24
        %p2444 = scmp.lt.s32.totalorder %s23, 1
        %s2445 = scalar_select %p2444, %s23, 1
        %p2446 = scmp.lt.s32.totalorder %s2443, 15
        %s2447 = scalar_select %p2446, %s2443, 15
        %s2448 = smul.addr %s2447, 2
        %s2449 = smul.addr %s2445, 32
        %s2450 = sadd.s32 %s2448, %s2449
        %s2451 = smul.addr %s2450, 8
        %s2452 = scalar_lea.vmem %s3, %s2451
      $region52: #{decoder_forward.9} parent=47 // pred_fallthru
        _
      // Predicated region
      $region53: #{decoder_forward.9} parent=47 // pred_check
        %p2453 = pneg %p153
      $region54: #{decoder_forward.9} parent=47 // pred_check_branch
        %2455 = sbr.rel (%p2453) target = $region56
      $region55: #{decoder_forward.9} parent=47 // pred_region
        %s2456 = sadd.s32 %s23, %s24
        %p2457 = scmp.lt.s32.totalorder %s2456, 1
        %s2458 = scalar_select %p2457, %s2456, 1
        %s2459 = scalar_lea.vmem %s4, %s2458
      $region56: #{decoder_forward.9} parent=47 // pred_fallthru
        _
      // Predicated region
      $region57: #{decoder_forward.9} parent=47 // pred_check
        %p2460 = pneg %p181
      $region58: #{decoder_forward.9} parent=47 // pred_check_branch
        %2462 = sbr.rel (%p2460) target = $region60
      $region59: #{decoder_forward.9} parent=47 // pred_region
        %s2463 = sadd.s32 %s23, %s24
        %p2464 = scmp.lt.s32.totalorder %s2463, 1
        %s2465 = scalar_select %p2464, %s2463, 1
        %s2466 = scalar_lea.vmem %s5, %s2465
      $region60: #{decoder_forward.9} parent=47 // pred_fallthru
        _
    $region48: #{decoder_forward.9} parent=5 // pred_fallthru
      _
  $region6: #{decoder_forward.9} parent=0 // loop_footer
    %s16 = sadd.s32 1, %s12
  $region7: #{decoder_forward.9} parent=0 // loop_footer_branch
    %11 = sbr.rel target = $region3
  $region8: #{decoder_forward.9} parent=0 // loop_exit
    _

</llo_original>
